<compile_context>
chip_gen: v7x
topology: tpu7x:2x2x1
jax: 0.10.0
libtpu: 0.0.40
codegen_flags: <defaults>
</compile_context>

<pallas_src>
import math

import numpy as np
import jax
import jax.numpy as jnp
from jax import lax
from jax.experimental import pallas as pl
from jax.experimental.pallas import tpu as pltpu

D_MODEL = 32
N_HEADS = 4
D_HEAD = D_MODEL // N_HEADS
BATCH = 2
SEQ = 8
LN_EPS = 1e-5
SQRT_DIM = math.sqrt(D_MODEL)          # faithful: sqrt(d_model), not sqrt(d_head)


# ----------------------------------------------------------------------------
# Constant gather tensors implementing RelativeMultiHeadAttention._relative_shift
#   shifted[i, j] = ps[i,   j + T - 1 - i]   if j <= i
#                 = 0                        if j == i + 1
#                 = ps[i+1, j - i - 2]       if j >= i + 2
# realized as   shifted = sum_q ps[i,q]*GA[i,j,q] + sum_q ps_next[i,q]*GB[i,j,q]
# with ps_next[i] = ps[i+1]  (row-shift done with a tiny matmul in-kernel).
# ----------------------------------------------------------------------------
def _rel_shift_tensors(T):
    ga = np.zeros((T, T, T), np.float32)
    gb = np.zeros((T, T, T), np.float32)
    for i in range(T):
        for j in range(T):
            if j <= i:
                ga[i, j, j + T - 1 - i] = 1.0
            elif j >= i + 2:
                gb[i, j, j - i - 2] = 1.0
    return jnp.asarray(ga), jnp.asarray(gb)


# ----------------------------------------------------------------------------
# Fused kernel body (one batch element per grid step)
# ----------------------------------------------------------------------------
def _mhsa_body(x_ref, g_ref, beta_ref, wq_ref, bq_ref, wpos_ref, pos_ref,
               u_ref, v_ref, ga_ref, gb_ref, wfc_ref, bfc_ref, mask):
    T, D = x_ref.shape
    H = N_HEADS
    Dh = D // H
    inv_sqrt = jnp.float32(1.0 / SQRT_DIM)

    # ---- LayerNorm -----------------------------------------------------------
    x = x_ref[...]
    mu = jnp.mean(x, axis=-1, keepdims=True)
    var = jnp.mean((x - mu) ** 2, axis=-1, keepdims=True)
    xn = (x - mu) * lax.rsqrt(var + LN_EPS) * g_ref[...] + beta_ref[...]

    # ---- projections (q == k == v: reference uses linear_q for all three) ----
    proj = jnp.dot(xn, wq_ref[...], preferred_element_type=jnp.float32) + bq_ref[...]
    posp = jnp.dot(pos_ref[...], wpos_ref[...], preferred_element_type=jnp.float32)

    # fold 1/sqrt(d_model) into the q-side operands (cheaper than dividing (T,T))
    qu = (proj + u_ref[...]) * inv_sqrt      # (T, D)
    qv = (proj + v_ref[...]) * inv_sqrt      # (T, D)

    ga = ga_ref[...]                         # (T, T, T)
    gb = gb_ref[...]                         # (T, T, T)

    # sdown @ ps shifts rows up by one (last row -> 0), used by the rel-shift
    ii = lax.broadcasted_iota(jnp.int32, (T, T), 0)
    jj = lax.broadcasted_iota(jnp.int32, (T, T), 1)
    sdown = (jj == ii + 1).astype(jnp.float32)

    dn = (((1,), (1,)), ((), ()))            # contract over Dh: A @ B^T, no transposes

    out = jnp.zeros((T, D), jnp.float32)
    for h in range(H):                       # static unrolled head loop (H=4)
        sl = slice(h * Dh, (h + 1) * Dh)
        kv_h = proj[:, sl]                   # shared q/k/v head slice (T, Dh)
        qu_h = qu[:, sl]
        qv_h = qv[:, sl]
        p_h = posp[:, sl]

        content = lax.dot_general(qu_h, kv_h, dn, preferred_element_type=jnp.float32)
        ps = lax.dot_general(qv_h, p_h, dn, preferred_element_type=jnp.float32)

        ps_next = jnp.dot(sdown, ps, preferred_element_type=jnp.float32)
        shifted = (jnp.sum(ps[:, None, :] * ga, axis=-1)
                   + jnp.sum(ps_next[:, None, :] * gb, axis=-1))

        score = content + shifted
        if mask is not None:
            score = jnp.where(mask, jnp.float32(-1e9), score)

        smax = jnp.max(score, axis=-1, keepdims=True)
        e = jnp.exp(score - smax)
        denom = jnp.sum(e, axis=-1, keepdims=True)
        attn = e * pl.reciprocal(denom, approx=True)
        # dropout(attn) is identity in eval mode
        ctx_h = jnp.dot(attn, kv_h, preferred_element_type=jnp.float32)

        # distribute the output projection over head blocks (no lane concat)
        out = out + jnp.dot(ctx_h, wfc_ref[sl, :], preferred_element_type=jnp.float32)

    return out + bfc_ref[...]


def _mhsa_kernel(x_ref, g_ref, beta_ref, wq_ref, bq_ref, wpos_ref, pos_ref,
                 u_ref, v_ref, ga_ref, gb_ref, wfc_ref, bfc_ref, o_ref):
    o_ref[...] = _mhsa_body(x_ref, g_ref, beta_ref, wq_ref, bq_ref, wpos_ref,
                            pos_ref, u_ref, v_ref, ga_ref, gb_ref, wfc_ref,
                            bfc_ref, mask=None).astype(o_ref.dtype)


def _mhsa_kernel_masked(x_ref, g_ref, beta_ref, wq_ref, bq_ref, wpos_ref, pos_ref,
                        u_ref, v_ref, ga_ref, gb_ref, wfc_ref, bfc_ref,
                        m_ref, o_ref):
    o_ref[...] = _mhsa_body(x_ref, g_ref, beta_ref, wq_ref, bq_ref, wpos_ref,
                            pos_ref, u_ref, v_ref, ga_ref, gb_ref, wfc_ref,
                            bfc_ref, mask=(m_ref[...] != 0)).astype(o_ref.dtype)


# ----------------------------------------------------------------------------
# Wrapper (parameter/layout glue) and positional encoding
# ----------------------------------------------------------------------------
def positional_encoding(length, d_model):
    # standard sinusoidal PositionalEncoding(d_model)(length) -> (length, d_model)
    pos = np.arange(length, dtype=np.float32)[:, None]
    idx = np.arange(0, d_model, 2, dtype=np.float32)[None, :]
    angle = pos / np.power(10000.0, idx / d_model)
    pe = np.zeros((length, d_model), dtype=np.float32)
    pe[:, 0::2] = np.sin(angle)
    pe[:, 1::2] = np.cos(angle)
    return jnp.asarray(pe)


def init_params(key, d_model, n_heads):
    d_head = d_model // n_heads
    ks = jax.random.split(key, 8)
    s = 0.05
    return dict(
        ln_g=jnp.ones((d_model,), jnp.float32),
        ln_b=jnp.zeros((d_model,), jnp.float32),
        wq=jax.random.normal(ks[0], (d_model, d_model), jnp.float32) * s,
        bq=jax.random.normal(ks[1], (d_model,), jnp.float32) * s,
        wpos=jax.random.normal(ks[2], (d_model, d_model), jnp.float32) * s,
        u_bias=jax.random.normal(ks[3], (n_heads, d_head), jnp.float32) * s,
        v_bias=jax.random.normal(ks[4], (n_heads, d_head), jnp.float32) * s,
        wfc=jax.random.normal(ks[5], (d_model, d_model), jnp.float32) * s,
        bfc=jax.random.normal(ks[6], (d_model,), jnp.float32) * s,
        # linear_k / linear_v exist in __init__ but the reference forward only
        # ever uses linear_q, so they carry no state here (faithful).
    )


def mhsa_module_forward(params, inputs, mask=None):
    """MultiHeadedSelfAttentionModule.forward (eval mode), one fused pallas_call."""
    B, T, D = inputs.shape
    pos = positional_encoding(T, D)                       # (T, D), batch-invariant
    ga, gb = _rel_shift_tensors(T)

    args = [
        inputs,                                           # (B, T, D)
        params["ln_g"].reshape(1, D),
        params["ln_b"].reshape(1, D),
        params["wq"].T,                                   # (D, D): y = x @ W^T
        params["bq"].reshape(1, D),
        params["wpos"].T,
        pos,
        params["u_bias"].reshape(1, D),                   # (H,Dh) flattened -> (1,D)
        params["v_bias"].reshape(1, D),
        ga, gb,
        params["wfc"].T,
        params["bfc"].reshape(1, D),
    ]
    in_specs = [
        pl.BlockSpec((None, T, D), lambda b: (b, 0, 0)),  # x: one (T,D) slab / batch
        pl.BlockSpec((1, D), lambda b: (0, 0)),
        pl.BlockSpec((1, D), lambda b: (0, 0)),
        pl.BlockSpec((D, D), lambda b: (0, 0)),
        pl.BlockSpec((1, D), lambda b: (0, 0)),
        pl.BlockSpec((D, D), lambda b: (0, 0)),
        pl.BlockSpec((T, D), lambda b: (0, 0)),
        pl.BlockSpec((1, D), lambda b: (0, 0)),
        pl.BlockSpec((1, D), lambda b: (0, 0)),
        pl.BlockSpec((T, T, T), lambda b: (0, 0, 0)),
        pl.BlockSpec((T, T, T), lambda b: (0, 0, 0)),
        pl.BlockSpec((D, D), lambda b: (0, 0)),
        pl.BlockSpec((1, D), lambda b: (0, 0)),
    ]

    if mask is None:
        kernel = _mhsa_kernel                             # specialized: no mask DMA/select
    else:
        kernel = _mhsa_kernel_masked
        mask_arr = jnp.broadcast_to(mask, (B, T, T)).astype(jnp.int8)
        args.append(mask_arr)
        in_specs.append(pl.BlockSpec((None, T, T), lambda b: (b, 0, 0)))

    return pl.pallas_call(
        kernel,
        out_shape=jax.ShapeDtypeStruct((B, T, D), jnp.float32),
        grid=(B,),
        in_specs=in_specs,
        out_specs=pl.BlockSpec((None, T, D), lambda b: (b, 0, 0)),
        compiler_params=pltpu.CompilerParams(dimension_semantics=("parallel",)),
    )(*args)


# ----------------------------------------------------------------------------
# Pure-JAX reference (mirrors the PyTorch code) for validation
# ----------------------------------------------------------------------------
def relative_shift_ref(ps):
    B, H, T1, T2 = ps.shape
    zeros = jnp.zeros((B, H, T1, 1), ps.dtype)
    padded = jnp.concatenate([zeros, ps], axis=-1)
    padded = padded.reshape(B, H, T2 + 1, T1)
    return padded[:, :, 1:].reshape(B, H, T1, T2)


def reference_forward(params, inputs, mask=None):
    B, T, dm = inputs.shape
    H, Dh = N_HEADS, D_HEAD
    pos = jnp.tile(positional_encoding(T, dm)[None], (B, 1, 1))
    mu = inputs.mean(-1, keepdims=True)
    var = ((inputs - mu) ** 2).mean(-1, keepdims=True)
    xn = (inputs - mu) / jnp.sqrt(var + LN_EPS) * params["ln_g"] + params["ln_b"]
    proj = xn @ params["wq"].T + params["bq"]
    posp = pos @ params["wpos"].T
    q = proj.reshape(B, T, H, Dh)
    k = proj.reshape(B, T, H, Dh).transpose(0, 2, 1, 3)
    v = k
    p = posp.reshape(B, T, H, Dh)
    content = jnp.matmul((q + params["u_bias"]).transpose(0, 2, 1, 3),
                         k.transpose(0, 1, 3, 2))
    pos_sc = jnp.matmul((q + params["v_bias"]).transpose(0, 2, 1, 3),
                        p.transpose(0, 2, 3, 1))
    pos_sc = relative_shift_ref(pos_sc)
    score = (content + pos_sc) / SQRT_DIM
    if mask is not None:
        m = jnp.broadcast_to(mask, (B, T, T))[:, None]
        score = jnp.where(m, -1e9, score)
    attn = jax.nn.softmax(score, axis=-1)
    ctx = jnp.matmul(attn, v).transpose(0, 2, 1, 3).reshape(B, T, dm)
    return ctx @ params["wfc"].T + params["bfc"]


if __name__ == "__main__":
    key = jax.random.PRNGKey(0)
    pkey, xkey = jax.random.split(key)
    params = init_params(pkey, D_MODEL, N_HEADS)
    x = jax.random.normal(xkey, (BATCH, SEQ, D_MODEL), jnp.float32)

    # mask=None path (specialized kernel, no mask input)
    out = mhsa_module_forward(params, x, mask=None)
    out = jax.block_until_ready(out)
    assert out.shape == (BATCH, SEQ, D_MODEL)
    ref = reference_forward(params, x, mask=None)
    np.testing.assert_allclose(np.asarray(out), np.asarray(ref), atol=1e-3, rtol=1e-3)

    # masked path: (B, 1, T2) key-padding style mask (True == masked out)
    mask = jnp.zeros((BATCH, 1, SEQ), dtype=bool).at[1, 0, 5:].set(True)
    out_m = jax.block_until_ready(mhsa_module_forward(params, x, mask=mask))
    ref_m = reference_forward(params, x, mask=mask)
    np.testing.assert_allclose(np.asarray(out_m), np.asarray(ref_m), atol=1e-3, rtol=1e-3)

    print("KERNEL_OK")
</pallas_src>

<mosaic_0001>
module attributes {stable_mosaic.version = 11 : i64} {
  func.func @_mhsa_kernel(%arg0: i32, %arg1: memref<1x8x32xf32, #tpu.memory_space<vmem>>, %arg2: memref<1x32xf32, #tpu.memory_space<vmem>>, %arg3: memref<1x32xf32, #tpu.memory_space<vmem>>, %arg4: memref<32x32xf32, #tpu.memory_space<vmem>>, %arg5: memref<1x32xf32, #tpu.memory_space<vmem>>, %arg6: memref<32x32xf32, #tpu.memory_space<vmem>>, %arg7: memref<8x32xf32, #tpu.memory_space<vmem>>, %arg8: memref<1x32xf32, #tpu.memory_space<vmem>>, %arg9: memref<1x32xf32, #tpu.memory_space<vmem>>, %arg10: memref<8x8x8xf32, #tpu.memory_space<vmem>>, %arg11: memref<8x8x8xf32, #tpu.memory_space<vmem>>, %arg12: memref<32x32xf32, #tpu.memory_space<vmem>>, %arg13: memref<1x32xf32, #tpu.memory_space<vmem>>, %arg14: memref<1x8x32xf32, #tpu.memory_space<vmem>>) attributes {dimension_semantics = [#tpu.dimension_semantics<parallel>], iteration_bounds = array<i64: 2>, scalar_prefetch = 0 : i64, scratch_operands = 0 : i64, tpu.core_type = #tpu.core_type<tc>, window_params = [{transform_indices = @transform_0, window_bounds = array<i64: 1, 8, 32>}, {pipeline_mode = #tpu.pipeline_mode<synchronous>, transform_indices = @transform_1, window_bounds = array<i64: 1, 32>}, {pipeline_mode = #tpu.pipeline_mode<synchronous>, transform_indices = @transform_2, window_bounds = array<i64: 1, 32>}, {pipeline_mode = #tpu.pipeline_mode<synchronous>, transform_indices = @transform_3, window_bounds = array<i64: 32, 32>}, {pipeline_mode = #tpu.pipeline_mode<synchronous>, transform_indices = @transform_4, window_bounds = array<i64: 1, 32>}, {pipeline_mode = #tpu.pipeline_mode<synchronous>, transform_indices = @transform_5, window_bounds = array<i64: 32, 32>}, {pipeline_mode = #tpu.pipeline_mode<synchronous>, transform_indices = @transform_6, window_bounds = array<i64: 8, 32>}, {pipeline_mode = #tpu.pipeline_mode<synchronous>, transform_indices = @transform_7, window_bounds = array<i64: 1, 32>}, {pipeline_mode = #tpu.pipeline_mode<synchronous>, transform_indices = @transform_8, window_bounds = array<i64: 1, 32>}, {pipeline_mode = #tpu.pipeline_mode<synchronous>, transform_indices = @transform_9, window_bounds = array<i64: 8, 8, 8>}, {pipeline_mode = #tpu.pipeline_mode<synchronous>, transform_indices = @transform_10, window_bounds = array<i64: 8, 8, 8>}, {pipeline_mode = #tpu.pipeline_mode<synchronous>, transform_indices = @transform_11, window_bounds = array<i64: 32, 32>}, {pipeline_mode = #tpu.pipeline_mode<synchronous>, transform_indices = @transform_12, window_bounds = array<i64: 1, 32>}, {transform_indices = @transform_13, window_bounds = array<i64: 1, 8, 32>}]} {
    %c0 = arith.constant 0 : index
    %c0_0 = arith.constant 0 : index
    %c0_1 = arith.constant 0 : index
    %0 = vector.load %arg1[%c0, %c0_0, %c0_1] : memref<1x8x32xf32, #tpu.memory_space<vmem>>, vector<1x8x32xf32>
    %1 = vector.shape_cast %0 : vector<1x8x32xf32> to vector<8x32xf32>
    %cst = arith.constant dense<0.000000e+00> : vector<8xf32>
    %2 = vector.multi_reduction <add>, %1, %cst [1] : vector<8x32xf32> to vector<8xf32>
    %3 = vector.shape_cast %2 : vector<8xf32> to vector<8x1xf32>
    %cst_2 = arith.constant 3.200000e+01 : f32
    %4 = vector.broadcast %cst_2 : f32 to vector<8x1xf32>
    %5 = arith.divf %3, %4 : vector<8x1xf32>
    %6 = vector.broadcast %5 : vector<8x1xf32> to vector<8x32xf32>
    %7 = arith.subf %1, %6 : vector<8x32xf32>
    %8 = arith.mulf %7, %7 : vector<8x32xf32>
    %cst_3 = arith.constant dense<0.000000e+00> : vector<8xf32>
    %9 = vector.multi_reduction <add>, %8, %cst_3 [1] : vector<8x32xf32> to vector<8xf32>
    %10 = vector.shape_cast %9 : vector<8xf32> to vector<8x1xf32>
    %cst_4 = arith.constant 3.200000e+01 : f32
    %11 = vector.broadcast %cst_4 : f32 to vector<8x1xf32>
    %12 = arith.divf %10, %11 : vector<8x1xf32>
    %13 = vector.broadcast %5 : vector<8x1xf32> to vector<8x32xf32>
    %14 = arith.subf %1, %13 : vector<8x32xf32>
    %cst_5 = arith.constant 9.99999974E-6 : f32
    %15 = vector.broadcast %cst_5 : f32 to vector<8x1xf32>
    %16 = arith.addf %12, %15 : vector<8x1xf32>
    %17 = math.rsqrt %16 : vector<8x1xf32>
    %18 = vector.broadcast %17 : vector<8x1xf32> to vector<8x32xf32>
    %19 = arith.mulf %14, %18 : vector<8x32xf32>
    %c0_6 = arith.constant 0 : index
    %c0_7 = arith.constant 0 : index
    %20 = vector.load %arg2[%c0_6, %c0_7] : memref<1x32xf32, #tpu.memory_space<vmem>>, vector<1x32xf32>
    %21 = vector.broadcast %20 : vector<1x32xf32> to vector<8x32xf32>
    %22 = arith.mulf %19, %21 : vector<8x32xf32>
    %c0_8 = arith.constant 0 : index
    %c0_9 = arith.constant 0 : index
    %23 = vector.load %arg3[%c0_8, %c0_9] : memref<1x32xf32, #tpu.memory_space<vmem>>, vector<1x32xf32>
    %24 = vector.broadcast %23 : vector<1x32xf32> to vector<8x32xf32>
    %25 = arith.addf %22, %24 : vector<8x32xf32>
    %c0_10 = arith.constant 0 : index
    %c0_11 = arith.constant 0 : index
    %26 = vector.load %arg4[%c0_10, %c0_11] : memref<32x32xf32, #tpu.memory_space<vmem>>, vector<32x32xf32>
    %cst_12 = arith.constant dense<0.000000e+00> : vector<8x32xf32>
    %27 = tpu.matmul %25, %26, %cst_12 {dimension_numbers = #tpu.dot_dimension_numbers<[1], [0], [0], [1], [0, 0, 1, 1], [], []>} : vector<8x32xf32>, vector<32x32xf32>, vector<8x32xf32> -> vector<8x32xf32>
    %c0_13 = arith.constant 0 : index
    %c0_14 = arith.constant 0 : index
    %28 = vector.load %arg5[%c0_13, %c0_14] : memref<1x32xf32, #tpu.memory_space<vmem>>, vector<1x32xf32>
    %29 = vector.broadcast %28 : vector<1x32xf32> to vector<8x32xf32>
    %30 = arith.addf %27, %29 : vector<8x32xf32>
    %c0_15 = arith.constant 0 : index
    %c0_16 = arith.constant 0 : index
    %31 = vector.load %arg7[%c0_15, %c0_16] : memref<8x32xf32, #tpu.memory_space<vmem>>, vector<8x32xf32>
    %c0_17 = arith.constant 0 : index
    %c0_18 = arith.constant 0 : index
    %32 = vector.load %arg6[%c0_17, %c0_18] : memref<32x32xf32, #tpu.memory_space<vmem>>, vector<32x32xf32>
    %cst_19 = arith.constant dense<0.000000e+00> : vector<8x32xf32>
    %33 = tpu.matmul %31, %32, %cst_19 {dimension_numbers = #tpu.dot_dimension_numbers<[1], [0], [0], [1], [0, 0, 1, 1], [], []>} : vector<8x32xf32>, vector<32x32xf32>, vector<8x32xf32> -> vector<8x32xf32>
    %c0_20 = arith.constant 0 : index
    %c0_21 = arith.constant 0 : index
    %34 = vector.load %arg8[%c0_20, %c0_21] : memref<1x32xf32, #tpu.memory_space<vmem>>, vector<1x32xf32>
    %35 = vector.broadcast %34 : vector<1x32xf32> to vector<8x32xf32>
    %36 = arith.addf %30, %35 : vector<8x32xf32>
    %cst_22 = arith.constant 0.176776692 : f32
    %37 = vector.broadcast %cst_22 : f32 to vector<8x32xf32>
    %38 = arith.mulf %36, %37 : vector<8x32xf32>
    %c0_23 = arith.constant 0 : index
    %c0_24 = arith.constant 0 : index
    %39 = vector.load %arg9[%c0_23, %c0_24] : memref<1x32xf32, #tpu.memory_space<vmem>>, vector<1x32xf32>
    %40 = vector.broadcast %39 : vector<1x32xf32> to vector<8x32xf32>
    %41 = arith.addf %30, %40 : vector<8x32xf32>
    %cst_25 = arith.constant 0.176776692 : f32
    %42 = vector.broadcast %cst_25 : f32 to vector<8x32xf32>
    %43 = arith.mulf %41, %42 : vector<8x32xf32>
    %c0_26 = arith.constant 0 : index
    %c0_27 = arith.constant 0 : index
    %c0_28 = arith.constant 0 : index
    %44 = vector.load %arg10[%c0_26, %c0_27, %c0_28] : memref<8x8x8xf32, #tpu.memory_space<vmem>>, vector<8x8x8xf32>
    %c0_29 = arith.constant 0 : index
    %c0_30 = arith.constant 0 : index
    %c0_31 = arith.constant 0 : index
    %45 = vector.load %arg11[%c0_29, %c0_30, %c0_31] : memref<8x8x8xf32, #tpu.memory_space<vmem>>, vector<8x8x8xf32>
    %46 = tpu.iota {dimensions = array<i32: 0>} : vector<8x8xi32>
    %47 = tpu.iota {dimensions = array<i32: 1>} : vector<8x8xi32>
    %c1_i32 = arith.constant 1 : i32
    %48 = vector.broadcast %c1_i32 : i32 to vector<8x8xi32>
    %49 = arith.addi %46, %48 : vector<8x8xi32>
    %50 = arith.cmpi eq, %47, %49 : vector<8x8xi32>
    %51 = arith.extui %50 : vector<8x8xi1> to vector<8x8xi32>
    %52 = arith.sitofp %51 : vector<8x8xi32> to vector<8x8xf32>
    %cst_32 = arith.constant 0.000000e+00 : f32
    %53 = vector.broadcast %cst_32 : f32 to vector<8x32xf32>
    %54 = vector.extract_strided_slice %30 {offsets = [0, 0], sizes = [8, 8], strides = [1, 1]} : vector<8x32xf32> to vector<8x8xf32>
    %55 = vector.extract_strided_slice %38 {offsets = [0, 0], sizes = [8, 8], strides = [1, 1]} : vector<8x32xf32> to vector<8x8xf32>
    %56 = vector.extract_strided_slice %43 {offsets = [0, 0], sizes = [8, 8], strides = [1, 1]} : vector<8x32xf32> to vector<8x8xf32>
    %57 = vector.extract_strided_slice %33 {offsets = [0, 0], sizes = [8, 8], strides = [1, 1]} : vector<8x32xf32> to vector<8x8xf32>
    %cst_33 = arith.constant dense<0.000000e+00> : vector<8x8xf32>
    %58 = tpu.matmul %55, %54, %cst_33 {dimension_numbers = #tpu.dot_dimension_numbers<[1], [1], [0], [0], [0, 0, 1, 0], [], []>} : vector<8x8xf32>, vector<8x8xf32>, vector<8x8xf32> -> vector<8x8xf32>
    %cst_34 = arith.constant dense<0.000000e+00> : vector<8x8xf32>
    %59 = tpu.matmul %56, %57, %cst_34 {dimension_numbers = #tpu.dot_dimension_numbers<[1], [1], [0], [0], [0, 0, 1, 0], [], []>} : vector<8x8xf32>, vector<8x8xf32>, vector<8x8xf32> -> vector<8x8xf32>
    %cst_35 = arith.constant dense<0.000000e+00> : vector<8x8xf32>
    %60 = tpu.matmul %52, %59, %cst_35 {dimension_numbers = #tpu.dot_dimension_numbers<[1], [0], [0], [1], [0, 0, 1, 1], [], []>} : vector<8x8xf32>, vector<8x8xf32>, vector<8x8xf32> -> vector<8x8xf32>
    %61 = vector.shape_cast %59 : vector<8x8xf32> to vector<8x1x8xf32>
    %62 = vector.broadcast %61 : vector<8x1x8xf32> to vector<8x8x8xf32>
    %63 = arith.mulf %62, %44 : vector<8x8x8xf32>
    %cst_36 = arith.constant dense<0.000000e+00> : vector<8x8xf32>
    %64 = vector.multi_reduction <add>, %63, %cst_36 [2] : vector<8x8x8xf32> to vector<8x8xf32>
    %65 = vector.shape_cast %60 : vector<8x8xf32> to vector<8x1x8xf32>
    %66 = vector.broadcast %65 : vector<8x1x8xf32> to vector<8x8x8xf32>
    %67 = arith.mulf %66, %45 : vector<8x8x8xf32>
    %cst_37 = arith.constant dense<0.000000e+00> : vector<8x8xf32>
    %68 = vector.multi_reduction <add>, %67, %cst_37 [2] : vector<8x8x8xf32> to vector<8x8xf32>
    %69 = arith.addf %64, %68 : vector<8x8xf32>
    %70 = arith.addf %58, %69 : vector<8x8xf32>
    %cst_38 = arith.constant dense<0xFF800000> : vector<8xf32>
    %71 = vector.multi_reduction <maximumf>, %70, %cst_38 [1] : vector<8x8xf32> to vector<8xf32>
    %72 = vector.shape_cast %71 : vector<8xf32> to vector<8x1xf32>
    %73 = vector.broadcast %72 : vector<8x1xf32> to vector<8x8xf32>
    %74 = arith.subf %70, %73 : vector<8x8xf32>
    %75 = math.exp %74 : vector<8x8xf32>
    %cst_39 = arith.constant dense<0.000000e+00> : vector<8xf32>
    %76 = vector.multi_reduction <add>, %75, %cst_39 [1] : vector<8x8xf32> to vector<8xf32>
    %77 = vector.shape_cast %76 : vector<8xf32> to vector<8x1xf32>
    %78 = tpu.reciprocal %77 {approx = true} : vector<8x1xf32> -> vector<8x1xf32>
    %79 = vector.broadcast %78 : vector<8x1xf32> to vector<8x8xf32>
    %80 = arith.mulf %75, %79 : vector<8x8xf32>
    %cst_40 = arith.constant dense<0.000000e+00> : vector<8x8xf32>
    %81 = tpu.matmul %80, %54, %cst_40 {dimension_numbers = #tpu.dot_dimension_numbers<[1], [0], [0], [1], [0, 0, 1, 1], [], []>} : vector<8x8xf32>, vector<8x8xf32>, vector<8x8xf32> -> vector<8x8xf32>
    %c0_41 = arith.constant 0 : index
    %c0_42 = arith.constant 0 : index
    %82 = vector.load %arg12[%c0_41, %c0_42] : memref<32x32xf32, #tpu.memory_space<vmem>>, vector<8x32xf32>
    %cst_43 = arith.constant dense<0.000000e+00> : vector<8x32xf32>
    %83 = tpu.matmul %81, %82, %cst_43 {dimension_numbers = #tpu.dot_dimension_numbers<[1], [0], [0], [1], [0, 0, 1, 1], [], []>} : vector<8x8xf32>, vector<8x32xf32>, vector<8x32xf32> -> vector<8x32xf32>
    %84 = arith.addf %53, %83 : vector<8x32xf32>
    %85 = vector.extract_strided_slice %30 {offsets = [0, 8], sizes = [8, 8], strides = [1, 1]} : vector<8x32xf32> to vector<8x8xf32>
    %86 = vector.extract_strided_slice %38 {offsets = [0, 8], sizes = [8, 8], strides = [1, 1]} : vector<8x32xf32> to vector<8x8xf32>
    %87 = vector.extract_strided_slice %43 {offsets = [0, 8], sizes = [8, 8], strides = [1, 1]} : vector<8x32xf32> to vector<8x8xf32>
    %88 = vector.extract_strided_slice %33 {offsets = [0, 8], sizes = [8, 8], strides = [1, 1]} : vector<8x32xf32> to vector<8x8xf32>
    %cst_44 = arith.constant dense<0.000000e+00> : vector<8x8xf32>
    %89 = tpu.matmul %86, %85, %cst_44 {dimension_numbers = #tpu.dot_dimension_numbers<[1], [1], [0], [0], [0, 0, 1, 0], [], []>} : vector<8x8xf32>, vector<8x8xf32>, vector<8x8xf32> -> vector<8x8xf32>
    %cst_45 = arith.constant dense<0.000000e+00> : vector<8x8xf32>
    %90 = tpu.matmul %87, %88, %cst_45 {dimension_numbers = #tpu.dot_dimension_numbers<[1], [1], [0], [0], [0, 0, 1, 0], [], []>} : vector<8x8xf32>, vector<8x8xf32>, vector<8x8xf32> -> vector<8x8xf32>
    %cst_46 = arith.constant dense<0.000000e+00> : vector<8x8xf32>
    %91 = tpu.matmul %52, %90, %cst_46 {dimension_numbers = #tpu.dot_dimension_numbers<[1], [0], [0], [1], [0, 0, 1, 1], [], []>} : vector<8x8xf32>, vector<8x8xf32>, vector<8x8xf32> -> vector<8x8xf32>
    %92 = vector.shape_cast %90 : vector<8x8xf32> to vector<8x1x8xf32>
    %93 = vector.broadcast %92 : vector<8x1x8xf32> to vector<8x8x8xf32>
    %94 = arith.mulf %93, %44 : vector<8x8x8xf32>
    %cst_47 = arith.constant dense<0.000000e+00> : vector<8x8xf32>
    %95 = vector.multi_reduction <add>, %94, %cst_47 [2] : vector<8x8x8xf32> to vector<8x8xf32>
    %96 = vector.shape_cast %91 : vector<8x8xf32> to vector<8x1x8xf32>
    %97 = vector.broadcast %96 : vector<8x1x8xf32> to vector<8x8x8xf32>
    %98 = arith.mulf %97, %45 : vector<8x8x8xf32>
    %cst_48 = arith.constant dense<0.000000e+00> : vector<8x8xf32>
    %99 = vector.multi_reduction <add>, %98, %cst_48 [2] : vector<8x8x8xf32> to vector<8x8xf32>
    %100 = arith.addf %95, %99 : vector<8x8xf32>
    %101 = arith.addf %89, %100 : vector<8x8xf32>
    %cst_49 = arith.constant dense<0xFF800000> : vector<8xf32>
    %102 = vector.multi_reduction <maximumf>, %101, %cst_49 [1] : vector<8x8xf32> to vector<8xf32>
    %103 = vector.shape_cast %102 : vector<8xf32> to vector<8x1xf32>
    %104 = vector.broadcast %103 : vector<8x1xf32> to vector<8x8xf32>
    %105 = arith.subf %101, %104 : vector<8x8xf32>
    %106 = math.exp %105 : vector<8x8xf32>
    %cst_50 = arith.constant dense<0.000000e+00> : vector<8xf32>
    %107 = vector.multi_reduction <add>, %106, %cst_50 [1] : vector<8x8xf32> to vector<8xf32>
    %108 = vector.shape_cast %107 : vector<8xf32> to vector<8x1xf32>
    %109 = tpu.reciprocal %108 {approx = true} : vector<8x1xf32> -> vector<8x1xf32>
    %110 = vector.broadcast %109 : vector<8x1xf32> to vector<8x8xf32>
    %111 = arith.mulf %106, %110 : vector<8x8xf32>
    %cst_51 = arith.constant dense<0.000000e+00> : vector<8x8xf32>
    %112 = tpu.matmul %111, %85, %cst_51 {dimension_numbers = #tpu.dot_dimension_numbers<[1], [0], [0], [1], [0, 0, 1, 1], [], []>} : vector<8x8xf32>, vector<8x8xf32>, vector<8x8xf32> -> vector<8x8xf32>
    %c8 = arith.constant 8 : index
    %c0_52 = arith.constant 0 : index
    %113 = vector.load %arg12[%c8, %c0_52] : memref<32x32xf32, #tpu.memory_space<vmem>>, vector<8x32xf32>
    %cst_53 = arith.constant dense<0.000000e+00> : vector<8x32xf32>
    %114 = tpu.matmul %112, %113, %cst_53 {dimension_numbers = #tpu.dot_dimension_numbers<[1], [0], [0], [1], [0, 0, 1, 1], [], []>} : vector<8x8xf32>, vector<8x32xf32>, vector<8x32xf32> -> vector<8x32xf32>
    %115 = arith.addf %84, %114 : vector<8x32xf32>
    %116 = vector.extract_strided_slice %30 {offsets = [0, 16], sizes = [8, 8], strides = [1, 1]} : vector<8x32xf32> to vector<8x8xf32>
    %117 = vector.extract_strided_slice %38 {offsets = [0, 16], sizes = [8, 8], strides = [1, 1]} : vector<8x32xf32> to vector<8x8xf32>
    %118 = vector.extract_strided_slice %43 {offsets = [0, 16], sizes = [8, 8], strides = [1, 1]} : vector<8x32xf32> to vector<8x8xf32>
    %119 = vector.extract_strided_slice %33 {offsets = [0, 16], sizes = [8, 8], strides = [1, 1]} : vector<8x32xf32> to vector<8x8xf32>
    %cst_54 = arith.constant dense<0.000000e+00> : vector<8x8xf32>
    %120 = tpu.matmul %117, %116, %cst_54 {dimension_numbers = #tpu.dot_dimension_numbers<[1], [1], [0], [0], [0, 0, 1, 0], [], []>} : vector<8x8xf32>, vector<8x8xf32>, vector<8x8xf32> -> vector<8x8xf32>
    %cst_55 = arith.constant dense<0.000000e+00> : vector<8x8xf32>
    %121 = tpu.matmul %118, %119, %cst_55 {dimension_numbers = #tpu.dot_dimension_numbers<[1], [1], [0], [0], [0, 0, 1, 0], [], []>} : vector<8x8xf32>, vector<8x8xf32>, vector<8x8xf32> -> vector<8x8xf32>
    %cst_56 = arith.constant dense<0.000000e+00> : vector<8x8xf32>
    %122 = tpu.matmul %52, %121, %cst_56 {dimension_numbers = #tpu.dot_dimension_numbers<[1], [0], [0], [1], [0, 0, 1, 1], [], []>} : vector<8x8xf32>, vector<8x8xf32>, vector<8x8xf32> -> vector<8x8xf32>
    %123 = vector.shape_cast %121 : vector<8x8xf32> to vector<8x1x8xf32>
    %124 = vector.broadcast %123 : vector<8x1x8xf32> to vector<8x8x8xf32>
    %125 = arith.mulf %124, %44 : vector<8x8x8xf32>
    %cst_57 = arith.constant dense<0.000000e+00> : vector<8x8xf32>
    %126 = vector.multi_reduction <add>, %125, %cst_57 [2] : vector<8x8x8xf32> to vector<8x8xf32>
    %127 = vector.shape_cast %122 : vector<8x8xf32> to vector<8x1x8xf32>
    %128 = vector.broadcast %127 : vector<8x1x8xf32> to vector<8x8x8xf32>
    %129 = arith.mulf %128, %45 : vector<8x8x8xf32>
    %cst_58 = arith.constant dense<0.000000e+00> : vector<8x8xf32>
    %130 = vector.multi_reduction <add>, %129, %cst_58 [2] : vector<8x8x8xf32> to vector<8x8xf32>
    %131 = arith.addf %126, %130 : vector<8x8xf32>
    %132 = arith.addf %120, %131 : vector<8x8xf32>
    %cst_59 = arith.constant dense<0xFF800000> : vector<8xf32>
    %133 = vector.multi_reduction <maximumf>, %132, %cst_59 [1] : vector<8x8xf32> to vector<8xf32>
    %134 = vector.shape_cast %133 : vector<8xf32> to vector<8x1xf32>
    %135 = vector.broadcast %134 : vector<8x1xf32> to vector<8x8xf32>
    %136 = arith.subf %132, %135 : vector<8x8xf32>
    %137 = math.exp %136 : vector<8x8xf32>
    %cst_60 = arith.constant dense<0.000000e+00> : vector<8xf32>
    %138 = vector.multi_reduction <add>, %137, %cst_60 [1] : vector<8x8xf32> to vector<8xf32>
    %139 = vector.shape_cast %138 : vector<8xf32> to vector<8x1xf32>
    %140 = tpu.reciprocal %139 {approx = true} : vector<8x1xf32> -> vector<8x1xf32>
    %141 = vector.broadcast %140 : vector<8x1xf32> to vector<8x8xf32>
    %142 = arith.mulf %137, %141 : vector<8x8xf32>
    %cst_61 = arith.constant dense<0.000000e+00> : vector<8x8xf32>
    %143 = tpu.matmul %142, %116, %cst_61 {dimension_numbers = #tpu.dot_dimension_numbers<[1], [0], [0], [1], [0, 0, 1, 1], [], []>} : vector<8x8xf32>, vector<8x8xf32>, vector<8x8xf32> -> vector<8x8xf32>
    %c16 = arith.constant 16 : index
    %c0_62 = arith.constant 0 : index
    %144 = vector.load %arg12[%c16, %c0_62] : memref<32x32xf32, #tpu.memory_space<vmem>>, vector<8x32xf32>
    %cst_63 = arith.constant dense<0.000000e+00> : vector<8x32xf32>
    %145 = tpu.matmul %143, %144, %cst_63 {dimension_numbers = #tpu.dot_dimension_numbers<[1], [0], [0], [1], [0, 0, 1, 1], [], []>} : vector<8x8xf32>, vector<8x32xf32>, vector<8x32xf32> -> vector<8x32xf32>
    %146 = arith.addf %115, %145 : vector<8x32xf32>
    %147 = vector.extract_strided_slice %30 {offsets = [0, 24], sizes = [8, 8], strides = [1, 1]} : vector<8x32xf32> to vector<8x8xf32>
    %148 = vector.extract_strided_slice %38 {offsets = [0, 24], sizes = [8, 8], strides = [1, 1]} : vector<8x32xf32> to vector<8x8xf32>
    %149 = vector.extract_strided_slice %43 {offsets = [0, 24], sizes = [8, 8], strides = [1, 1]} : vector<8x32xf32> to vector<8x8xf32>
    %150 = vector.extract_strided_slice %33 {offsets = [0, 24], sizes = [8, 8], strides = [1, 1]} : vector<8x32xf32> to vector<8x8xf32>
    %cst_64 = arith.constant dense<0.000000e+00> : vector<8x8xf32>
    %151 = tpu.matmul %148, %147, %cst_64 {dimension_numbers = #tpu.dot_dimension_numbers<[1], [1], [0], [0], [0, 0, 1, 0], [], []>} : vector<8x8xf32>, vector<8x8xf32>, vector<8x8xf32> -> vector<8x8xf32>
    %cst_65 = arith.constant dense<0.000000e+00> : vector<8x8xf32>
    %152 = tpu.matmul %149, %150, %cst_65 {dimension_numbers = #tpu.dot_dimension_numbers<[1], [1], [0], [0], [0, 0, 1, 0], [], []>} : vector<8x8xf32>, vector<8x8xf32>, vector<8x8xf32> -> vector<8x8xf32>
    %cst_66 = arith.constant dense<0.000000e+00> : vector<8x8xf32>
    %153 = tpu.matmul %52, %152, %cst_66 {dimension_numbers = #tpu.dot_dimension_numbers<[1], [0], [0], [1], [0, 0, 1, 1], [], []>} : vector<8x8xf32>, vector<8x8xf32>, vector<8x8xf32> -> vector<8x8xf32>
    %154 = vector.shape_cast %152 : vector<8x8xf32> to vector<8x1x8xf32>
    %155 = vector.broadcast %154 : vector<8x1x8xf32> to vector<8x8x8xf32>
    %156 = arith.mulf %155, %44 : vector<8x8x8xf32>
    %cst_67 = arith.constant dense<0.000000e+00> : vector<8x8xf32>
    %157 = vector.multi_reduction <add>, %156, %cst_67 [2] : vector<8x8x8xf32> to vector<8x8xf32>
    %158 = vector.shape_cast %153 : vector<8x8xf32> to vector<8x1x8xf32>
    %159 = vector.broadcast %158 : vector<8x1x8xf32> to vector<8x8x8xf32>
    %160 = arith.mulf %159, %45 : vector<8x8x8xf32>
    %cst_68 = arith.constant dense<0.000000e+00> : vector<8x8xf32>
    %161 = vector.multi_reduction <add>, %160, %cst_68 [2] : vector<8x8x8xf32> to vector<8x8xf32>
    %162 = arith.addf %157, %161 : vector<8x8xf32>
    %163 = arith.addf %151, %162 : vector<8x8xf32>
    %cst_69 = arith.constant dense<0xFF800000> : vector<8xf32>
    %164 = vector.multi_reduction <maximumf>, %163, %cst_69 [1] : vector<8x8xf32> to vector<8xf32>
    %165 = vector.shape_cast %164 : vector<8xf32> to vector<8x1xf32>
    %166 = vector.broadcast %165 : vector<8x1xf32> to vector<8x8xf32>
    %167 = arith.subf %163, %166 : vector<8x8xf32>
    %168 = math.exp %167 : vector<8x8xf32>
    %cst_70 = arith.constant dense<0.000000e+00> : vector<8xf32>
    %169 = vector.multi_reduction <add>, %168, %cst_70 [1] : vector<8x8xf32> to vector<8xf32>
    %170 = vector.shape_cast %169 : vector<8xf32> to vector<8x1xf32>
    %171 = tpu.reciprocal %170 {approx = true} : vector<8x1xf32> -> vector<8x1xf32>
    %172 = vector.broadcast %171 : vector<8x1xf32> to vector<8x8xf32>
    %173 = arith.mulf %168, %172 : vector<8x8xf32>
    %cst_71 = arith.constant dense<0.000000e+00> : vector<8x8xf32>
    %174 = tpu.matmul %173, %147, %cst_71 {dimension_numbers = #tpu.dot_dimension_numbers<[1], [0], [0], [1], [0, 0, 1, 1], [], []>} : vector<8x8xf32>, vector<8x8xf32>, vector<8x8xf32> -> vector<8x8xf32>
    %c24 = arith.constant 24 : index
    %c0_72 = arith.constant 0 : index
    %175 = vector.load %arg12[%c24, %c0_72] : memref<32x32xf32, #tpu.memory_space<vmem>>, vector<8x32xf32>
    %cst_73 = arith.constant dense<0.000000e+00> : vector<8x32xf32>
    %176 = tpu.matmul %174, %175, %cst_73 {dimension_numbers = #tpu.dot_dimension_numbers<[1], [0], [0], [1], [0, 0, 1, 1], [], []>} : vector<8x8xf32>, vector<8x32xf32>, vector<8x32xf32> -> vector<8x32xf32>
    %177 = arith.addf %146, %176 : vector<8x32xf32>
    %c0_74 = arith.constant 0 : index
    %c0_75 = arith.constant 0 : index
    %178 = vector.load %arg13[%c0_74, %c0_75] : memref<1x32xf32, #tpu.memory_space<vmem>>, vector<1x32xf32>
    %179 = vector.broadcast %178 : vector<1x32xf32> to vector<8x32xf32>
    %180 = arith.addf %177, %179 : vector<8x32xf32>
    %c0_76 = arith.constant 0 : index
    %c0_77 = arith.constant 0 : index
    %c0_78 = arith.constant 0 : index
    %181 = vector.load %arg14[%c0_76, %c0_77, %c0_78] : memref<1x8x32xf32, #tpu.memory_space<vmem>>, vector<1x8x32xf32>
    %182 = vector.shape_cast %181 : vector<1x8x32xf32> to vector<8x32xf32>
    %183 = vector.shape_cast %180 : vector<8x32xf32> to vector<1x8x32xf32>
    tpu.vector_store %arg14[%c0_76, %c0_77, %c0_78], %183 {strides = array<i32>} : memref<1x8x32xf32, #tpu.memory_space<vmem>>, vector<1x8x32xf32>,
    return
  }
  func.func @transform_0(%arg0: i32) -> (i32, i32, i32) {
    %c0_i32 = arith.constant 0 : i32
    %c0_i32_0 = arith.constant 0 : i32
    %c0_i32_1 = arith.constant 0 : i32
    return %arg0, %c0_i32, %c0_i32_0 : i32, i32, i32
  }
  func.func @transform_1(%arg0: i32) -> (i32, i32) {
    %c0_i32 = arith.constant 0 : i32
    %c0_i32_0 = arith.constant 0 : i32
    %c0_i32_1 = arith.constant 0 : i32
    return %c0_i32, %c0_i32_0 : i32, i32
  }
  func.func @transform_2(%arg0: i32) -> (i32, i32) {
    %c0_i32 = arith.constant 0 : i32
    %c0_i32_0 = arith.constant 0 : i32
    %c0_i32_1 = arith.constant 0 : i32
    return %c0_i32, %c0_i32_0 : i32, i32
  }
  func.func @transform_3(%arg0: i32) -> (i32, i32) {
    %c0_i32 = arith.constant 0 : i32
    %c0_i32_0 = arith.constant 0 : i32
    %c0_i32_1 = arith.constant 0 : i32
    return %c0_i32, %c0_i32_0 : i32, i32
  }
  func.func @transform_4(%arg0: i32) -> (i32, i32) {
    %c0_i32 = arith.constant 0 : i32
    %c0_i32_0 = arith.constant 0 : i32
    %c0_i32_1 = arith.constant 0 : i32
    return %c0_i32, %c0_i32_0 : i32, i32
  }
  func.func @transform_5(%arg0: i32) -> (i32, i32) {
    %c0_i32 = arith.constant 0 : i32
    %c0_i32_0 = arith.constant 0 : i32
    %c0_i32_1 = arith.constant 0 : i32
    return %c0_i32, %c0_i32_0 : i32, i32
  }
  func.func @transform_6(%arg0: i32) -> (i32, i32) {
    %c0_i32 = arith.constant 0 : i32
    %c0_i32_0 = arith.constant 0 : i32
    %c0_i32_1 = arith.constant 0 : i32
    return %c0_i32, %c0_i32_0 : i32, i32
  }
  func.func @transform_7(%arg0: i32) -> (i32, i32) {
    %c0_i32 = arith.constant 0 : i32
    %c0_i32_0 = arith.constant 0 : i32
    %c0_i32_1 = arith.constant 0 : i32
    return %c0_i32, %c0_i32_0 : i32, i32
  }
  func.func @transform_8(%arg0: i32) -> (i32, i32) {
    %c0_i32 = arith.constant 0 : i32
    %c0_i32_0 = arith.constant 0 : i32
    %c0_i32_1 = arith.constant 0 : i32
    return %c0_i32, %c0_i32_0 : i32, i32
  }
  func.func @transform_9(%arg0: i32) -> (i32, i32, i32) {
    %c0_i32 = arith.constant 0 : i32
    %c0_i32_0 = arith.constant 0 : i32
    %c0_i32_1 = arith.constant 0 : i32
    %c0_i32_2 = arith.constant 0 : i32
    return %c0_i32, %c0_i32_0, %c0_i32_1 : i32, i32, i32
  }
  func.func @transform_10(%arg0: i32) -> (i32, i32, i32) {
    %c0_i32 = arith.constant 0 : i32
    %c0_i32_0 = arith.constant 0 : i32
    %c0_i32_1 = arith.constant 0 : i32
    %c0_i32_2 = arith.constant 0 : i32
    return %c0_i32, %c0_i32_0, %c0_i32_1 : i32, i32, i32
  }
  func.func @transform_11(%arg0: i32) -> (i32, i32) {
    %c0_i32 = arith.constant 0 : i32
    %c0_i32_0 = arith.constant 0 : i32
    %c0_i32_1 = arith.constant 0 : i32
    return %c0_i32, %c0_i32_0 : i32, i32
  }
  func.func @transform_12(%arg0: i32) -> (i32, i32) {
    %c0_i32 = arith.constant 0 : i32
    %c0_i32_0 = arith.constant 0 : i32
    %c0_i32_1 = arith.constant 0 : i32
    return %c0_i32, %c0_i32_0 : i32, i32
  }
  func.func @transform_13(%arg0: i32) -> (i32, i32, i32) {
    %c0_i32 = arith.constant 0 : i32
    %c0_i32_0 = arith.constant 0 : i32
    %c0_i32_1 = arith.constant 0 : i32
    return %arg0, %c0_i32, %c0_i32_0 : i32, i32, i32
  }
}

</mosaic_0001>

<llo_original>
// kernel: tpu_custom_call.1
$region0: #{tpu_custom_call.1}
  #allocation0 [shape = 'u32[]', space=smem, size = 0x4, offset = 0x4, fixed_abs, tag = 'smem constant byte address 0x4 - core index']
  #allocation1 [shape = 'u32[144,128]{1,0:T(1,128)}', space=vmem, size = 0x12000, scoped, tag = 'internal scratch']
  %s0 = inlined_call_operand.hbm [shape: f32[2,8,32], index: 0, kind: input, shape index: {}]
  %s1 = inlined_call_operand.vmem [shape: f32[1,32], index: 1, kind: input, shape index: {}]
  %s2 = inlined_call_operand.hbm [shape: f32[1,32], index: 2, kind: input, shape index: {}]
  %s3 = inlined_call_operand.hbm [shape: f32[32,32], index: 3, kind: input, shape index: {}]
  %s4 = inlined_call_operand.hbm [shape: f32[1,32], index: 4, kind: input, shape index: {}]
  %s5 = inlined_call_operand.hbm [shape: f32[32,32], index: 5, kind: input, shape index: {}]
  %s6 = inlined_call_operand.vmem [shape: f32[8,32], index: 6, kind: input, shape index: {}]
  %s7 = inlined_call_operand.hbm [shape: f32[1,32], index: 7, kind: input, shape index: {}]
  %s8 = inlined_call_operand.hbm [shape: f32[1,32], index: 8, kind: input, shape index: {}]
  %s9 = inlined_call_operand.hbm [shape: f32[8,8,8], index: 9, kind: input, shape index: {}]
  %s10 = inlined_call_operand.hbm [shape: f32[8,8,8], index: 10, kind: input, shape index: {}]
  %s11 = inlined_call_operand.vmem [shape: f32[32,32], index: 11, kind: input, shape index: {}]
  %s12 = inlined_call_operand.vmem [shape: f32[1,32], index: 12, kind: input, shape index: {}]
  %s13 = inlined_call_operand.hbm [shape: f32[2,8,32], index: 13, kind: output, shape index: {}]
  %s14 = sld [smem:[#allocation0]]
  $region121: #{tpu_custom_call.1} parent=0
    _
  %s16 = ssub.s32 1, %s14
  %s17 = scalar_select 0, %s16, %s14
  $region1: #{tpu_custom_call.1} parent=0
    #allocation2 [shape = 'u8[8192]{0}', space=vmem, size = 0x2000, scoped, tag = 'input window, operand 0']
    #allocation3 [shape = 's32[2]{0}', space=sflag, size = 0x8, scoped, tag = 'scoped memory for tpu_custom_call.1']
    #allocation4 [shape = 's32[2]{0}', space=sflag, size = 0x8, scoped, tag = 'scoped memory for tpu_custom_call.1']
    #allocation5 [shape = 'u8[512]{0}', space=vmem, size = 0x400, scoped, tag = 'input window, operand 2, single buffered']
    #allocation6 [shape = 's32[1]{0}', space=sflag, size = 0x4, scoped, tag = 'scoped memory for tpu_custom_call.1']
    #allocation7 [shape = 'u8[16384]{0}', space=vmem, size = 0x4000, scoped, tag = 'input window, operand 3, single buffered']
    #allocation8 [shape = 'u8[512]{0}', space=vmem, size = 0x400, scoped, tag = 'input window, operand 4, single buffered']
    #allocation9 [shape = 's32[1]{0}', space=sflag, size = 0x4, scoped, tag = 'scoped memory for tpu_custom_call.1']
    #allocation10 [shape = 'u8[16384]{0}', space=vmem, size = 0x4000, scoped, tag = 'input window, operand 5, single buffered']
    #allocation11 [shape = 'u8[512]{0}', space=vmem, size = 0x400, scoped, tag = 'input window, operand 7, single buffered']
    #allocation12 [shape = 's32[1]{0}', space=sflag, size = 0x4, scoped, tag = 'scoped memory for tpu_custom_call.1']
    #allocation13 [shape = 'u8[512]{0}', space=vmem, size = 0x400, scoped, tag = 'input window, operand 8, single buffered']
    #allocation14 [shape = 'u8[32768]{0}', space=vmem, size = 0x8000, scoped, tag = 'input window, operand 9, single buffered']
    #allocation15 [shape = 's32[1]{0}', space=sflag, size = 0x4, scoped, tag = 'scoped memory for tpu_custom_call.1']
    #allocation16 [shape = 'u8[32768]{0}', space=vmem, size = 0x8000, scoped, tag = 'input window, operand 10, single buffered']
    #allocation17 [shape = 'u8[8192]{0}', space=vmem, size = 0x2000, scoped, tag = 'output window, operand 0']
    %18 = vsyncpa [#allocation3], 0
    %s19 = scalar_lea.sflag [#allocation3], 1
    %20 = vsyncpa %s19, 0
    %21 = vsyncpa [#allocation6], 0
    %22 = vsyncpa [#allocation9], 0
    %23 = vsyncpa [#allocation12], 0
    %24 = vsyncpa [#allocation15], 0
    %25 = vsyncpa [#allocation4], 0
    %s26 = scalar_lea.sflag [#allocation4], 1
    %27 = vsyncpa %s26, 0
    loop: start=0, step=1, limit=4
    $region2: #{tpu_custom_call.1} parent=1 // loop_pre_header
      _
    $region3: #{tpu_custom_call.1} parent=1 // loop_header
      %s29 = sphi 0, %s33
      %p30 = scmp.ge.s32.totalorder %s29, 4
      %s39 = sphi 0, %s41
      %s42 = sphi 0, %s39
      %s43 = sphi 0, %s42
      %s59 = sphi 0, %s43
      %s63 = sphi 0, %s63
      %s65 = sphi 0, %s63
      %s66 = sphi 0, %s65
      %s80 = sphi 0, %s66
      %s84 = sphi 0, %s84
      %s86 = sphi 0, %s84
      %s87 = sphi 0, %s86
      %s101 = sphi 0, %s87
      %s105 = sphi 0, %s105
      %s107 = sphi 0, %s105
      %s108 = sphi 0, %s107
      %s122 = sphi 0, %s108
      %s126 = sphi 0, %s126
      %s128 = sphi 0, %s126
      %s129 = sphi 0, %s128
      %s143 = sphi 0, %s129
      %s147 = sphi 0, %s147
      %s149 = sphi 0, %s147
      %s150 = sphi 0, %s149
      %s164 = sphi 0, %s150
      %s168 = sphi 0, %s168
      %s170 = sphi 0, %s168
      %s171 = sphi 0, %s170
      %s185 = sphi 0, %s171
      %s189 = sphi 0, %s189
      %s191 = sphi 0, %s189
      %s192 = sphi 0, %s191
      %s206 = sphi 0, %s192
      %s210 = sphi 0, %s210
      %s212 = sphi 0, %s210
      %s213 = sphi 0, %s212
      %s227 = sphi 0, %s213
      %s231 = sphi 0, %s231
      %s233 = sphi 0, %s231
      %s234 = sphi 0, %s233
      %s248 = sphi 0, %s234
      %s252 = sphi 0, %s252
      %s254 = sphi 0, %s252
      %s255 = sphi 0, %s254
      %s269 = sphi 0, %s255
      %s273 = sphi 0, %s273
      %s275 = sphi 0, %s273
      %s276 = sphi 0, %s275
      %s290 = sphi 0, %s276
      %s294 = sphi 0, %s294
      %s296 = sphi 0, %s294
      %s297 = sphi 0, %s296
      %s311 = sphi 0, %s297
      %s317 = sphi 0, %s319
      %s320 = sphi 0, %s317
      %s321 = sphi 0, %s320
      %s337 = sphi 0, %s321
    $region4: #{tpu_custom_call.1} parent=1 // loop_header_branch
      %32 = sbr.rel (%p30) target = $region8
    $region5: #{tpu_custom_call.1} parent=1 // loop_body
      %s34 = ssub.s32 %s29, 1
      %s35 = ssub.s32 %s29, 2
      %s36 = sadd.s32 %s29, 1
      %s37 = ssub.s32 %s29, %s36
      %p38 = scmp.eq.s32.totalorder %s37, 0
      %s40 = sadd.s32 %s39, 1
      %s41 = scalar_select %p38, %s39, %s40
      %p44 = pneg %p38
      %p45 = scmp.eq.s32.totalorder %s29, 1
      %p46 = por %p44, %p45
      %p47 = scmp.ne.s32.totalorder %s39, %s42
      %p48 = scmp.eq.s32.totalorder %s29, 0
      %p49 = por %p47, %p48
      %p50 = scmp.ne.s32.totalorder %s39, %s42
      %p51 = scmp.eq.s32.totalorder %s34, 1
      %p52 = por %p50, %p51
      %p53 = scmp.ne.s32.totalorder %s42, %s43
      %p54 = scmp.eq.s32.totalorder %s34, 0
      %p55 = por %p53, %p54
      %p56 = scmp.ne.s32.totalorder %s42, %s43
      %p57 = scmp.eq.s32.totalorder %s35, 1
      %p58 = por %p56, %p57
      %p60 = scmp.ne.s32.totalorder %s43, %s59
      %p61 = scmp.eq.s32.totalorder %s35, 0
      %p62 = por %p60, %p61
      %s64 = sadd.s32 %s63, 1
      %p67 = scmp.eq.s32.totalorder %s29, 1
      %p68 = scmp.ne.s32.totalorder %s63, %s65
      %p69 = scmp.eq.s32.totalorder %s29, 0
      %p70 = por %p68, %p69
      %p71 = scmp.ne.s32.totalorder %s63, %s65
      %p72 = scmp.eq.s32.totalorder %s34, 1
      %p73 = por %p71, %p72
      %p74 = scmp.ne.s32.totalorder %s65, %s66
      %p75 = scmp.eq.s32.totalorder %s34, 0
      %p76 = por %p74, %p75
      %p77 = scmp.ne.s32.totalorder %s65, %s66
      %p78 = scmp.eq.s32.totalorder %s35, 1
      %p79 = por %p77, %p78
      %p81 = scmp.ne.s32.totalorder %s66, %s80
      %p82 = scmp.eq.s32.totalorder %s35, 0
      %p83 = por %p81, %p82
      %s85 = sadd.s32 %s84, 1
      %p88 = scmp.eq.s32.totalorder %s29, 1
      %p89 = scmp.ne.s32.totalorder %s84, %s86
      %p90 = scmp.eq.s32.totalorder %s29, 0
      %p91 = por %p89, %p90
      %p92 = scmp.ne.s32.totalorder %s84, %s86
      %p93 = scmp.eq.s32.totalorder %s34, 1
      %p94 = por %p92, %p93
      %p95 = scmp.ne.s32.totalorder %s86, %s87
      %p96 = scmp.eq.s32.totalorder %s34, 0
      %p97 = por %p95, %p96
      %p98 = scmp.ne.s32.totalorder %s86, %s87
      %p99 = scmp.eq.s32.totalorder %s35, 1
      %p100 = por %p98, %p99
      %p102 = scmp.ne.s32.totalorder %s87, %s101
      %p103 = scmp.eq.s32.totalorder %s35, 0
      %p104 = por %p102, %p103
      %s106 = sadd.s32 %s105, 1
      %p109 = scmp.eq.s32.totalorder %s29, 1
      %p110 = scmp.ne.s32.totalorder %s105, %s107
      %p111 = scmp.eq.s32.totalorder %s29, 0
      %p112 = por %p110, %p111
      %p113 = scmp.ne.s32.totalorder %s105, %s107
      %p114 = scmp.eq.s32.totalorder %s34, 1
      %p115 = por %p113, %p114
      %p116 = scmp.ne.s32.totalorder %s107, %s108
      %p117 = scmp.eq.s32.totalorder %s34, 0
      %p118 = por %p116, %p117
      %p119 = scmp.ne.s32.totalorder %s107, %s108
      %p120 = scmp.eq.s32.totalorder %s35, 1
      %p121 = por %p119, %p120
      %p123 = scmp.ne.s32.totalorder %s108, %s122
      %p124 = scmp.eq.s32.totalorder %s35, 0
      %p125 = por %p123, %p124
      %s127 = sadd.s32 %s126, 1
      %p130 = scmp.eq.s32.totalorder %s29, 1
      %p131 = scmp.ne.s32.totalorder %s126, %s128
      %p132 = scmp.eq.s32.totalorder %s29, 0
      %p133 = por %p131, %p132
      %p134 = scmp.ne.s32.totalorder %s126, %s128
      %p135 = scmp.eq.s32.totalorder %s34, 1
      %p136 = por %p134, %p135
      %p137 = scmp.ne.s32.totalorder %s128, %s129
      %p138 = scmp.eq.s32.totalorder %s34, 0
      %p139 = por %p137, %p138
      %p140 = scmp.ne.s32.totalorder %s128, %s129
      %p141 = scmp.eq.s32.totalorder %s35, 1
      %p142 = por %p140, %p141
      %p144 = scmp.ne.s32.totalorder %s129, %s143
      %p145 = scmp.eq.s32.totalorder %s35, 0
      %p146 = por %p144, %p145
      %s148 = sadd.s32 %s147, 1
      %p151 = scmp.eq.s32.totalorder %s29, 1
      %p152 = scmp.ne.s32.totalorder %s147, %s149
      %p153 = scmp.eq.s32.totalorder %s29, 0
      %p154 = por %p152, %p153
      %p155 = scmp.ne.s32.totalorder %s147, %s149
      %p156 = scmp.eq.s32.totalorder %s34, 1
      %p157 = por %p155, %p156
      %p158 = scmp.ne.s32.totalorder %s149, %s150
      %p159 = scmp.eq.s32.totalorder %s34, 0
      %p160 = por %p158, %p159
      %p161 = scmp.ne.s32.totalorder %s149, %s150
      %p162 = scmp.eq.s32.totalorder %s35, 1
      %p163 = por %p161, %p162
      %p165 = scmp.ne.s32.totalorder %s150, %s164
      %p166 = scmp.eq.s32.totalorder %s35, 0
      %p167 = por %p165, %p166
      %s169 = sadd.s32 %s168, 1
      %p172 = scmp.eq.s32.totalorder %s29, 1
      %p173 = scmp.ne.s32.totalorder %s168, %s170
      %p174 = scmp.eq.s32.totalorder %s29, 0
      %p175 = por %p173, %p174
      %p176 = scmp.ne.s32.totalorder %s168, %s170
      %p177 = scmp.eq.s32.totalorder %s34, 1
      %p178 = por %p176, %p177
      %p179 = scmp.ne.s32.totalorder %s170, %s171
      %p180 = scmp.eq.s32.totalorder %s34, 0
      %p181 = por %p179, %p180
      %p182 = scmp.ne.s32.totalorder %s170, %s171
      %p183 = scmp.eq.s32.totalorder %s35, 1
      %p184 = por %p182, %p183
      %p186 = scmp.ne.s32.totalorder %s171, %s185
      %p187 = scmp.eq.s32.totalorder %s35, 0
      %p188 = por %p186, %p187
      %s190 = sadd.s32 %s189, 1
      %p193 = scmp.eq.s32.totalorder %s29, 1
      %p194 = scmp.ne.s32.totalorder %s189, %s191
      %p195 = scmp.eq.s32.totalorder %s29, 0
      %p196 = por %p194, %p195
      %p197 = scmp.ne.s32.totalorder %s189, %s191
      %p198 = scmp.eq.s32.totalorder %s34, 1
      %p199 = por %p197, %p198
      %p200 = scmp.ne.s32.totalorder %s191, %s192
      %p201 = scmp.eq.s32.totalorder %s34, 0
      %p202 = por %p200, %p201
      %p203 = scmp.ne.s32.totalorder %s191, %s192
      %p204 = scmp.eq.s32.totalorder %s35, 1
      %p205 = por %p203, %p204
      %p207 = scmp.ne.s32.totalorder %s192, %s206
      %p208 = scmp.eq.s32.totalorder %s35, 0
      %p209 = por %p207, %p208
      %s211 = sadd.s32 %s210, 1
      %p214 = scmp.eq.s32.totalorder %s29, 1
      %p215 = scmp.ne.s32.totalorder %s210, %s212
      %p216 = scmp.eq.s32.totalorder %s29, 0
      %p217 = por %p215, %p216
      %p218 = scmp.ne.s32.totalorder %s210, %s212
      %p219 = scmp.eq.s32.totalorder %s34, 1
      %p220 = por %p218, %p219
      %p221 = scmp.ne.s32.totalorder %s212, %s213
      %p222 = scmp.eq.s32.totalorder %s34, 0
      %p223 = por %p221, %p222
      %p224 = scmp.ne.s32.totalorder %s212, %s213
      %p225 = scmp.eq.s32.totalorder %s35, 1
      %p226 = por %p224, %p225
      %p228 = scmp.ne.s32.totalorder %s213, %s227
      %p229 = scmp.eq.s32.totalorder %s35, 0
      %p230 = por %p228, %p229
      %s232 = sadd.s32 %s231, 1
      %p235 = scmp.eq.s32.totalorder %s29, 1
      %p236 = scmp.ne.s32.totalorder %s231, %s233
      %p237 = scmp.eq.s32.totalorder %s29, 0
      %p238 = por %p236, %p237
      %p239 = scmp.ne.s32.totalorder %s231, %s233
      %p240 = scmp.eq.s32.totalorder %s34, 1
      %p241 = por %p239, %p240
      %p242 = scmp.ne.s32.totalorder %s233, %s234
      %p243 = scmp.eq.s32.totalorder %s34, 0
      %p244 = por %p242, %p243
      %p245 = scmp.ne.s32.totalorder %s233, %s234
      %p246 = scmp.eq.s32.totalorder %s35, 1
      %p247 = por %p245, %p246
      %p249 = scmp.ne.s32.totalorder %s234, %s248
      %p250 = scmp.eq.s32.totalorder %s35, 0
      %p251 = por %p249, %p250
      %s253 = sadd.s32 %s252, 1
      %p256 = scmp.eq.s32.totalorder %s29, 1
      %p257 = scmp.ne.s32.totalorder %s252, %s254
      %p258 = scmp.eq.s32.totalorder %s29, 0
      %p259 = por %p257, %p258
      %p260 = scmp.ne.s32.totalorder %s252, %s254
      %p261 = scmp.eq.s32.totalorder %s34, 1
      %p262 = por %p260, %p261
      %p263 = scmp.ne.s32.totalorder %s254, %s255
      %p264 = scmp.eq.s32.totalorder %s34, 0
      %p265 = por %p263, %p264
      %p266 = scmp.ne.s32.totalorder %s254, %s255
      %p267 = scmp.eq.s32.totalorder %s35, 1
      %p268 = por %p266, %p267
      %p270 = scmp.ne.s32.totalorder %s255, %s269
      %p271 = scmp.eq.s32.totalorder %s35, 0
      %p272 = por %p270, %p271
      %s274 = sadd.s32 %s273, 1
      %p277 = scmp.eq.s32.totalorder %s29, 1
      %p278 = scmp.ne.s32.totalorder %s273, %s275
      %p279 = scmp.eq.s32.totalorder %s29, 0
      %p280 = por %p278, %p279
      %p281 = scmp.ne.s32.totalorder %s273, %s275
      %p282 = scmp.eq.s32.totalorder %s34, 1
      %p283 = por %p281, %p282
      %p284 = scmp.ne.s32.totalorder %s275, %s276
      %p285 = scmp.eq.s32.totalorder %s34, 0
      %p286 = por %p284, %p285
      %p287 = scmp.ne.s32.totalorder %s275, %s276
      %p288 = scmp.eq.s32.totalorder %s35, 1
      %p289 = por %p287, %p288
      %p291 = scmp.ne.s32.totalorder %s276, %s290
      %p292 = scmp.eq.s32.totalorder %s35, 0
      %p293 = por %p291, %p292
      %s295 = sadd.s32 %s294, 1
      %p298 = scmp.eq.s32.totalorder %s29, 1
      %p299 = scmp.ne.s32.totalorder %s294, %s296
      %p300 = scmp.eq.s32.totalorder %s29, 0
      %p301 = por %p299, %p300
      %p302 = scmp.ne.s32.totalorder %s294, %s296
      %p303 = scmp.eq.s32.totalorder %s34, 1
      %p304 = por %p302, %p303
      %p305 = scmp.ne.s32.totalorder %s296, %s297
      %p306 = scmp.eq.s32.totalorder %s34, 0
      %p307 = por %p305, %p306
      %p308 = scmp.ne.s32.totalorder %s296, %s297
      %p309 = scmp.eq.s32.totalorder %s35, 1
      %p310 = por %p308, %p309
      %p312 = scmp.ne.s32.totalorder %s297, %s311
      %p313 = scmp.eq.s32.totalorder %s35, 0
      %p314 = por %p312, %p313
      %s315 = ssub.s32 %s29, %s36
      %p316 = scmp.eq.s32.totalorder %s315, 0
      %s318 = sadd.s32 %s317, 1
      %s319 = scalar_select %p316, %s317, %s318
      %p322 = pneg %p316
      %p323 = scmp.eq.s32.totalorder %s29, 1
      %p324 = por %p322, %p323
      %p325 = scmp.ne.s32.totalorder %s317, %s320
      %p326 = scmp.eq.s32.totalorder %s29, 0
      %p327 = por %p325, %p326
      %p328 = scmp.ne.s32.totalorder %s317, %s320
      %p329 = scmp.eq.s32.totalorder %s34, 1
      %p330 = por %p328, %p329
      %p331 = scmp.ne.s32.totalorder %s320, %s321
      %p332 = scmp.eq.s32.totalorder %s34, 0
      %p333 = por %p331, %p332
      %p334 = scmp.ne.s32.totalorder %s320, %s321
      %p335 = scmp.eq.s32.totalorder %s35, 1
      %p336 = por %p334, %p335
      %p338 = scmp.ne.s32.totalorder %s321, %s337
      %p339 = scmp.eq.s32.totalorder %s35, 0
      %p340 = por %p338, %p339
      %p341 = scmp.le.s32.totalorder 1, %s29
      %p342 = scmp.lt.s32.totalorder %s29, 3
      %p343 = pnand %p341, %p342
      %p344 = pneg %p343
      // Predicated region
      $region9: #{tpu_custom_call.1} parent=5 // pred_check
        _
      $region10: #{tpu_custom_call.1} parent=5 // pred_check_branch
        %346 = sbr.rel (%p343) target = $region12
      $region11: #{tpu_custom_call.1} parent=5 // pred_region
        %s347 = ssub.s32 %s29, 1
        // Predicated region
        $region13: #{tpu_custom_call.1} parent=11 // pred_check
          %p348 = pneg %p76
        $region14: #{tpu_custom_call.1} parent=11 // pred_check_branch
          %350 = sbr.rel (%p348) target = $region16
        $region15: #{tpu_custom_call.1} parent=11 // pred_region
          _
        $region16: #{tpu_custom_call.1} parent=11 // pred_fallthru
          _
        // Predicated region
        $region17: #{tpu_custom_call.1} parent=11 // pred_check
          %p351 = pneg %p97
        $region18: #{tpu_custom_call.1} parent=11 // pred_check_branch
          %353 = sbr.rel (%p351) target = $region20
        $region19: #{tpu_custom_call.1} parent=11 // pred_region
          %s355 = ssub.s32 16, 16
          %356 = vsyncadd [#allocation6], %s355
          %s358 = sshll.u32 [#allocation5], 4
          %s359 = int_to_ptr.vmem [resolvable:$true] %s358
          %361 = dma.hbm_to_vmem [thread:$0]  %s2, 16, %s359, [#allocation6]
        $region20: #{tpu_custom_call.1} parent=11 // pred_fallthru
          _
        // Predicated region
        $region21: #{tpu_custom_call.1} parent=11 // pred_check
          %p362 = pneg %p118
        $region22: #{tpu_custom_call.1} parent=11 // pred_check_branch
          %364 = sbr.rel (%p362) target = $region24
        $region23: #{tpu_custom_call.1} parent=11 // pred_region
          %s366 = ssub.s32 512, 512
          %367 = vsyncadd [#allocation6], %s366
          %s368 = sshll.u32 [#allocation7], 4
          %s369 = int_to_ptr.vmem [resolvable:$true] %s368
          %374 = dma.hbm_to_vmem [thread:$0]  %s3, 512, %s369, [#allocation6], 128, 128, 8
        $region24: #{tpu_custom_call.1} parent=11 // pred_fallthru
          _
        // Predicated region
        $region25: #{tpu_custom_call.1} parent=11 // pred_check
          %p375 = pneg %p139
        $region26: #{tpu_custom_call.1} parent=11 // pred_check_branch
          %377 = sbr.rel (%p375) target = $region28
        $region27: #{tpu_custom_call.1} parent=11 // pred_region
          %s379 = ssub.s32 16, 16
          %380 = vsyncadd [#allocation9], %s379
          %s382 = sshll.u32 [#allocation8], 4
          %s383 = int_to_ptr.vmem [resolvable:$true] %s382
          %385 = dma.hbm_to_vmem [thread:$0]  %s4, 16, %s383, [#allocation9]
        $region28: #{tpu_custom_call.1} parent=11 // pred_fallthru
          _
        // Predicated region
        $region29: #{tpu_custom_call.1} parent=11 // pred_check
          %p386 = pneg %p160
        $region30: #{tpu_custom_call.1} parent=11 // pred_check_branch
          %388 = sbr.rel (%p386) target = $region32
        $region31: #{tpu_custom_call.1} parent=11 // pred_region
          %s390 = ssub.s32 512, 512
          %391 = vsyncadd [#allocation9], %s390
          %s392 = sshll.u32 [#allocation10], 4
          %s393 = int_to_ptr.vmem [resolvable:$true] %s392
          %398 = dma.hbm_to_vmem [thread:$0]  %s5, 512, %s393, [#allocation9], 128, 128, 8
        $region32: #{tpu_custom_call.1} parent=11 // pred_fallthru
          _
        // Predicated region
        $region33: #{tpu_custom_call.1} parent=11 // pred_check
          %p399 = pneg %p181
        $region34: #{tpu_custom_call.1} parent=11 // pred_check_branch
          %401 = sbr.rel (%p399) target = $region36
        $region35: #{tpu_custom_call.1} parent=11 // pred_region
          _
        $region36: #{tpu_custom_call.1} parent=11 // pred_fallthru
          _
        // Predicated region
        $region37: #{tpu_custom_call.1} parent=11 // pred_check
          %p402 = pneg %p202
        $region38: #{tpu_custom_call.1} parent=11 // pred_check_branch
          %404 = sbr.rel (%p402) target = $region40
        $region39: #{tpu_custom_call.1} parent=11 // pred_region
          %s406 = ssub.s32 16, 16
          %407 = vsyncadd [#allocation12], %s406
          %s409 = sshll.u32 [#allocation11], 4
          %s410 = int_to_ptr.vmem [resolvable:$true] %s409
          %412 = dma.hbm_to_vmem [thread:$0]  %s7, 16, %s410, [#allocation12]
        $region40: #{tpu_custom_call.1} parent=11 // pred_fallthru
          _
        // Predicated region
        $region41: #{tpu_custom_call.1} parent=11 // pred_check
          %p413 = pneg %p223
        $region42: #{tpu_custom_call.1} parent=11 // pred_check_branch
          %415 = sbr.rel (%p413) target = $region44
        $region43: #{tpu_custom_call.1} parent=11 // pred_region
          %s417 = ssub.s32 16, 16
          %418 = vsyncadd [#allocation12], %s417
          %s420 = sshll.u32 [#allocation13], 4
          %s421 = int_to_ptr.vmem [resolvable:$true] %s420
          %423 = dma.hbm_to_vmem [thread:$0]  %s8, 16, %s421, [#allocation12]
        $region44: #{tpu_custom_call.1} parent=11 // pred_fallthru
          _
        // Predicated region
        $region45: #{tpu_custom_call.1} parent=11 // pred_check
          %p424 = pneg %p244
        $region46: #{tpu_custom_call.1} parent=11 // pred_check_branch
          %426 = sbr.rel (%p424) target = $region48
        $region47: #{tpu_custom_call.1} parent=11 // pred_region
          %s428 = ssub.s32 1024, 1024
          %429 = vsyncadd [#allocation15], %s428
          %s430 = sshll.u32 [#allocation14], 4
          %s431 = int_to_ptr.vmem [resolvable:$true] %s430
          %436 = dma.hbm_to_vmem [thread:$0]  %s9, 1024, %s431, [#allocation15], 128, 128, 8
        $region48: #{tpu_custom_call.1} parent=11 // pred_fallthru
          _
        // Predicated region
        $region49: #{tpu_custom_call.1} parent=11 // pred_check
          %p437 = pneg %p265
        $region50: #{tpu_custom_call.1} parent=11 // pred_check_branch
          %439 = sbr.rel (%p437) target = $region52
        $region51: #{tpu_custom_call.1} parent=11 // pred_region
          %s441 = ssub.s32 1024, 1024
          %442 = vsyncadd [#allocation15], %s441
          %s443 = sshll.u32 [#allocation16], 4
          %s444 = int_to_ptr.vmem [resolvable:$true] %s443
          %449 = dma.hbm_to_vmem [thread:$0]  %s10, 1024, %s444, [#allocation15], 128, 128, 8
        $region52: #{tpu_custom_call.1} parent=11 // pred_fallthru
          _
        // Predicated region
        $region53: #{tpu_custom_call.1} parent=11 // pred_check
          %p450 = pneg %p286
        $region54: #{tpu_custom_call.1} parent=11 // pred_check_branch
          %452 = sbr.rel (%p450) target = $region56
        $region55: #{tpu_custom_call.1} parent=11 // pred_region
          _
        $region56: #{tpu_custom_call.1} parent=11 // pred_fallthru
          _
        // Predicated region
        $region57: #{tpu_custom_call.1} parent=11 // pred_check
          %p453 = pneg %p307
        $region58: #{tpu_custom_call.1} parent=11 // pred_check_branch
          %455 = sbr.rel (%p453) target = $region60
        $region59: #{tpu_custom_call.1} parent=11 // pred_region
          _
        $region60: #{tpu_custom_call.1} parent=11 // pred_fallthru
          _
      $region12: #{tpu_custom_call.1} parent=5 // pred_fallthru
        _
      %p456 = scmp.lt.s32.totalorder %s29, 2
      // Predicated region
      $region61: #{tpu_custom_call.1} parent=5 // pred_check
        %p457 = pneg %p456
      $region62: #{tpu_custom_call.1} parent=5 // pred_check_branch
        %459 = sbr.rel (%p457) target = $region64
      $region63: #{tpu_custom_call.1} parent=5 // pred_region
        // Predicated region
        $region65: #{tpu_custom_call.1} parent=63 // pred_check
          %p460 = pneg %p49
        $region66: #{tpu_custom_call.1} parent=63 // pred_check_branch
          %462 = sbr.rel (%p460) target = $region68
        $region67: #{tpu_custom_call.1} parent=63 // pred_region
          %s463 = sand.u32 %s39, 1
          %s464 = scalar_lea.sflag [#allocation3], %s463
          %s465 = sand.u32 %s39, 1
          %s466 = smul.addr %s465, 8
          %s467 = scalar_lea.vmem [#allocation2], %s466
          %s469 = ssub.s32 128, 128
          %470 = vsyncadd %s464, %s469
          %s471 = smul.addr %s29, 128
          %s472 = scalar_lea.hbm %s0, %s471
          %s474 = sshll.u32 %s467, 4
          %s475 = int_to_ptr.vmem [resolvable:$true] %s474
          %477 = dma.hbm_to_vmem [thread:$0]  %s472, 128, %s475, %s464
        $region68: #{tpu_custom_call.1} parent=63 // pred_fallthru
          _
      $region64: #{tpu_custom_call.1} parent=5 // pred_fallthru
        _
      %p478 = scmp.le.s32.totalorder 1, %s29
      %p479 = scmp.lt.s32.totalorder %s29, 3
      %p480 = pnand %p478, %p479
      %p481 = pneg %p480
      // Predicated region
      $region69: #{tpu_custom_call.1} parent=5 // pred_check
        _
      $region70: #{tpu_custom_call.1} parent=5 // pred_check_branch
        %483 = sbr.rel (%p480) target = $region72
      $region71: #{tpu_custom_call.1} parent=5 // pred_region
        %s484 = ssub.s32 %s29, 1
        %s485 = sand.u32 %s42, 1
        %s486 = scalar_lea.sflag [#allocation3], %s485
        %s487 = sand.u32 %s42, 1
        %s488 = smul.addr %s487, 8
        %s489 = scalar_lea.vmem [#allocation2], %s488
        // Predicated region
        $region73: #{tpu_custom_call.1} parent=71 // pred_check
          %p490 = pneg %p55
        $region74: #{tpu_custom_call.1} parent=71 // pred_check_branch
          %492 = sbr.rel (%p490) target = $region76
        $region75: #{tpu_custom_call.1} parent=71 // pred_region
          %493 = dma.done %s486, 128
        $region76: #{tpu_custom_call.1} parent=71 // pred_fallthru
          _
        // Predicated region
        $region77: #{tpu_custom_call.1} parent=71 // pred_check
          %p494 = pneg %p97
        $region78: #{tpu_custom_call.1} parent=71 // pred_check_branch
          %496 = sbr.rel (%p494) target = $region80
        $region79: #{tpu_custom_call.1} parent=71 // pred_region
          %497 = dma.done [#allocation6], 16
        $region80: #{tpu_custom_call.1} parent=71 // pred_fallthru
          _
        // Predicated region
        $region81: #{tpu_custom_call.1} parent=71 // pred_check
          %p498 = pneg %p118
        $region82: #{tpu_custom_call.1} parent=71 // pred_check_branch
          %500 = sbr.rel (%p498) target = $region84
        $region83: #{tpu_custom_call.1} parent=71 // pred_region
          %501 = dma.done [#allocation6], 512
        $region84: #{tpu_custom_call.1} parent=71 // pred_fallthru
          _
        // Predicated region
        $region85: #{tpu_custom_call.1} parent=71 // pred_check
          %p502 = pneg %p139
        $region86: #{tpu_custom_call.1} parent=71 // pred_check_branch
          %504 = sbr.rel (%p502) target = $region88
        $region87: #{tpu_custom_call.1} parent=71 // pred_region
          %505 = dma.done [#allocation9], 16
        $region88: #{tpu_custom_call.1} parent=71 // pred_fallthru
          _
        // Predicated region
        $region89: #{tpu_custom_call.1} parent=71 // pred_check
          %p506 = pneg %p160
        $region90: #{tpu_custom_call.1} parent=71 // pred_check_branch
          %508 = sbr.rel (%p506) target = $region92
        $region91: #{tpu_custom_call.1} parent=71 // pred_region
          %509 = dma.done [#allocation9], 512
        $region92: #{tpu_custom_call.1} parent=71 // pred_fallthru
          _
        // Predicated region
        $region93: #{tpu_custom_call.1} parent=71 // pred_check
          %p510 = pneg %p202
        $region94: #{tpu_custom_call.1} parent=71 // pred_check_branch
          %512 = sbr.rel (%p510) target = $region96
        $region95: #{tpu_custom_call.1} parent=71 // pred_region
          %513 = dma.done [#allocation12], 16
        $region96: #{tpu_custom_call.1} parent=71 // pred_fallthru
          _
        // Predicated region
        $region97: #{tpu_custom_call.1} parent=71 // pred_check
          %p514 = pneg %p223
        $region98: #{tpu_custom_call.1} parent=71 // pred_check_branch
          %516 = sbr.rel (%p514) target = $region100
        $region99: #{tpu_custom_call.1} parent=71 // pred_region
          %517 = dma.done [#allocation12], 16
        $region100: #{tpu_custom_call.1} parent=71 // pred_fallthru
          _
        // Predicated region
        $region101: #{tpu_custom_call.1} parent=71 // pred_check
          %p518 = pneg %p244
        $region102: #{tpu_custom_call.1} parent=71 // pred_check_branch
          %520 = sbr.rel (%p518) target = $region104
        $region103: #{tpu_custom_call.1} parent=71 // pred_region
          %521 = dma.done [#allocation15], 1024
        $region104: #{tpu_custom_call.1} parent=71 // pred_fallthru
          _
        // Predicated region
        $region105: #{tpu_custom_call.1} parent=71 // pred_check
          %p522 = pneg %p265
        $region106: #{tpu_custom_call.1} parent=71 // pred_check_branch
          %524 = sbr.rel (%p522) target = $region108
        $region107: #{tpu_custom_call.1} parent=71 // pred_region
          %525 = dma.done [#allocation15], 1024
        $region108: #{tpu_custom_call.1} parent=71 // pred_fallthru
          _
        %s526 = sand.u32 %s42, 1
        %s527 = scalar_lea.sflag [#allocation3], %s526
        %s528 = sand.u32 %s42, 1
        %s529 = smul.addr %s528, 8
        %s530 = scalar_lea.vmem [#allocation2], %s529
        %p531 = pneg %p55
        %p532 = pneg %p52
        %p533 = pneg %p76
        %p534 = pneg %p73
        %p535 = pneg %p97
        %p536 = pneg %p94
        %p537 = pneg %p118
        %p538 = pneg %p115
        %p539 = pneg %p139
        %p540 = pneg %p136
        %p541 = pneg %p160
        %p542 = pneg %p157
        %p543 = pneg %p181
        %p544 = pneg %p178
        %p545 = pneg %p202
        %p546 = pneg %p199
        %p547 = pneg %p223
        %p548 = pneg %p220
        %p549 = pneg %p244
        %p550 = pneg %p241
        %p551 = pneg %p265
        %p552 = pneg %p262
        %p553 = pneg %p286
        %p554 = pneg %p283
        %p555 = pneg %p307
        %p556 = pneg %p304
        %p557 = pneg %p333
        %p558 = pneg %p330
        %s559 = sand.u32 %s320, 1
        %s560 = scalar_lea.sflag [#allocation4], %s559
        %s561 = sand.u32 %s320, 1
        %s562 = smul.addr %s561, 8
        %s563 = scalar_lea.vmem [#allocation17], %s562
        %v564 = vld [vmem:[%s489] sm:$0xff]
        %vm565 = vcmask 261120
        %v566 = vsel %vm565, %v564, 0.0
        %567 = vadd.xlane.f32.xlu0 %v566
        %v568 = vpop.xlane.xlu0 %567
        %v569 = vrcp.pop 32.0
        %v570 = vmul.f32 %v568, %v569
        %v571 = vsub.f32 %v564, %v570
        %v572 = vmul.f32 %v571, %v571
        %v573 = vsel %vm565, %v572, 0.0
        %574 = vadd.xlane.f32.xlu0 %v573
        %v575 = vpop.xlane.xlu0 %574
        %v576 = vmul.f32 %v575, %v569
        %v577 = vadd.f32 %v576, 1e-05
        %v578 = vrsqrt.pop %v577
        %v579 = vmul.f32 %v571, %v578
        %v580 = vld [vmem:[%s1] sm:$0x1]
        %v582 = vlaneseq
        %v583 = vshrl.u32 %v582, 7
        %v584 = vsub.s32 0, %v583
        %v585 = vrot.slane %v580, %v584
        %v587 = vmul.f32 %v579, %v585
        %v588 = vld [vmem:[#allocation5] sm:$0x1]
        %v590 = vlaneseq
        %v591 = vshrl.u32 %v590, 7
        %v592 = vsub.s32 0, %v591
        %v593 = vrot.slane %v588, %v592
        %v595 = vadd.f32 %v587, %v593
        %v596 = vld [vmem:[#allocation7] sm:$0xff]
        %v597 = vld [vmem:[#allocation7 + $0x8] sm:$0xff]
        %v598 = vld [vmem:[#allocation7 + $0x10] sm:$0xff]
        %v599 = vld [vmem:[#allocation7 + $0x18] sm:$0xff]
        %v600 = vld [vmem:[#allocation8] sm:$0x1]
        %v602 = vlaneseq
        %v603 = vshrl.u32 %v602, 7
        %v604 = vsub.s32 0, %v603
        %v605 = vrot.slane %v600, %v604
        %v608 = vsel %vm565, %v595, 0
        %610 = vmatprep.subr.mxu0 0.0
        %611 = vmatpush1.msra.mxu0 %v596
        %612 = vmatprep.subr.mxu0 0.0
        %613 = vmatpush1.msra.mxu0 %v597
        %614 = vmatprep.subr.mxu0 0.0
        %615 = vmatpush1.msra.mxu0 %v598
        %616 = vmatprep.subr.mxu0 0.0
        %617 = vmatpush1.msra.mxu0 %v599
        %618 = vmatprep.subr.mxu0 0.0
        %619 = vmatpush1.msra.mxu0 0.0
        %620 = vmatprep.subr.mxu0 0.0
        %621 = vmatpush1.msra.mxu0 0.0
        %622 = vmatprep.subr.mxu0 0.0
        %623 = vmatpush1.msra.mxu0 0.0
        %624 = vmatprep.subr.mxu0 0.0
        %625 = vmatpush1.msra.mxu0 0.0
        %626 = vmatprep.subr.mxu0 0.0
        %627 = vmatpush1.msra.mxu0 0.0
        %628 = vmatprep.subr.mxu0 0.0
        %629 = vmatpush1.msra.mxu0 0.0
        %630 = vmatprep.subr.mxu0 0.0
        %631 = vmatpush1.msra.mxu0 0.0
        %632 = vmatprep.subr.mxu0 0.0
        %633 = vmatpush1.msra.mxu0 0.0
        %634 = vmatprep.subr.mxu0 0.0
        %635 = vmatpush1.msra.mxu0 0.0
        %636 = vmatprep.subr.mxu0 0.0
        %637 = vmatpush1.msra.mxu0 0.0
        %638 = vmatprep.subr.mxu0 0.0
        %639 = vmatpush1.msra.mxu0 0.0
        %640 = vmatprep.subr.mxu0 0.0
        %641 = vmatpush1.msra.mxu0 0.0
        %642 = vmatprep.subr.mxu0 0.0
        %643 = vmatpush1.msra.mxu0 0.0
        %644 = vmatprep.subr.mxu0 0.0
        %645 = vmatpush1.msra.mxu0 0.0
        %646 = vmatprep.subr.mxu0 0.0
        %647 = vmatpush1.msra.mxu0 0.0
        %648 = vmatprep.subr.mxu0 0.0
        %649 = vmatpush1.msra.mxu0 0.0
        %650 = vmatprep.subr.mxu0 0.0
        %651 = vmatpush1.msra.mxu0 0.0
        %652 = vmatprep.subr.mxu0 0.0
        %653 = vmatpush1.msra.mxu0 0.0
        %654 = vmatprep.subr.mxu0 0.0
        %655 = vmatpush1.msra.mxu0 0.0
        %656 = vmatprep.subr.mxu0 0.0
        %657 = vmatpush1.msra.mxu0 0.0
        %658 = vmatprep.subr.mxu0 0.0
        %659 = vmatpush1.msra.mxu0 0.0
        %660 = vmatprep.subr.mxu0 0.0
        %661 = vmatpush1.msra.mxu0 0.0
        %662 = vmatprep.subr.mxu0 0.0
        %663 = vmatpush1.msra.mxu0 0.0
        %664 = vmatprep.subr.mxu0 0.0
        %665 = vmatpush1.msra.mxu0 0.0
        %666 = vmatprep.subr.mxu0 0.0
        %667 = vmatpush1.msra.mxu0 0.0
        %668 = vmatprep.subr.mxu0 0.0
        %669 = vmatpush1.msra.mxu0 0.0
        %670 = vmatprep.subr.mxu0 0.0
        %671 = vmatpush1.msra.mxu0 0.0
        %672 = vmatprep.subr.mxu0 0.0
        %673 = vmatpush1.msra.mxu0 0.0
        %674 = vmatprep.mubr.f32.mxu0 0.0
        %675 = vmatmul.mubr.f32.gmra.mrb[0].mxu0 %v608
        %v676 = vpop.f32.mrb[0].mxu0
        %v677 = vadd.f32 %v605, %v676
        %v678 = vpop.f32.mrb[0].mxu0
        %679 = vdwg.mxu0
        %v680 = vld [vmem:[%s6] sm:$0xff]
        %v681 = vld [vmem:[#allocation10] sm:$0xff]
        %v682 = vld [vmem:[#allocation10 + $0x8] sm:$0xff]
        %v683 = vld [vmem:[#allocation10 + $0x10] sm:$0xff]
        %v684 = vld [vmem:[#allocation10 + $0x18] sm:$0xff]
        %v686 = vsel %vm565, %v680, 0
        %688 = vmatprep.subr.mxu0 0.0
        %689 = vmatpush1.msra.mxu0 %v681
        %690 = vmatprep.subr.mxu0 0.0
        %691 = vmatpush1.msra.mxu0 %v682
        %692 = vmatprep.subr.mxu0 0.0
        %693 = vmatpush1.msra.mxu0 %v683
        %694 = vmatprep.subr.mxu0 0.0
        %695 = vmatpush1.msra.mxu0 %v684
        %696 = vmatprep.subr.mxu0 0.0
        %697 = vmatpush1.msra.mxu0 0.0
        %698 = vmatprep.subr.mxu0 0.0
        %699 = vmatpush1.msra.mxu0 0.0
        %700 = vmatprep.subr.mxu0 0.0
        %701 = vmatpush1.msra.mxu0 0.0
        %702 = vmatprep.subr.mxu0 0.0
        %703 = vmatpush1.msra.mxu0 0.0
        %704 = vmatprep.subr.mxu0 0.0
        %705 = vmatpush1.msra.mxu0 0.0
        %706 = vmatprep.subr.mxu0 0.0
        %707 = vmatpush1.msra.mxu0 0.0
        %708 = vmatprep.subr.mxu0 0.0
        %709 = vmatpush1.msra.mxu0 0.0
        %710 = vmatprep.subr.mxu0 0.0
        %711 = vmatpush1.msra.mxu0 0.0
        %712 = vmatprep.subr.mxu0 0.0
        %713 = vmatpush1.msra.mxu0 0.0
        %714 = vmatprep.subr.mxu0 0.0
        %715 = vmatpush1.msra.mxu0 0.0
        %716 = vmatprep.subr.mxu0 0.0
        %717 = vmatpush1.msra.mxu0 0.0
        %718 = vmatprep.subr.mxu0 0.0
        %719 = vmatpush1.msra.mxu0 0.0
        %720 = vmatprep.subr.mxu0 0.0
        %721 = vmatpush1.msra.mxu0 0.0
        %722 = vmatprep.subr.mxu0 0.0
        %723 = vmatpush1.msra.mxu0 0.0
        %724 = vmatprep.subr.mxu0 0.0
        %725 = vmatpush1.msra.mxu0 0.0
        %726 = vmatprep.subr.mxu0 0.0
        %727 = vmatpush1.msra.mxu0 0.0
        %728 = vmatprep.subr.mxu0 0.0
        %729 = vmatpush1.msra.mxu0 0.0
        %730 = vmatprep.subr.mxu0 0.0
        %731 = vmatpush1.msra.mxu0 0.0
        %732 = vmatprep.subr.mxu0 0.0
        %733 = vmatpush1.msra.mxu0 0.0
        %734 = vmatprep.subr.mxu0 0.0
        %735 = vmatpush1.msra.mxu0 0.0
        %736 = vmatprep.subr.mxu0 0.0
        %737 = vmatpush1.msra.mxu0 0.0
        %738 = vmatprep.subr.mxu0 0.0
        %739 = vmatpush1.msra.mxu0 0.0
        %740 = vmatprep.subr.mxu0 0.0
        %741 = vmatpush1.msra.mxu0 0.0
        %742 = vmatprep.subr.mxu0 0.0
        %743 = vmatpush1.msra.mxu0 0.0
        %744 = vmatprep.subr.mxu0 0.0
        %745 = vmatpush1.msra.mxu0 0.0
        %746 = vmatprep.subr.mxu0 0.0
        %747 = vmatpush1.msra.mxu0 0.0
        %748 = vmatprep.subr.mxu0 0.0
        %749 = vmatpush1.msra.mxu0 0.0
        %750 = vmatprep.subr.mxu0 0.0
        %751 = vmatpush1.msra.mxu0 0.0
        %752 = vmatprep.mubr.f32.mxu0 0.0
        %753 = vmatmul.mubr.f32.gmra.mrb[0].mxu0 %v686
        %v754 = vpop.f32.mrb[0].mxu0
        %v755 = vadd.f32 0.0, %v754
        %v756 = vpop.f32.mrb[0].mxu0
        %757 = vdwg.mxu0
        %v758 = vld [vmem:[#allocation11] sm:$0x1]
        %v760 = vlaneseq
        %v761 = vshrl.u32 %v760, 7
        %v762 = vsub.s32 0, %v761
        %v763 = vrot.slane %v758, %v762
        %v765 = vadd.f32 %v677, %v763
        %v766 = vmul.f32 %v765, 0.17677669
        %v767 = vld [vmem:[#allocation13] sm:$0x1]
        %v769 = vlaneseq
        %v770 = vshrl.u32 %v769, 7
        %v771 = vsub.s32 0, %v770
        %v772 = vrot.slane %v767, %v771
        %v774 = vadd.f32 %v677, %v772
        %v775 = vmul.f32 %v774, 0.17677669
        %v776 = vld [vmem:[#allocation14] sm:$0xff]
        %v777 = vld [vmem:[#allocation14 + $0x8] sm:$0xff]
        %v778 = vld [vmem:[#allocation14 + $0x10] sm:$0xff]
        %v779 = vld [vmem:[#allocation14 + $0x18] sm:$0xff]
        %v780 = vld [vmem:[#allocation14 + $0x20] sm:$0xff]
        %v781 = vld [vmem:[#allocation14 + $0x28] sm:$0xff]
        %v782 = vld [vmem:[#allocation14 + $0x30] sm:$0xff]
        %v783 = vld [vmem:[#allocation14 + $0x38] sm:$0xff]
        %v784 = vld [vmem:[#allocation16] sm:$0xff]
        %v785 = vld [vmem:[#allocation16 + $0x8] sm:$0xff]
        %v786 = vld [vmem:[#allocation16 + $0x10] sm:$0xff]
        %v787 = vld [vmem:[#allocation16 + $0x18] sm:$0xff]
        %v788 = vld [vmem:[#allocation16 + $0x20] sm:$0xff]
        %v789 = vld [vmem:[#allocation16 + $0x28] sm:$0xff]
        %v790 = vld [vmem:[#allocation16 + $0x30] sm:$0xff]
        %v791 = vld [vmem:[#allocation16 + $0x38] sm:$0xff]
        %v792 = vlaneseq
        %v793 = vshrl.u32 %v792, 7
        %v794 = vlaneseq
        %v795 = vand.u32 %v794, 127
        %v796 = vadd.s32 %v793, 1
        %vm797 = vcmp.eq.s32.totalorder %v795, %v796
        %v798 = vsel %vm797, 1, 0
        %v799 = vcvt.s32.f32 %v798
        %vm800 = vcmask 64512
        %v802 = vsel %vm800, %v775, 0
        %v805 = vsel %vm800, %v755, 0
        %807 = vmatprep.subr.mxu0 0.0
        %808 = vmatpush1.xpose.msra.mxu0 %v805
        %809 = vmatprep.subr.mxu0 0.0
        %810 = vmatpush1.xpose.msra.mxu0 0.0
        %811 = vmatprep.subr.mxu0 0.0
        %812 = vmatpush1.xpose.msra.mxu0 0.0
        %813 = vmatprep.subr.mxu0 0.0
        %814 = vmatpush1.xpose.msra.mxu0 0.0
        %815 = vmatprep.subr.mxu0 0.0
        %816 = vmatpush1.xpose.msra.mxu0 0.0
        %817 = vmatprep.subr.mxu0 0.0
        %818 = vmatpush1.xpose.msra.mxu0 0.0
        %819 = vmatprep.subr.mxu0 0.0
        %820 = vmatpush1.xpose.msra.mxu0 0.0
        %821 = vmatprep.subr.mxu0 0.0
        %822 = vmatpush1.xpose.msra.mxu0 0.0
        %823 = vmatprep.subr.mxu0 0.0
        %824 = vmatpush1.xpose.msra.mxu0 0.0
        %825 = vmatprep.subr.mxu0 0.0
        %826 = vmatpush1.xpose.msra.mxu0 0.0
        %827 = vmatprep.subr.mxu0 0.0
        %828 = vmatpush1.xpose.msra.mxu0 0.0
        %829 = vmatprep.subr.mxu0 0.0
        %830 = vmatpush1.xpose.msra.mxu0 0.0
        %831 = vmatprep.subr.mxu0 0.0
        %832 = vmatpush1.xpose.msra.mxu0 0.0
        %833 = vmatprep.subr.mxu0 0.0
        %834 = vmatpush1.xpose.msra.mxu0 0.0
        %835 = vmatprep.subr.mxu0 0.0
        %836 = vmatpush1.xpose.msra.mxu0 0.0
        %837 = vmatprep.subr.mxu0 0.0
        %838 = vmatpush1.xpose.msra.mxu0 0.0
        %839 = vmatprep.subr.mxu0 0.0
        %840 = vmatpush1.xpose.msra.mxu0 0.0
        %841 = vmatprep.subr.mxu0 0.0
        %842 = vmatpush1.xpose.msra.mxu0 0.0
        %843 = vmatprep.subr.mxu0 0.0
        %844 = vmatpush1.xpose.msra.mxu0 0.0
        %845 = vmatprep.subr.mxu0 0.0
        %846 = vmatpush1.xpose.msra.mxu0 0.0
        %847 = vmatprep.subr.mxu0 0.0
        %848 = vmatpush1.xpose.msra.mxu0 0.0
        %849 = vmatprep.subr.mxu0 0.0
        %850 = vmatpush1.xpose.msra.mxu0 0.0
        %851 = vmatprep.subr.mxu0 0.0
        %852 = vmatpush1.xpose.msra.mxu0 0.0
        %853 = vmatprep.subr.mxu0 0.0
        %854 = vmatpush1.xpose.msra.mxu0 0.0
        %855 = vmatprep.subr.mxu0 0.0
        %856 = vmatpush1.xpose.msra.mxu0 0.0
        %857 = vmatprep.subr.mxu0 0.0
        %858 = vmatpush1.xpose.msra.mxu0 0.0
        %859 = vmatprep.subr.mxu0 0.0
        %860 = vmatpush1.xpose.msra.mxu0 0.0
        %861 = vmatprep.subr.mxu0 0.0
        %862 = vmatpush1.xpose.msra.mxu0 0.0
        %863 = vmatprep.subr.mxu0 0.0
        %864 = vmatpush1.xpose.msra.mxu0 0.0
        %865 = vmatprep.subr.mxu0 0.0
        %866 = vmatpush1.xpose.msra.mxu0 0.0
        %867 = vmatprep.subr.mxu0 0.0
        %868 = vmatpush1.xpose.msra.mxu0 0.0
        %869 = vmatprep.subr.mxu0 0.0
        %870 = vmatpush1.xpose.msra.mxu0 0.0
        %871 = vmatprep.mubr.f32.mxu0 0.0
        %872 = vmatmul.mubr.f32.gmra.mrb[0].mxu0 %v802
        %v873 = vpop.f32.mrb[0].mxu0
        %v874 = vadd.f32 0.0, %v873
        %v875 = vpop.f32.mrb[0].mxu0
        %876 = vdwg.mxu0
        %v878 = vsel %vm800, %v799, 0
        %880 = vmatprep.subr.mxu0 0.0
        %881 = vmatpush1.msra.mxu0 %v874
        %882 = vmatprep.subr.mxu0 0.0
        %883 = vmatpush1.msra.mxu0 0.0
        %884 = vmatprep.subr.mxu0 0.0
        %885 = vmatpush1.msra.mxu0 0.0
        %886 = vmatprep.subr.mxu0 0.0
        %887 = vmatpush1.msra.mxu0 0.0
        %888 = vmatprep.subr.mxu0 0.0
        %889 = vmatpush1.msra.mxu0 0.0
        %890 = vmatprep.subr.mxu0 0.0
        %891 = vmatpush1.msra.mxu0 0.0
        %892 = vmatprep.subr.mxu0 0.0
        %893 = vmatpush1.msra.mxu0 0.0
        %894 = vmatprep.subr.mxu0 0.0
        %895 = vmatpush1.msra.mxu0 0.0
        %896 = vmatprep.subr.mxu0 0.0
        %897 = vmatpush1.msra.mxu0 0.0
        %898 = vmatprep.subr.mxu0 0.0
        %899 = vmatpush1.msra.mxu0 0.0
        %900 = vmatprep.subr.mxu0 0.0
        %901 = vmatpush1.msra.mxu0 0.0
        %902 = vmatprep.subr.mxu0 0.0
        %903 = vmatpush1.msra.mxu0 0.0
        %904 = vmatprep.subr.mxu0 0.0
        %905 = vmatpush1.msra.mxu0 0.0
        %906 = vmatprep.subr.mxu0 0.0
        %907 = vmatpush1.msra.mxu0 0.0
        %908 = vmatprep.subr.mxu0 0.0
        %909 = vmatpush1.msra.mxu0 0.0
        %910 = vmatprep.subr.mxu0 0.0
        %911 = vmatpush1.msra.mxu0 0.0
        %912 = vmatprep.subr.mxu0 0.0
        %913 = vmatpush1.msra.mxu0 0.0
        %914 = vmatprep.subr.mxu0 0.0
        %915 = vmatpush1.msra.mxu0 0.0
        %916 = vmatprep.subr.mxu0 0.0
        %917 = vmatpush1.msra.mxu0 0.0
        %918 = vmatprep.subr.mxu0 0.0
        %919 = vmatpush1.msra.mxu0 0.0
        %920 = vmatprep.subr.mxu0 0.0
        %921 = vmatpush1.msra.mxu0 0.0
        %922 = vmatprep.subr.mxu0 0.0
        %923 = vmatpush1.msra.mxu0 0.0
        %924 = vmatprep.subr.mxu0 0.0
        %925 = vmatpush1.msra.mxu0 0.0
        %926 = vmatprep.subr.mxu0 0.0
        %927 = vmatpush1.msra.mxu0 0.0
        %928 = vmatprep.subr.mxu0 0.0
        %929 = vmatpush1.msra.mxu0 0.0
        %930 = vmatprep.subr.mxu0 0.0
        %931 = vmatpush1.msra.mxu0 0.0
        %932 = vmatprep.subr.mxu0 0.0
        %933 = vmatpush1.msra.mxu0 0.0
        %934 = vmatprep.subr.mxu0 0.0
        %935 = vmatpush1.msra.mxu0 0.0
        %936 = vmatprep.subr.mxu0 0.0
        %937 = vmatpush1.msra.mxu0 0.0
        %938 = vmatprep.subr.mxu0 0.0
        %939 = vmatpush1.msra.mxu0 0.0
        %940 = vmatprep.subr.mxu0 0.0
        %941 = vmatpush1.msra.mxu0 0.0
        %942 = vmatprep.subr.mxu0 0.0
        %943 = vmatpush1.msra.mxu0 0.0
        %944 = vmatprep.mubr.f32.mxu0 0.0
        %945 = vmatmul.mubr.f32.gmra.mrb[0].mxu0 %v878
        %v946 = vpop.f32.mrb[0].mxu0
        %v947 = vadd.f32 0.0, %v946
        %v948 = vpop.f32.mrb[0].mxu0
        %949 = vdwg.mxu0
        %v951 = vcombine.high %v874, %v874
        %v953 = vunpack.c.l.s4 1966171168
        %v954 = vunpack.c.0.s8 %v953
        %v955 = vlaneseq
        %v956 = vshrl.u32 %v955, 7
        %v957 = vsub.s32 %v954, %v956
        %v958 = vrot.slane %v874, %v957
        %v960 = vunpack.c.l.s4 1966171168
        %v961 = vunpack.c.0.s8 %v960
        %v962 = vlaneseq
        %v963 = vshrl.u32 %v962, 7
        %v964 = vsub.s32 %v961, %v963
        %v965 = vrot.slane %v951, %v964
        %v966 = vcombine.high %v958, %v958
        %v967 = vcombine.high %v965, %v965
        %v969 = vunpack.c.l.s4 1966171168
        %v970 = vunpack.c.0.s8 %v969
        %v971 = vlaneseq
        %v972 = vshrl.u32 %v971, 7
        %v973 = vsub.s32 %v970, %v972
        %v974 = vrot.slane %v958, %v973
        %v976 = vunpack.c.l.s4 1966171168
        %v977 = vunpack.c.0.s8 %v976
        %v978 = vlaneseq
        %v979 = vshrl.u32 %v978, 7
        %v980 = vsub.s32 %v977, %v979
        %v981 = vrot.slane %v965, %v980
        %v983 = vunpack.c.l.s4 1966171168
        %v984 = vunpack.c.0.s8 %v983
        %v985 = vlaneseq
        %v986 = vshrl.u32 %v985, 7
        %v987 = vsub.s32 %v984, %v986
        %v988 = vrot.slane %v966, %v987
        %v990 = vunpack.c.l.s4 1966171168
        %v991 = vunpack.c.0.s8 %v990
        %v992 = vlaneseq
        %v993 = vshrl.u32 %v992, 7
        %v994 = vsub.s32 %v991, %v993
        %v995 = vrot.slane %v967, %v994
        %v996 = vcombine.high %v974, %v974
        %v997 = vcombine.high %v981, %v981
        %v998 = vcombine.high %v988, %v988
        %v999 = vcombine.high %v995, %v995
        %v1000 = vlaneseq
        %v1001 = vshrl.u32 %v1000, 7
        %v1002 = vsub.s32 0, %v1001
        %v1003 = vrot.slane %v974, %v1002
        %v1004 = vlaneseq
        %v1005 = vshrl.u32 %v1004, 7
        %v1006 = vsub.s32 0, %v1005
        %v1007 = vrot.slane %v988, %v1006
        %v1008 = vlaneseq
        %v1009 = vshrl.u32 %v1008, 7
        %v1010 = vsub.s32 0, %v1009
        %v1011 = vrot.slane %v996, %v1010
        %v1012 = vlaneseq
        %v1013 = vshrl.u32 %v1012, 7
        %v1014 = vsub.s32 0, %v1013
        %v1015 = vrot.slane %v998, %v1014
        %v1016 = vlaneseq
        %v1017 = vshrl.u32 %v1016, 7
        %v1018 = vsub.s32 0, %v1017
        %v1019 = vrot.slane %v981, %v1018
        %v1020 = vlaneseq
        %v1021 = vshrl.u32 %v1020, 7
        %v1022 = vsub.s32 0, %v1021
        %v1023 = vrot.slane %v995, %v1022
        %v1024 = vlaneseq
        %v1025 = vshrl.u32 %v1024, 7
        %v1026 = vsub.s32 0, %v1025
        %v1027 = vrot.slane %v997, %v1026
        %v1028 = vlaneseq
        %v1029 = vshrl.u32 %v1028, 7
        %v1030 = vsub.s32 0, %v1029
        %v1031 = vrot.slane %v999, %v1030
        %v1040 = vmul.f32 %v1003, %v776
        %v1041 = vmul.f32 %v1007, %v777
        %v1042 = vmul.f32 %v1011, %v778
        %v1043 = vmul.f32 %v1015, %v779
        %v1044 = vmul.f32 %v1019, %v780
        %v1045 = vmul.f32 %v1023, %v781
        %v1046 = vmul.f32 %v1027, %v782
        %v1047 = vmul.f32 %v1031, %v783
        %v1048 = vsel %vm800, %v1040, 0.0
        %1049 = vadd.xlane.f32.xlu0 %v1048
        %v1050 = vpop.xlane.xlu0 %1049
        %v1051 = vsel %vm800, %v1041, 0.0
        %1052 = vadd.xlane.f32.xlu0 %v1051
        %v1053 = vpop.xlane.xlu0 %1052
        %v1054 = vsel %vm800, %v1042, 0.0
        %1055 = vadd.xlane.f32.xlu0 %v1054
        %v1056 = vpop.xlane.xlu0 %1055
        %v1057 = vsel %vm800, %v1043, 0.0
        %1058 = vadd.xlane.f32.xlu0 %v1057
        %v1059 = vpop.xlane.xlu0 %1058
        %v1060 = vsel %vm800, %v1044, 0.0
        %1061 = vadd.xlane.f32.xlu0 %v1060
        %v1062 = vpop.xlane.xlu0 %1061
        %v1063 = vsel %vm800, %v1045, 0.0
        %1064 = vadd.xlane.f32.xlu0 %v1063
        %v1065 = vpop.xlane.xlu0 %1064
        %v1066 = vsel %vm800, %v1046, 0.0
        %1067 = vadd.xlane.f32.xlu0 %v1066
        %v1068 = vpop.xlane.xlu0 %1067
        %v1069 = vsel %vm800, %v1047, 0.0
        %1070 = vadd.xlane.f32.xlu0 %v1069
        %v1071 = vpop.xlane.xlu0 %1070
        %v1073 = vcombine.high %v947, %v947
        %v1075 = vunpack.c.l.s4 1966171168
        %v1076 = vunpack.c.0.s8 %v1075
        %v1077 = vlaneseq
        %v1078 = vshrl.u32 %v1077, 7
        %v1079 = vsub.s32 %v1076, %v1078
        %v1080 = vrot.slane %v947, %v1079
        %v1082 = vunpack.c.l.s4 1966171168
        %v1083 = vunpack.c.0.s8 %v1082
        %v1084 = vlaneseq
        %v1085 = vshrl.u32 %v1084, 7
        %v1086 = vsub.s32 %v1083, %v1085
        %v1087 = vrot.slane %v1073, %v1086
        %v1088 = vcombine.high %v1080, %v1080
        %v1089 = vcombine.high %v1087, %v1087
        %v1091 = vunpack.c.l.s4 1966171168
        %v1092 = vunpack.c.0.s8 %v1091
        %v1093 = vlaneseq
        %v1094 = vshrl.u32 %v1093, 7
        %v1095 = vsub.s32 %v1092, %v1094
        %v1096 = vrot.slane %v1080, %v1095
        %v1098 = vunpack.c.l.s4 1966171168
        %v1099 = vunpack.c.0.s8 %v1098
        %v1100 = vlaneseq
        %v1101 = vshrl.u32 %v1100, 7
        %v1102 = vsub.s32 %v1099, %v1101
        %v1103 = vrot.slane %v1087, %v1102
        %v1105 = vunpack.c.l.s4 1966171168
        %v1106 = vunpack.c.0.s8 %v1105
        %v1107 = vlaneseq
        %v1108 = vshrl.u32 %v1107, 7
        %v1109 = vsub.s32 %v1106, %v1108
        %v1110 = vrot.slane %v1088, %v1109
        %v1112 = vunpack.c.l.s4 1966171168
        %v1113 = vunpack.c.0.s8 %v1112
        %v1114 = vlaneseq
        %v1115 = vshrl.u32 %v1114, 7
        %v1116 = vsub.s32 %v1113, %v1115
        %v1117 = vrot.slane %v1089, %v1116
        %v1118 = vcombine.high %v1096, %v1096
        %v1119 = vcombine.high %v1103, %v1103
        %v1120 = vcombine.high %v1110, %v1110
        %v1121 = vcombine.high %v1117, %v1117
        %v1122 = vlaneseq
        %v1123 = vshrl.u32 %v1122, 7
        %v1124 = vsub.s32 0, %v1123
        %v1125 = vrot.slane %v1096, %v1124
        %v1126 = vlaneseq
        %v1127 = vshrl.u32 %v1126, 7
        %v1128 = vsub.s32 0, %v1127
        %v1129 = vrot.slane %v1110, %v1128
        %v1130 = vlaneseq
        %v1131 = vshrl.u32 %v1130, 7
        %v1132 = vsub.s32 0, %v1131
        %v1133 = vrot.slane %v1118, %v1132
        %v1134 = vlaneseq
        %v1135 = vshrl.u32 %v1134, 7
        %v1136 = vsub.s32 0, %v1135
        %v1137 = vrot.slane %v1120, %v1136
        %v1138 = vlaneseq
        %v1139 = vshrl.u32 %v1138, 7
        %v1140 = vsub.s32 0, %v1139
        %v1141 = vrot.slane %v1103, %v1140
        %v1142 = vlaneseq
        %v1143 = vshrl.u32 %v1142, 7
        %v1144 = vsub.s32 0, %v1143
        %v1145 = vrot.slane %v1117, %v1144
        %v1146 = vlaneseq
        %v1147 = vshrl.u32 %v1146, 7
        %v1148 = vsub.s32 0, %v1147
        %v1149 = vrot.slane %v1119, %v1148
        %v1150 = vlaneseq
        %v1151 = vshrl.u32 %v1150, 7
        %v1152 = vsub.s32 0, %v1151
        %v1153 = vrot.slane %v1121, %v1152
        %v1162 = vmul.f32 %v1125, %v784
        %v1163 = vmul.f32 %v1129, %v785
        %v1164 = vmul.f32 %v1133, %v786
        %v1165 = vmul.f32 %v1137, %v787
        %v1166 = vmul.f32 %v1141, %v788
        %v1167 = vmul.f32 %v1145, %v789
        %v1168 = vmul.f32 %v1149, %v790
        %v1169 = vmul.f32 %v1153, %v791
        %v1170 = vsel %vm800, %v1162, 0.0
        %1171 = vadd.xlane.f32.xlu0 %v1170
        %v1172 = vpop.xlane.xlu0 %1171
        %v1173 = vsel %vm800, %v1163, 0.0
        %1174 = vadd.xlane.f32.xlu0 %v1173
        %v1175 = vpop.xlane.xlu0 %1174
        %v1176 = vsel %vm800, %v1164, 0.0
        %1177 = vadd.xlane.f32.xlu0 %v1176
        %v1178 = vpop.xlane.xlu0 %1177
        %v1179 = vsel %vm800, %v1165, 0.0
        %1180 = vadd.xlane.f32.xlu0 %v1179
        %v1181 = vpop.xlane.xlu0 %1180
        %v1182 = vsel %vm800, %v1166, 0.0
        %1183 = vadd.xlane.f32.xlu0 %v1182
        %v1184 = vpop.xlane.xlu0 %1183
        %v1185 = vsel %vm800, %v1167, 0.0
        %1186 = vadd.xlane.f32.xlu0 %v1185
        %v1187 = vpop.xlane.xlu0 %1186
        %v1188 = vsel %vm800, %v1168, 0.0
        %1189 = vadd.xlane.f32.xlu0 %v1188
        %v1190 = vpop.xlane.xlu0 %1189
        %v1191 = vsel %vm800, %v1169, 0.0
        %1192 = vadd.xlane.f32.xlu0 %v1191
        %v1193 = vpop.xlane.xlu0 %1192
        %v1194 = vadd.f32 %v1050, %v1172
        %v1195 = vadd.f32 %v1053, %v1175
        %v1196 = vadd.f32 %v1056, %v1178
        %v1197 = vadd.f32 %v1059, %v1181
        %v1198 = vadd.f32 %v1062, %v1184
        %v1199 = vadd.f32 %v1065, %v1187
        %v1200 = vadd.f32 %v1068, %v1190
        %v1201 = vadd.f32 %v1071, %v1193
        %v1210 = vlaneseq
        %v1211 = vshrl.u32 %v1210, 7
        %v1212 = vsub.s32 %v795, %v1211
        %v1213 = vrot.slane %v1194, %v1212
        %v1214 = vlaneseq
        %v1215 = vshrl.u32 %v1214, 7
        %v1216 = vsub.s32 %v795, %v1215
        %v1217 = vrot.slane %v1195, %v1216
        %v1218 = vlaneseq
        %v1219 = vshrl.u32 %v1218, 7
        %v1220 = vsub.s32 %v795, %v1219
        %v1221 = vrot.slane %v1196, %v1220
        %v1222 = vlaneseq
        %v1223 = vshrl.u32 %v1222, 7
        %v1224 = vsub.s32 %v795, %v1223
        %v1225 = vrot.slane %v1197, %v1224
        %v1226 = vlaneseq
        %v1227 = vshrl.u32 %v1226, 7
        %v1228 = vsub.s32 %v795, %v1227
        %v1229 = vrot.slane %v1198, %v1228
        %v1230 = vlaneseq
        %v1231 = vshrl.u32 %v1230, 7
        %v1232 = vsub.s32 %v795, %v1231
        %v1233 = vrot.slane %v1199, %v1232
        %v1234 = vlaneseq
        %v1235 = vshrl.u32 %v1234, 7
        %v1236 = vsub.s32 %v795, %v1235
        %v1237 = vrot.slane %v1200, %v1236
        %v1238 = vlaneseq
        %v1239 = vshrl.u32 %v1238, 7
        %v1240 = vsub.s32 %v795, %v1239
        %v1241 = vrot.slane %v1201, %v1240
        %vm1242 = vcmask 1041409
        %v1243 = vsel %vm1242, %v1217, %v1213
        %vm1244 = vcmask 1042434
        %v1245 = vsel %vm1244, %v1221, %v1243
        %vm1246 = vcmask 1043459
        %v1247 = vsel %vm1246, %v1225, %v1245
        %vm1248 = vcmask 1044484
        %v1249 = vsel %vm1248, %v1229, %v1247
        %vm1250 = vcmask 1045509
        %v1251 = vsel %vm1250, %v1233, %v1249
        %vm1252 = vcmask 1046534
        %v1253 = vsel %vm1252, %v1237, %v1251
        %vm1254 = vcmask 1047559
        %v1255 = vsel %vm1254, %v1241, %v1253
        %v1258 = vsel %vm800, %v766, 0
        %v1261 = vsel %vm800, %v677, 0
        %1263 = vmatprep.subr.mxu0 0.0
        %1264 = vmatpush1.xpose.msra.mxu0 %v1261
        %1265 = vmatprep.subr.mxu0 0.0
        %1266 = vmatpush1.xpose.msra.mxu0 0.0
        %1267 = vmatprep.subr.mxu0 0.0
        %1268 = vmatpush1.xpose.msra.mxu0 0.0
        %1269 = vmatprep.subr.mxu0 0.0
        %1270 = vmatpush1.xpose.msra.mxu0 0.0
        %1271 = vmatprep.subr.mxu0 0.0
        %1272 = vmatpush1.xpose.msra.mxu0 0.0
        %1273 = vmatprep.subr.mxu0 0.0
        %1274 = vmatpush1.xpose.msra.mxu0 0.0
        %1275 = vmatprep.subr.mxu0 0.0
        %1276 = vmatpush1.xpose.msra.mxu0 0.0
        %1277 = vmatprep.subr.mxu0 0.0
        %1278 = vmatpush1.xpose.msra.mxu0 0.0
        %1279 = vmatprep.subr.mxu0 0.0
        %1280 = vmatpush1.xpose.msra.mxu0 0.0
        %1281 = vmatprep.subr.mxu0 0.0
        %1282 = vmatpush1.xpose.msra.mxu0 0.0
        %1283 = vmatprep.subr.mxu0 0.0
        %1284 = vmatpush1.xpose.msra.mxu0 0.0
        %1285 = vmatprep.subr.mxu0 0.0
        %1286 = vmatpush1.xpose.msra.mxu0 0.0
        %1287 = vmatprep.subr.mxu0 0.0
        %1288 = vmatpush1.xpose.msra.mxu0 0.0
        %1289 = vmatprep.subr.mxu0 0.0
        %1290 = vmatpush1.xpose.msra.mxu0 0.0
        %1291 = vmatprep.subr.mxu0 0.0
        %1292 = vmatpush1.xpose.msra.mxu0 0.0
        %1293 = vmatprep.subr.mxu0 0.0
        %1294 = vmatpush1.xpose.msra.mxu0 0.0
        %1295 = vmatprep.subr.mxu0 0.0
        %1296 = vmatpush1.xpose.msra.mxu0 0.0
        %1297 = vmatprep.subr.mxu0 0.0
        %1298 = vmatpush1.xpose.msra.mxu0 0.0
        %1299 = vmatprep.subr.mxu0 0.0
        %1300 = vmatpush1.xpose.msra.mxu0 0.0
        %1301 = vmatprep.subr.mxu0 0.0
        %1302 = vmatpush1.xpose.msra.mxu0 0.0
        %1303 = vmatprep.subr.mxu0 0.0
        %1304 = vmatpush1.xpose.msra.mxu0 0.0
        %1305 = vmatprep.subr.mxu0 0.0
        %1306 = vmatpush1.xpose.msra.mxu0 0.0
        %1307 = vmatprep.subr.mxu0 0.0
        %1308 = vmatpush1.xpose.msra.mxu0 0.0
        %1309 = vmatprep.subr.mxu0 0.0
        %1310 = vmatpush1.xpose.msra.mxu0 0.0
        %1311 = vmatprep.subr.mxu0 0.0
        %1312 = vmatpush1.xpose.msra.mxu0 0.0
        %1313 = vmatprep.subr.mxu0 0.0
        %1314 = vmatpush1.xpose.msra.mxu0 0.0
        %1315 = vmatprep.subr.mxu0 0.0
        %1316 = vmatpush1.xpose.msra.mxu0 0.0
        %1317 = vmatprep.subr.mxu0 0.0
        %1318 = vmatpush1.xpose.msra.mxu0 0.0
        %1319 = vmatprep.subr.mxu0 0.0
        %1320 = vmatpush1.xpose.msra.mxu0 0.0
        %1321 = vmatprep.subr.mxu0 0.0
        %1322 = vmatpush1.xpose.msra.mxu0 0.0
        %1323 = vmatprep.subr.mxu0 0.0
        %1324 = vmatpush1.xpose.msra.mxu0 0.0
        %1325 = vmatprep.subr.mxu0 0.0
        %1326 = vmatpush1.xpose.msra.mxu0 0.0
        %1327 = vmatprep.mubr.f32.mxu0 0.0
        %1328 = vmatmul.mubr.f32.gmra.mrb[0].mxu0 %v1258
        %v1329 = vpop.f32.mrb[0].mxu0
        %v1330 = vadd.f32 %v1255, %v1329
        %v1331 = vpop.f32.mrb[0].mxu0
        %1332 = vdwg.mxu0
        %v1333 = vsel %vm800, %v1330, -inf
        %1334 = vmax.xlane.f32.xlu0 %v1333
        %v1335 = vpop.xlane.xlu0 %1334
        %v1336 = vsub.f32 %v1330, %v1335
        %v1337 = vmul.f32 %v1336, 1.442695
        %v1338 = vpow.pop %v1337
        %v1339 = vsel %vm800, %v1338, 0.0
        %1340 = vadd.xlane.f32.xlu0 %v1339
        %v1341 = vpop.xlane.xlu0 %1340
        %v1342 = vrcp.pop %v1341
        %v1343 = vmul.f32 %v1338, %v1342
        %v1345 = vsel %vm800, %v1343, 0
        %1347 = vmatprep.subr.mxu0 0.0
        %1348 = vmatpush1.msra.mxu0 %v677
        %1349 = vmatprep.subr.mxu0 0.0
        %1350 = vmatpush1.msra.mxu0 0.0
        %1351 = vmatprep.subr.mxu0 0.0
        %1352 = vmatpush1.msra.mxu0 0.0
        %1353 = vmatprep.subr.mxu0 0.0
        %1354 = vmatpush1.msra.mxu0 0.0
        %1355 = vmatprep.subr.mxu0 0.0
        %1356 = vmatpush1.msra.mxu0 0.0
        %1357 = vmatprep.subr.mxu0 0.0
        %1358 = vmatpush1.msra.mxu0 0.0
        %1359 = vmatprep.subr.mxu0 0.0
        %1360 = vmatpush1.msra.mxu0 0.0
        %1361 = vmatprep.subr.mxu0 0.0
        %1362 = vmatpush1.msra.mxu0 0.0
        %1363 = vmatprep.subr.mxu0 0.0
        %1364 = vmatpush1.msra.mxu0 0.0
        %1365 = vmatprep.subr.mxu0 0.0
        %1366 = vmatpush1.msra.mxu0 0.0
        %1367 = vmatprep.subr.mxu0 0.0
        %1368 = vmatpush1.msra.mxu0 0.0
        %1369 = vmatprep.subr.mxu0 0.0
        %1370 = vmatpush1.msra.mxu0 0.0
        %1371 = vmatprep.subr.mxu0 0.0
        %1372 = vmatpush1.msra.mxu0 0.0
        %1373 = vmatprep.subr.mxu0 0.0
        %1374 = vmatpush1.msra.mxu0 0.0
        %1375 = vmatprep.subr.mxu0 0.0
        %1376 = vmatpush1.msra.mxu0 0.0
        %1377 = vmatprep.subr.mxu0 0.0
        %1378 = vmatpush1.msra.mxu0 0.0
        %1379 = vmatprep.subr.mxu0 0.0
        %1380 = vmatpush1.msra.mxu0 0.0
        %1381 = vmatprep.subr.mxu0 0.0
        %1382 = vmatpush1.msra.mxu0 0.0
        %1383 = vmatprep.subr.mxu0 0.0
        %1384 = vmatpush1.msra.mxu0 0.0
        %1385 = vmatprep.subr.mxu0 0.0
        %1386 = vmatpush1.msra.mxu0 0.0
        %1387 = vmatprep.subr.mxu0 0.0
        %1388 = vmatpush1.msra.mxu0 0.0
        %1389 = vmatprep.subr.mxu0 0.0
        %1390 = vmatpush1.msra.mxu0 0.0
        %1391 = vmatprep.subr.mxu0 0.0
        %1392 = vmatpush1.msra.mxu0 0.0
        %1393 = vmatprep.subr.mxu0 0.0
        %1394 = vmatpush1.msra.mxu0 0.0
        %1395 = vmatprep.subr.mxu0 0.0
        %1396 = vmatpush1.msra.mxu0 0.0
        %1397 = vmatprep.subr.mxu0 0.0
        %1398 = vmatpush1.msra.mxu0 0.0
        %1399 = vmatprep.subr.mxu0 0.0
        %1400 = vmatpush1.msra.mxu0 0.0
        %1401 = vmatprep.subr.mxu0 0.0
        %1402 = vmatpush1.msra.mxu0 0.0
        %1403 = vmatprep.subr.mxu0 0.0
        %1404 = vmatpush1.msra.mxu0 0.0
        %1405 = vmatprep.subr.mxu0 0.0
        %1406 = vmatpush1.msra.mxu0 0.0
        %1407 = vmatprep.subr.mxu0 0.0
        %1408 = vmatpush1.msra.mxu0 0.0
        %1409 = vmatprep.subr.mxu0 0.0
        %1410 = vmatpush1.msra.mxu0 0.0
        %1411 = vmatprep.mubr.f32.mxu0 0.0
        %1412 = vmatmul.mubr.f32.gmra.mrb[0].mxu0 %v1345
        %v1413 = vpop.f32.mrb[0].mxu0
        %v1414 = vadd.f32 0.0, %v1413
        %v1415 = vpop.f32.mrb[0].mxu0
        %1416 = vdwg.mxu0
        %v1417 = vld [vmem:[%s11] sm:$0xff]
        %1418 = vrot.lane.b32.xlu0 %v775, 120
        %v1419 = vpop.permute.xlu0 %1418
        %1420 = vrot.lane.b32.xlu0 %v755, 120
        %v1421 = vpop.permute.xlu0 %1420
        %v1422 = vsel %vm800, %v1419, 0
        %v1424 = vsel %vm800, %v1421, 0
        %1426 = vmatprep.subr.mxu0 0.0
        %1427 = vmatpush1.xpose.msra.mxu0 %v1424
        %1428 = vmatprep.subr.mxu0 0.0
        %1429 = vmatpush1.xpose.msra.mxu0 0.0
        %1430 = vmatprep.subr.mxu0 0.0
        %1431 = vmatpush1.xpose.msra.mxu0 0.0
        %1432 = vmatprep.subr.mxu0 0.0
        %1433 = vmatpush1.xpose.msra.mxu0 0.0
        %1434 = vmatprep.subr.mxu0 0.0
        %1435 = vmatpush1.xpose.msra.mxu0 0.0
        %1436 = vmatprep.subr.mxu0 0.0
        %1437 = vmatpush1.xpose.msra.mxu0 0.0
        %1438 = vmatprep.subr.mxu0 0.0
        %1439 = vmatpush1.xpose.msra.mxu0 0.0
        %1440 = vmatprep.subr.mxu0 0.0
        %1441 = vmatpush1.xpose.msra.mxu0 0.0
        %1442 = vmatprep.subr.mxu0 0.0
        %1443 = vmatpush1.xpose.msra.mxu0 0.0
        %1444 = vmatprep.subr.mxu0 0.0
        %1445 = vmatpush1.xpose.msra.mxu0 0.0
        %1446 = vmatprep.subr.mxu0 0.0
        %1447 = vmatpush1.xpose.msra.mxu0 0.0
        %1448 = vmatprep.subr.mxu0 0.0
        %1449 = vmatpush1.xpose.msra.mxu0 0.0
        %1450 = vmatprep.subr.mxu0 0.0
        %1451 = vmatpush1.xpose.msra.mxu0 0.0
        %1452 = vmatprep.subr.mxu0 0.0
        %1453 = vmatpush1.xpose.msra.mxu0 0.0
        %1454 = vmatprep.subr.mxu0 0.0
        %1455 = vmatpush1.xpose.msra.mxu0 0.0
        %1456 = vmatprep.subr.mxu0 0.0
        %1457 = vmatpush1.xpose.msra.mxu0 0.0
        %1458 = vmatprep.subr.mxu0 0.0
        %1459 = vmatpush1.xpose.msra.mxu0 0.0
        %1460 = vmatprep.subr.mxu0 0.0
        %1461 = vmatpush1.xpose.msra.mxu0 0.0
        %1462 = vmatprep.subr.mxu0 0.0
        %1463 = vmatpush1.xpose.msra.mxu0 0.0
        %1464 = vmatprep.subr.mxu0 0.0
        %1465 = vmatpush1.xpose.msra.mxu0 0.0
        %1466 = vmatprep.subr.mxu0 0.0
        %1467 = vmatpush1.xpose.msra.mxu0 0.0
        %1468 = vmatprep.subr.mxu0 0.0
        %1469 = vmatpush1.xpose.msra.mxu0 0.0
        %1470 = vmatprep.subr.mxu0 0.0
        %1471 = vmatpush1.xpose.msra.mxu0 0.0
        %1472 = vmatprep.subr.mxu0 0.0
        %1473 = vmatpush1.xpose.msra.mxu0 0.0
        %1474 = vmatprep.subr.mxu0 0.0
        %1475 = vmatpush1.xpose.msra.mxu0 0.0
        %1476 = vmatprep.subr.mxu0 0.0
        %1477 = vmatpush1.xpose.msra.mxu0 0.0
        %1478 = vmatprep.subr.mxu0 0.0
        %1479 = vmatpush1.xpose.msra.mxu0 0.0
        %1480 = vmatprep.subr.mxu0 0.0
        %1481 = vmatpush1.xpose.msra.mxu0 0.0
        %1482 = vmatprep.subr.mxu0 0.0
        %1483 = vmatpush1.xpose.msra.mxu0 0.0
        %1484 = vmatprep.subr.mxu0 0.0
        %1485 = vmatpush1.xpose.msra.mxu0 0.0
        %1486 = vmatprep.subr.mxu0 0.0
        %1487 = vmatpush1.xpose.msra.mxu0 0.0
        %1488 = vmatprep.subr.mxu0 0.0
        %1489 = vmatpush1.xpose.msra.mxu0 0.0
        %1490 = vmatprep.mubr.f32.mxu0 0.0
        %1491 = vmatmul.mubr.f32.gmra.mrb[0].mxu0 %v1422
        %v1492 = vpop.f32.mrb[0].mxu0
        %v1493 = vadd.f32 0.0, %v1492
        %v1494 = vpop.f32.mrb[0].mxu0
        %1495 = vdwg.mxu0
        %1496 = vmatprep.subr.mxu0 0.0
        %1497 = vmatpush1.msra.mxu0 %v1493
        %1498 = vmatprep.subr.mxu0 0.0
        %1499 = vmatpush1.msra.mxu0 0.0
        %1500 = vmatprep.subr.mxu0 0.0
        %1501 = vmatpush1.msra.mxu0 0.0
        %1502 = vmatprep.subr.mxu0 0.0
        %1503 = vmatpush1.msra.mxu0 0.0
        %1504 = vmatprep.subr.mxu0 0.0
        %1505 = vmatpush1.msra.mxu0 0.0
        %1506 = vmatprep.subr.mxu0 0.0
        %1507 = vmatpush1.msra.mxu0 0.0
        %1508 = vmatprep.subr.mxu0 0.0
        %1509 = vmatpush1.msra.mxu0 0.0
        %1510 = vmatprep.subr.mxu0 0.0
        %1511 = vmatpush1.msra.mxu0 0.0
        %1512 = vmatprep.subr.mxu0 0.0
        %1513 = vmatpush1.msra.mxu0 0.0
        %1514 = vmatprep.subr.mxu0 0.0
        %1515 = vmatpush1.msra.mxu0 0.0
        %1516 = vmatprep.subr.mxu0 0.0
        %1517 = vmatpush1.msra.mxu0 0.0
        %1518 = vmatprep.subr.mxu0 0.0
        %1519 = vmatpush1.msra.mxu0 0.0
        %1520 = vmatprep.subr.mxu0 0.0
        %1521 = vmatpush1.msra.mxu0 0.0
        %1522 = vmatprep.subr.mxu0 0.0
        %1523 = vmatpush1.msra.mxu0 0.0
        %1524 = vmatprep.subr.mxu0 0.0
        %1525 = vmatpush1.msra.mxu0 0.0
        %1526 = vmatprep.subr.mxu0 0.0
        %1527 = vmatpush1.msra.mxu0 0.0
        %1528 = vmatprep.subr.mxu0 0.0
        %1529 = vmatpush1.msra.mxu0 0.0
        %1530 = vmatprep.subr.mxu0 0.0
        %1531 = vmatpush1.msra.mxu0 0.0
        %1532 = vmatprep.subr.mxu0 0.0
        %1533 = vmatpush1.msra.mxu0 0.0
        %1534 = vmatprep.subr.mxu0 0.0
        %1535 = vmatpush1.msra.mxu0 0.0
        %1536 = vmatprep.subr.mxu0 0.0
        %1537 = vmatpush1.msra.mxu0 0.0
        %1538 = vmatprep.subr.mxu0 0.0
        %1539 = vmatpush1.msra.mxu0 0.0
        %1540 = vmatprep.subr.mxu0 0.0
        %1541 = vmatpush1.msra.mxu0 0.0
        %1542 = vmatprep.subr.mxu0 0.0
        %1543 = vmatpush1.msra.mxu0 0.0
        %1544 = vmatprep.subr.mxu0 0.0
        %1545 = vmatpush1.msra.mxu0 0.0
        %1546 = vmatprep.subr.mxu0 0.0
        %1547 = vmatpush1.msra.mxu0 0.0
        %1548 = vmatprep.subr.mxu0 0.0
        %1549 = vmatpush1.msra.mxu0 0.0
        %1550 = vmatprep.subr.mxu0 0.0
        %1551 = vmatpush1.msra.mxu0 0.0
        %1552 = vmatprep.subr.mxu0 0.0
        %1553 = vmatpush1.msra.mxu0 0.0
        %1554 = vmatprep.subr.mxu0 0.0
        %1555 = vmatpush1.msra.mxu0 0.0
        %1556 = vmatprep.subr.mxu0 0.0
        %1557 = vmatpush1.msra.mxu0 0.0
        %1558 = vmatprep.subr.mxu0 0.0
        %1559 = vmatpush1.msra.mxu0 0.0
        %1560 = vmatprep.mubr.f32.mxu0 0.0
        %1561 = vmatmul.mubr.f32.gmra.mrb[0].mxu0 %v878
        %v1562 = vpop.f32.mrb[0].mxu0
        %v1563 = vadd.f32 0.0, %v1562
        %v1564 = vpop.f32.mrb[0].mxu0
        %1565 = vdwg.mxu0
        %v1567 = vcombine.high %v1493, %v1493
        %v1569 = vunpack.c.l.s4 1966171168
        %v1570 = vunpack.c.0.s8 %v1569
        %v1571 = vlaneseq
        %v1572 = vshrl.u32 %v1571, 7
        %v1573 = vsub.s32 %v1570, %v1572
        %v1574 = vrot.slane %v1493, %v1573
        %v1576 = vunpack.c.l.s4 1966171168
        %v1577 = vunpack.c.0.s8 %v1576
        %v1578 = vlaneseq
        %v1579 = vshrl.u32 %v1578, 7
        %v1580 = vsub.s32 %v1577, %v1579
        %v1581 = vrot.slane %v1567, %v1580
        %v1582 = vcombine.high %v1574, %v1574
        %v1583 = vcombine.high %v1581, %v1581
        %v1585 = vunpack.c.l.s4 1966171168
        %v1586 = vunpack.c.0.s8 %v1585
        %v1587 = vlaneseq
        %v1588 = vshrl.u32 %v1587, 7
        %v1589 = vsub.s32 %v1586, %v1588
        %v1590 = vrot.slane %v1574, %v1589
        %v1592 = vunpack.c.l.s4 1966171168
        %v1593 = vunpack.c.0.s8 %v1592
        %v1594 = vlaneseq
        %v1595 = vshrl.u32 %v1594, 7
        %v1596 = vsub.s32 %v1593, %v1595
        %v1597 = vrot.slane %v1581, %v1596
        %v1599 = vunpack.c.l.s4 1966171168
        %v1600 = vunpack.c.0.s8 %v1599
        %v1601 = vlaneseq
        %v1602 = vshrl.u32 %v1601, 7
        %v1603 = vsub.s32 %v1600, %v1602
        %v1604 = vrot.slane %v1582, %v1603
        %v1606 = vunpack.c.l.s4 1966171168
        %v1607 = vunpack.c.0.s8 %v1606
        %v1608 = vlaneseq
        %v1609 = vshrl.u32 %v1608, 7
        %v1610 = vsub.s32 %v1607, %v1609
        %v1611 = vrot.slane %v1583, %v1610
        %v1612 = vcombine.high %v1590, %v1590
        %v1613 = vcombine.high %v1597, %v1597
        %v1614 = vcombine.high %v1604, %v1604
        %v1615 = vcombine.high %v1611, %v1611
        %v1616 = vlaneseq
        %v1617 = vshrl.u32 %v1616, 7
        %v1618 = vsub.s32 0, %v1617
        %v1619 = vrot.slane %v1590, %v1618
        %v1620 = vlaneseq
        %v1621 = vshrl.u32 %v1620, 7
        %v1622 = vsub.s32 0, %v1621
        %v1623 = vrot.slane %v1604, %v1622
        %v1624 = vlaneseq
        %v1625 = vshrl.u32 %v1624, 7
        %v1626 = vsub.s32 0, %v1625
        %v1627 = vrot.slane %v1612, %v1626
        %v1628 = vlaneseq
        %v1629 = vshrl.u32 %v1628, 7
        %v1630 = vsub.s32 0, %v1629
        %v1631 = vrot.slane %v1614, %v1630
        %v1632 = vlaneseq
        %v1633 = vshrl.u32 %v1632, 7
        %v1634 = vsub.s32 0, %v1633
        %v1635 = vrot.slane %v1597, %v1634
        %v1636 = vlaneseq
        %v1637 = vshrl.u32 %v1636, 7
        %v1638 = vsub.s32 0, %v1637
        %v1639 = vrot.slane %v1611, %v1638
        %v1640 = vlaneseq
        %v1641 = vshrl.u32 %v1640, 7
        %v1642 = vsub.s32 0, %v1641
        %v1643 = vrot.slane %v1613, %v1642
        %v1644 = vlaneseq
        %v1645 = vshrl.u32 %v1644, 7
        %v1646 = vsub.s32 0, %v1645
        %v1647 = vrot.slane %v1615, %v1646
        %v1656 = vmul.f32 %v1619, %v776
        %v1657 = vmul.f32 %v1623, %v777
        %v1658 = vmul.f32 %v1627, %v778
        %v1659 = vmul.f32 %v1631, %v779
        %v1660 = vmul.f32 %v1635, %v780
        %v1661 = vmul.f32 %v1639, %v781
        %v1662 = vmul.f32 %v1643, %v782
        %v1663 = vmul.f32 %v1647, %v783
        %v1664 = vsel %vm800, %v1656, 0.0
        %1665 = vadd.xlane.f32.xlu0 %v1664
        %v1666 = vpop.xlane.xlu0 %1665
        %v1667 = vsel %vm800, %v1657, 0.0
        %1668 = vadd.xlane.f32.xlu0 %v1667
        %v1669 = vpop.xlane.xlu0 %1668
        %v1670 = vsel %vm800, %v1658, 0.0
        %1671 = vadd.xlane.f32.xlu0 %v1670
        %v1672 = vpop.xlane.xlu0 %1671
        %v1673 = vsel %vm800, %v1659, 0.0
        %1674 = vadd.xlane.f32.xlu0 %v1673
        %v1675 = vpop.xlane.xlu0 %1674
        %v1676 = vsel %vm800, %v1660, 0.0
        %1677 = vadd.xlane.f32.xlu0 %v1676
        %v1678 = vpop.xlane.xlu0 %1677
        %v1679 = vsel %vm800, %v1661, 0.0
        %1680 = vadd.xlane.f32.xlu0 %v1679
        %v1681 = vpop.xlane.xlu0 %1680
        %v1682 = vsel %vm800, %v1662, 0.0
        %1683 = vadd.xlane.f32.xlu0 %v1682
        %v1684 = vpop.xlane.xlu0 %1683
        %v1685 = vsel %vm800, %v1663, 0.0
        %1686 = vadd.xlane.f32.xlu0 %v1685
        %v1687 = vpop.xlane.xlu0 %1686
        %v1689 = vcombine.high %v1563, %v1563
        %v1691 = vunpack.c.l.s4 1966171168
        %v1692 = vunpack.c.0.s8 %v1691
        %v1693 = vlaneseq
        %v1694 = vshrl.u32 %v1693, 7
        %v1695 = vsub.s32 %v1692, %v1694
        %v1696 = vrot.slane %v1563, %v1695
        %v1698 = vunpack.c.l.s4 1966171168
        %v1699 = vunpack.c.0.s8 %v1698
        %v1700 = vlaneseq
        %v1701 = vshrl.u32 %v1700, 7
        %v1702 = vsub.s32 %v1699, %v1701
        %v1703 = vrot.slane %v1689, %v1702
        %v1704 = vcombine.high %v1696, %v1696
        %v1705 = vcombine.high %v1703, %v1703
        %v1707 = vunpack.c.l.s4 1966171168
        %v1708 = vunpack.c.0.s8 %v1707
        %v1709 = vlaneseq
        %v1710 = vshrl.u32 %v1709, 7
        %v1711 = vsub.s32 %v1708, %v1710
        %v1712 = vrot.slane %v1696, %v1711
        %v1714 = vunpack.c.l.s4 1966171168
        %v1715 = vunpack.c.0.s8 %v1714
        %v1716 = vlaneseq
        %v1717 = vshrl.u32 %v1716, 7
        %v1718 = vsub.s32 %v1715, %v1717
        %v1719 = vrot.slane %v1703, %v1718
        %v1721 = vunpack.c.l.s4 1966171168
        %v1722 = vunpack.c.0.s8 %v1721
        %v1723 = vlaneseq
        %v1724 = vshrl.u32 %v1723, 7
        %v1725 = vsub.s32 %v1722, %v1724
        %v1726 = vrot.slane %v1704, %v1725
        %v1728 = vunpack.c.l.s4 1966171168
        %v1729 = vunpack.c.0.s8 %v1728
        %v1730 = vlaneseq
        %v1731 = vshrl.u32 %v1730, 7
        %v1732 = vsub.s32 %v1729, %v1731
        %v1733 = vrot.slane %v1705, %v1732
        %v1734 = vcombine.high %v1712, %v1712
        %v1735 = vcombine.high %v1719, %v1719
        %v1736 = vcombine.high %v1726, %v1726
        %v1737 = vcombine.high %v1733, %v1733
        %v1738 = vlaneseq
        %v1739 = vshrl.u32 %v1738, 7
        %v1740 = vsub.s32 0, %v1739
        %v1741 = vrot.slane %v1712, %v1740
        %v1742 = vlaneseq
        %v1743 = vshrl.u32 %v1742, 7
        %v1744 = vsub.s32 0, %v1743
        %v1745 = vrot.slane %v1726, %v1744
        %v1746 = vlaneseq
        %v1747 = vshrl.u32 %v1746, 7
        %v1748 = vsub.s32 0, %v1747
        %v1749 = vrot.slane %v1734, %v1748
        %v1750 = vlaneseq
        %v1751 = vshrl.u32 %v1750, 7
        %v1752 = vsub.s32 0, %v1751
        %v1753 = vrot.slane %v1736, %v1752
        %v1754 = vlaneseq
        %v1755 = vshrl.u32 %v1754, 7
        %v1756 = vsub.s32 0, %v1755
        %v1757 = vrot.slane %v1719, %v1756
        %v1758 = vlaneseq
        %v1759 = vshrl.u32 %v1758, 7
        %v1760 = vsub.s32 0, %v1759
        %v1761 = vrot.slane %v1733, %v1760
        %v1762 = vlaneseq
        %v1763 = vshrl.u32 %v1762, 7
        %v1764 = vsub.s32 0, %v1763
        %v1765 = vrot.slane %v1735, %v1764
        %v1766 = vlaneseq
        %v1767 = vshrl.u32 %v1766, 7
        %v1768 = vsub.s32 0, %v1767
        %v1769 = vrot.slane %v1737, %v1768
        %v1778 = vmul.f32 %v1741, %v784
        %v1779 = vmul.f32 %v1745, %v785
        %v1780 = vmul.f32 %v1749, %v786
        %v1781 = vmul.f32 %v1753, %v787
        %v1782 = vmul.f32 %v1757, %v788
        %v1783 = vmul.f32 %v1761, %v789
        %v1784 = vmul.f32 %v1765, %v790
        %v1785 = vmul.f32 %v1769, %v791
        %v1786 = vsel %vm800, %v1778, 0.0
        %1787 = vadd.xlane.f32.xlu0 %v1786
        %v1788 = vpop.xlane.xlu0 %1787
        %v1789 = vsel %vm800, %v1779, 0.0
        %1790 = vadd.xlane.f32.xlu0 %v1789
        %v1791 = vpop.xlane.xlu0 %1790
        %v1792 = vsel %vm800, %v1780, 0.0
        %1793 = vadd.xlane.f32.xlu0 %v1792
        %v1794 = vpop.xlane.xlu0 %1793
        %v1795 = vsel %vm800, %v1781, 0.0
        %1796 = vadd.xlane.f32.xlu0 %v1795
        %v1797 = vpop.xlane.xlu0 %1796
        %v1798 = vsel %vm800, %v1782, 0.0
        %1799 = vadd.xlane.f32.xlu0 %v1798
        %v1800 = vpop.xlane.xlu0 %1799
        %v1801 = vsel %vm800, %v1783, 0.0
        %1802 = vadd.xlane.f32.xlu0 %v1801
        %v1803 = vpop.xlane.xlu0 %1802
        %v1804 = vsel %vm800, %v1784, 0.0
        %1805 = vadd.xlane.f32.xlu0 %v1804
        %v1806 = vpop.xlane.xlu0 %1805
        %v1807 = vsel %vm800, %v1785, 0.0
        %1808 = vadd.xlane.f32.xlu0 %v1807
        %v1809 = vpop.xlane.xlu0 %1808
        %v1810 = vadd.f32 %v1666, %v1788
        %v1811 = vadd.f32 %v1669, %v1791
        %v1812 = vadd.f32 %v1672, %v1794
        %v1813 = vadd.f32 %v1675, %v1797
        %v1814 = vadd.f32 %v1678, %v1800
        %v1815 = vadd.f32 %v1681, %v1803
        %v1816 = vadd.f32 %v1684, %v1806
        %v1817 = vadd.f32 %v1687, %v1809
        %1818 = vrot.lane.b32.xlu0 %v766, 120
        %v1819 = vpop.permute.xlu0 %1818
        %1820 = vrot.lane.b32.xlu0 %v677, 120
        %v1821 = vpop.permute.xlu0 %1820
        %v1830 = vlaneseq
        %v1831 = vshrl.u32 %v1830, 7
        %v1832 = vsub.s32 %v795, %v1831
        %v1833 = vrot.slane %v1810, %v1832
        %v1834 = vlaneseq
        %v1835 = vshrl.u32 %v1834, 7
        %v1836 = vsub.s32 %v795, %v1835
        %v1837 = vrot.slane %v1811, %v1836
        %v1838 = vlaneseq
        %v1839 = vshrl.u32 %v1838, 7
        %v1840 = vsub.s32 %v795, %v1839
        %v1841 = vrot.slane %v1812, %v1840
        %v1842 = vlaneseq
        %v1843 = vshrl.u32 %v1842, 7
        %v1844 = vsub.s32 %v795, %v1843
        %v1845 = vrot.slane %v1813, %v1844
        %v1846 = vlaneseq
        %v1847 = vshrl.u32 %v1846, 7
        %v1848 = vsub.s32 %v795, %v1847
        %v1849 = vrot.slane %v1814, %v1848
        %v1850 = vlaneseq
        %v1851 = vshrl.u32 %v1850, 7
        %v1852 = vsub.s32 %v795, %v1851
        %v1853 = vrot.slane %v1815, %v1852
        %v1854 = vlaneseq
        %v1855 = vshrl.u32 %v1854, 7
        %v1856 = vsub.s32 %v795, %v1855
        %v1857 = vrot.slane %v1816, %v1856
        %v1858 = vlaneseq
        %v1859 = vshrl.u32 %v1858, 7
        %v1860 = vsub.s32 %v795, %v1859
        %v1861 = vrot.slane %v1817, %v1860
        %v1862 = vsel %vm1242, %v1837, %v1833
        %v1863 = vsel %vm1244, %v1841, %v1862
        %v1864 = vsel %vm1246, %v1845, %v1863
        %v1865 = vsel %vm1248, %v1849, %v1864
        %v1866 = vsel %vm1250, %v1853, %v1865
        %v1867 = vsel %vm1252, %v1857, %v1866
        %v1868 = vsel %vm1254, %v1861, %v1867
        %v1870 = vsel %vm800, %v1819, 0
        %v1872 = vsel %vm800, %v1821, 0
        %1874 = vmatprep.subr.mxu0 0.0
        %1875 = vmatpush1.xpose.msra.mxu0 %v1872
        %1876 = vmatprep.subr.mxu0 0.0
        %1877 = vmatpush1.xpose.msra.mxu0 0.0
        %1878 = vmatprep.subr.mxu0 0.0
        %1879 = vmatpush1.xpose.msra.mxu0 0.0
        %1880 = vmatprep.subr.mxu0 0.0
        %1881 = vmatpush1.xpose.msra.mxu0 0.0
        %1882 = vmatprep.subr.mxu0 0.0
        %1883 = vmatpush1.xpose.msra.mxu0 0.0
        %1884 = vmatprep.subr.mxu0 0.0
        %1885 = vmatpush1.xpose.msra.mxu0 0.0
        %1886 = vmatprep.subr.mxu0 0.0
        %1887 = vmatpush1.xpose.msra.mxu0 0.0
        %1888 = vmatprep.subr.mxu0 0.0
        %1889 = vmatpush1.xpose.msra.mxu0 0.0
        %1890 = vmatprep.subr.mxu0 0.0
        %1891 = vmatpush1.xpose.msra.mxu0 0.0
        %1892 = vmatprep.subr.mxu0 0.0
        %1893 = vmatpush1.xpose.msra.mxu0 0.0
        %1894 = vmatprep.subr.mxu0 0.0
        %1895 = vmatpush1.xpose.msra.mxu0 0.0
        %1896 = vmatprep.subr.mxu0 0.0
        %1897 = vmatpush1.xpose.msra.mxu0 0.0
        %1898 = vmatprep.subr.mxu0 0.0
        %1899 = vmatpush1.xpose.msra.mxu0 0.0
        %1900 = vmatprep.subr.mxu0 0.0
        %1901 = vmatpush1.xpose.msra.mxu0 0.0
        %1902 = vmatprep.subr.mxu0 0.0
        %1903 = vmatpush1.xpose.msra.mxu0 0.0
        %1904 = vmatprep.subr.mxu0 0.0
        %1905 = vmatpush1.xpose.msra.mxu0 0.0
        %1906 = vmatprep.subr.mxu0 0.0
        %1907 = vmatpush1.xpose.msra.mxu0 0.0
        %1908 = vmatprep.subr.mxu0 0.0
        %1909 = vmatpush1.xpose.msra.mxu0 0.0
        %1910 = vmatprep.subr.mxu0 0.0
        %1911 = vmatpush1.xpose.msra.mxu0 0.0
        %1912 = vmatprep.subr.mxu0 0.0
        %1913 = vmatpush1.xpose.msra.mxu0 0.0
        %1914 = vmatprep.subr.mxu0 0.0
        %1915 = vmatpush1.xpose.msra.mxu0 0.0
        %1916 = vmatprep.subr.mxu0 0.0
        %1917 = vmatpush1.xpose.msra.mxu0 0.0
        %1918 = vmatprep.subr.mxu0 0.0
        %1919 = vmatpush1.xpose.msra.mxu0 0.0
        %1920 = vmatprep.subr.mxu0 0.0
        %1921 = vmatpush1.xpose.msra.mxu0 0.0
        %1922 = vmatprep.subr.mxu0 0.0
        %1923 = vmatpush1.xpose.msra.mxu0 0.0
        %1924 = vmatprep.subr.mxu0 0.0
        %1925 = vmatpush1.xpose.msra.mxu0 0.0
        %1926 = vmatprep.subr.mxu0 0.0
        %1927 = vmatpush1.xpose.msra.mxu0 0.0
        %1928 = vmatprep.subr.mxu0 0.0
        %1929 = vmatpush1.xpose.msra.mxu0 0.0
        %1930 = vmatprep.subr.mxu0 0.0
        %1931 = vmatpush1.xpose.msra.mxu0 0.0
        %1932 = vmatprep.subr.mxu0 0.0
        %1933 = vmatpush1.xpose.msra.mxu0 0.0
        %1934 = vmatprep.subr.mxu0 0.0
        %1935 = vmatpush1.xpose.msra.mxu0 0.0
        %1936 = vmatprep.subr.mxu0 0.0
        %1937 = vmatpush1.xpose.msra.mxu0 0.0
        %1938 = vmatprep.mubr.f32.mxu0 0.0
        %1939 = vmatmul.mubr.f32.gmra.mrb[0].mxu0 %v1870
        %v1940 = vpop.f32.mrb[0].mxu0
        %v1941 = vadd.f32 %v1868, %v1940
        %v1942 = vpop.f32.mrb[0].mxu0
        %1943 = vdwg.mxu0
        %v1944 = vsel %vm800, %v1941, -inf
        %1945 = vmax.xlane.f32.xlu0 %v1944
        %v1946 = vpop.xlane.xlu0 %1945
        %v1947 = vsub.f32 %v1941, %v1946
        %v1948 = vmul.f32 %v1947, 1.442695
        %v1949 = vpow.pop %v1948
        %v1950 = vsel %vm800, %v1949, 0.0
        %1951 = vadd.xlane.f32.xlu0 %v1950
        %v1952 = vpop.xlane.xlu0 %1951
        %v1953 = vrcp.pop %v1952
        %v1954 = vmul.f32 %v1949, %v1953
        %v1957 = vsel %vm800, %v1954, 0
        %1959 = vmatprep.subr.mxu0 0.0
        %1960 = vmatpush1.msra.mxu0 %v1821
        %1961 = vmatprep.subr.mxu0 0.0
        %1962 = vmatpush1.msra.mxu0 0.0
        %1963 = vmatprep.subr.mxu0 0.0
        %1964 = vmatpush1.msra.mxu0 0.0
        %1965 = vmatprep.subr.mxu0 0.0
        %1966 = vmatpush1.msra.mxu0 0.0
        %1967 = vmatprep.subr.mxu0 0.0
        %1968 = vmatpush1.msra.mxu0 0.0
        %1969 = vmatprep.subr.mxu0 0.0
        %1970 = vmatpush1.msra.mxu0 0.0
        %1971 = vmatprep.subr.mxu0 0.0
        %1972 = vmatpush1.msra.mxu0 0.0
        %1973 = vmatprep.subr.mxu0 0.0
        %1974 = vmatpush1.msra.mxu0 0.0
        %1975 = vmatprep.subr.mxu0 0.0
        %1976 = vmatpush1.msra.mxu0 0.0
        %1977 = vmatprep.subr.mxu0 0.0
        %1978 = vmatpush1.msra.mxu0 0.0
        %1979 = vmatprep.subr.mxu0 0.0
        %1980 = vmatpush1.msra.mxu0 0.0
        %1981 = vmatprep.subr.mxu0 0.0
        %1982 = vmatpush1.msra.mxu0 0.0
        %1983 = vmatprep.subr.mxu0 0.0
        %1984 = vmatpush1.msra.mxu0 0.0
        %1985 = vmatprep.subr.mxu0 0.0
        %1986 = vmatpush1.msra.mxu0 0.0
        %1987 = vmatprep.subr.mxu0 0.0
        %1988 = vmatpush1.msra.mxu0 0.0
        %1989 = vmatprep.subr.mxu0 0.0
        %1990 = vmatpush1.msra.mxu0 0.0
        %1991 = vmatprep.subr.mxu0 0.0
        %1992 = vmatpush1.msra.mxu0 0.0
        %1993 = vmatprep.subr.mxu0 0.0
        %1994 = vmatpush1.msra.mxu0 0.0
        %1995 = vmatprep.subr.mxu0 0.0
        %1996 = vmatpush1.msra.mxu0 0.0
        %1997 = vmatprep.subr.mxu0 0.0
        %1998 = vmatpush1.msra.mxu0 0.0
        %1999 = vmatprep.subr.mxu0 0.0
        %2000 = vmatpush1.msra.mxu0 0.0
        %2001 = vmatprep.subr.mxu0 0.0
        %2002 = vmatpush1.msra.mxu0 0.0
        %2003 = vmatprep.subr.mxu0 0.0
        %2004 = vmatpush1.msra.mxu0 0.0
        %2005 = vmatprep.subr.mxu0 0.0
        %2006 = vmatpush1.msra.mxu0 0.0
        %2007 = vmatprep.subr.mxu0 0.0
        %2008 = vmatpush1.msra.mxu0 0.0
        %2009 = vmatprep.subr.mxu0 0.0
        %2010 = vmatpush1.msra.mxu0 0.0
        %2011 = vmatprep.subr.mxu0 0.0
        %2012 = vmatpush1.msra.mxu0 0.0
        %2013 = vmatprep.subr.mxu0 0.0
        %2014 = vmatpush1.msra.mxu0 0.0
        %2015 = vmatprep.subr.mxu0 0.0
        %2016 = vmatpush1.msra.mxu0 0.0
        %2017 = vmatprep.subr.mxu0 0.0
        %2018 = vmatpush1.msra.mxu0 0.0
        %2019 = vmatprep.subr.mxu0 0.0
        %2020 = vmatpush1.msra.mxu0 0.0
        %2021 = vmatprep.subr.mxu0 0.0
        %2022 = vmatpush1.msra.mxu0 0.0
        %2023 = vmatprep.mubr.f32.mxu0 0.0
        %2024 = vmatmul.mubr.f32.gmra.mrb[0].mxu0 %v1957
        %v2025 = vpop.f32.mrb[0].mxu0
        %v2026 = vadd.f32 0.0, %v2025
        %v2027 = vpop.f32.mrb[0].mxu0
        %2028 = vdwg.mxu0
        %v2029 = vld [vmem:[%s11 + $0x8] sm:$0xff]
        %v2031 = vsel %vm800, %v2026, 0
        %2033 = vmatprep.subr.mxu0 0.0
        %2034 = vmatpush1.msra.mxu0 %v2029
        %2035 = vmatprep.subr.mxu0 0.0
        %2036 = vmatpush1.msra.mxu0 0.0
        %2037 = vmatprep.subr.mxu0 0.0
        %2038 = vmatpush1.msra.mxu0 0.0
        %2039 = vmatprep.subr.mxu0 0.0
        %2040 = vmatpush1.msra.mxu0 0.0
        %2041 = vmatprep.subr.mxu0 0.0
        %2042 = vmatpush1.msra.mxu0 0.0
        %2043 = vmatprep.subr.mxu0 0.0
        %2044 = vmatpush1.msra.mxu0 0.0
        %2045 = vmatprep.subr.mxu0 0.0
        %2046 = vmatpush1.msra.mxu0 0.0
        %2047 = vmatprep.subr.mxu0 0.0
        %2048 = vmatpush1.msra.mxu0 0.0
        %2049 = vmatprep.subr.mxu0 0.0
        %2050 = vmatpush1.msra.mxu0 0.0
        %2051 = vmatprep.subr.mxu0 0.0
        %2052 = vmatpush1.msra.mxu0 0.0
        %2053 = vmatprep.subr.mxu0 0.0
        %2054 = vmatpush1.msra.mxu0 0.0
        %2055 = vmatprep.subr.mxu0 0.0
        %2056 = vmatpush1.msra.mxu0 0.0
        %2057 = vmatprep.subr.mxu0 0.0
        %2058 = vmatpush1.msra.mxu0 0.0
        %2059 = vmatprep.subr.mxu0 0.0
        %2060 = vmatpush1.msra.mxu0 0.0
        %2061 = vmatprep.subr.mxu0 0.0
        %2062 = vmatpush1.msra.mxu0 0.0
        %2063 = vmatprep.subr.mxu0 0.0
        %2064 = vmatpush1.msra.mxu0 0.0
        %2065 = vmatprep.subr.mxu0 0.0
        %2066 = vmatpush1.msra.mxu0 0.0
        %2067 = vmatprep.subr.mxu0 0.0
        %2068 = vmatpush1.msra.mxu0 0.0
        %2069 = vmatprep.subr.mxu0 0.0
        %2070 = vmatpush1.msra.mxu0 0.0
        %2071 = vmatprep.subr.mxu0 0.0
        %2072 = vmatpush1.msra.mxu0 0.0
        %2073 = vmatprep.subr.mxu0 0.0
        %2074 = vmatpush1.msra.mxu0 0.0
        %2075 = vmatprep.subr.mxu0 0.0
        %2076 = vmatpush1.msra.mxu0 0.0
        %2077 = vmatprep.subr.mxu0 0.0
        %2078 = vmatpush1.msra.mxu0 0.0
        %2079 = vmatprep.subr.mxu0 0.0
        %2080 = vmatpush1.msra.mxu0 0.0
        %2081 = vmatprep.subr.mxu0 0.0
        %2082 = vmatpush1.msra.mxu0 0.0
        %2083 = vmatprep.subr.mxu0 0.0
        %2084 = vmatpush1.msra.mxu0 0.0
        %2085 = vmatprep.subr.mxu0 0.0
        %2086 = vmatpush1.msra.mxu0 0.0
        %2087 = vmatprep.subr.mxu0 0.0
        %2088 = vmatpush1.msra.mxu0 0.0
        %2089 = vmatprep.subr.mxu0 0.0
        %2090 = vmatpush1.msra.mxu0 0.0
        %2091 = vmatprep.subr.mxu0 0.0
        %2092 = vmatpush1.msra.mxu0 0.0
        %2093 = vmatprep.subr.mxu0 0.0
        %2094 = vmatpush1.msra.mxu0 0.0
        %2095 = vmatprep.subr.mxu0 0.0
        %2096 = vmatpush1.msra.mxu0 0.0
        %2097 = vmatprep.mubr.f32.mxu0 0.0
        %2098 = vmatmul.mubr.f32.gmra.mrb[0].mxu0 %v2031
        %v2099 = vpop.f32.mrb[0].mxu0
        %v2100 = vadd.f32 0.0, %v2099
        %v2101 = vpop.f32.mrb[0].mxu0
        %2102 = vdwg.mxu0
        %v2104 = vsel %vm800, %v1414, 0
        %2106 = vmatprep.subr.mxu0 0.0
        %2107 = vmatpush1.msra.mxu0 %v1417
        %2108 = vmatprep.subr.mxu0 0.0
        %2109 = vmatpush1.msra.mxu0 0.0
        %2110 = vmatprep.subr.mxu0 0.0
        %2111 = vmatpush1.msra.mxu0 0.0
        %2112 = vmatprep.subr.mxu0 0.0
        %2113 = vmatpush1.msra.mxu0 0.0
        %2114 = vmatprep.subr.mxu0 0.0
        %2115 = vmatpush1.msra.mxu0 0.0
        %2116 = vmatprep.subr.mxu0 0.0
        %2117 = vmatpush1.msra.mxu0 0.0
        %2118 = vmatprep.subr.mxu0 0.0
        %2119 = vmatpush1.msra.mxu0 0.0
        %2120 = vmatprep.subr.mxu0 0.0
        %2121 = vmatpush1.msra.mxu0 0.0
        %2122 = vmatprep.subr.mxu0 0.0
        %2123 = vmatpush1.msra.mxu0 0.0
        %2124 = vmatprep.subr.mxu0 0.0
        %2125 = vmatpush1.msra.mxu0 0.0
        %2126 = vmatprep.subr.mxu0 0.0
        %2127 = vmatpush1.msra.mxu0 0.0
        %2128 = vmatprep.subr.mxu0 0.0
        %2129 = vmatpush1.msra.mxu0 0.0
        %2130 = vmatprep.subr.mxu0 0.0
        %2131 = vmatpush1.msra.mxu0 0.0
        %2132 = vmatprep.subr.mxu0 0.0
        %2133 = vmatpush1.msra.mxu0 0.0
        %2134 = vmatprep.subr.mxu0 0.0
        %2135 = vmatpush1.msra.mxu0 0.0
        %2136 = vmatprep.subr.mxu0 0.0
        %2137 = vmatpush1.msra.mxu0 0.0
        %2138 = vmatprep.subr.mxu0 0.0
        %2139 = vmatpush1.msra.mxu0 0.0
        %2140 = vmatprep.subr.mxu0 0.0
        %2141 = vmatpush1.msra.mxu0 0.0
        %2142 = vmatprep.subr.mxu0 0.0
        %2143 = vmatpush1.msra.mxu0 0.0
        %2144 = vmatprep.subr.mxu0 0.0
        %2145 = vmatpush1.msra.mxu0 0.0
        %2146 = vmatprep.subr.mxu0 0.0
        %2147 = vmatpush1.msra.mxu0 0.0
        %2148 = vmatprep.subr.mxu0 0.0
        %2149 = vmatpush1.msra.mxu0 0.0
        %2150 = vmatprep.subr.mxu0 0.0
        %2151 = vmatpush1.msra.mxu0 0.0
        %2152 = vmatprep.subr.mxu0 0.0
        %2153 = vmatpush1.msra.mxu0 0.0
        %2154 = vmatprep.subr.mxu0 0.0
        %2155 = vmatpush1.msra.mxu0 0.0
        %2156 = vmatprep.subr.mxu0 0.0
        %2157 = vmatpush1.msra.mxu0 0.0
        %2158 = vmatprep.subr.mxu0 0.0
        %2159 = vmatpush1.msra.mxu0 0.0
        %2160 = vmatprep.subr.mxu0 0.0
        %2161 = vmatpush1.msra.mxu0 0.0
        %2162 = vmatprep.subr.mxu0 0.0
        %2163 = vmatpush1.msra.mxu0 0.0
        %2164 = vmatprep.subr.mxu0 0.0
        %2165 = vmatpush1.msra.mxu0 0.0
        %2166 = vmatprep.subr.mxu0 0.0
        %2167 = vmatpush1.msra.mxu0 0.0
        %2168 = vmatprep.subr.mxu0 0.0
        %2169 = vmatpush1.msra.mxu0 0.0
        %2170 = vmatprep.mubr.f32.mxu0 0.0
        %2171 = vmatmul.mubr.f32.gmra.mrb[0].mxu0 %v2104
        %v2172 = vpop.f32.mrb[0].mxu0
        %v2173 = vadd.f32 %v2100, %v2172
        %v2174 = vpop.f32.mrb[0].mxu0
        %2175 = vdwg.mxu0
        %2176 = vrot.lane.b32.xlu0 %v775, 112
        %v2177 = vpop.permute.xlu0 %2176
        %2178 = vrot.lane.b32.xlu0 %v755, 112
        %v2179 = vpop.permute.xlu0 %2178
        %v2180 = vsel %vm800, %v2177, 0
        %v2182 = vsel %vm800, %v2179, 0
        %2184 = vmatprep.subr.mxu0 0.0
        %2185 = vmatpush1.xpose.msra.mxu0 %v2182
        %2186 = vmatprep.subr.mxu0 0.0
        %2187 = vmatpush1.xpose.msra.mxu0 0.0
        %2188 = vmatprep.subr.mxu0 0.0
        %2189 = vmatpush1.xpose.msra.mxu0 0.0
        %2190 = vmatprep.subr.mxu0 0.0
        %2191 = vmatpush1.xpose.msra.mxu0 0.0
        %2192 = vmatprep.subr.mxu0 0.0
        %2193 = vmatpush1.xpose.msra.mxu0 0.0
        %2194 = vmatprep.subr.mxu0 0.0
        %2195 = vmatpush1.xpose.msra.mxu0 0.0
        %2196 = vmatprep.subr.mxu0 0.0
        %2197 = vmatpush1.xpose.msra.mxu0 0.0
        %2198 = vmatprep.subr.mxu0 0.0
        %2199 = vmatpush1.xpose.msra.mxu0 0.0
        %2200 = vmatprep.subr.mxu0 0.0
        %2201 = vmatpush1.xpose.msra.mxu0 0.0
        %2202 = vmatprep.subr.mxu0 0.0
        %2203 = vmatpush1.xpose.msra.mxu0 0.0
        %2204 = vmatprep.subr.mxu0 0.0
        %2205 = vmatpush1.xpose.msra.mxu0 0.0
        %2206 = vmatprep.subr.mxu0 0.0
        %2207 = vmatpush1.xpose.msra.mxu0 0.0
        %2208 = vmatprep.subr.mxu0 0.0
        %2209 = vmatpush1.xpose.msra.mxu0 0.0
        %2210 = vmatprep.subr.mxu0 0.0
        %2211 = vmatpush1.xpose.msra.mxu0 0.0
        %2212 = vmatprep.subr.mxu0 0.0
        %2213 = vmatpush1.xpose.msra.mxu0 0.0
        %2214 = vmatprep.subr.mxu0 0.0
        %2215 = vmatpush1.xpose.msra.mxu0 0.0
        %2216 = vmatprep.subr.mxu0 0.0
        %2217 = vmatpush1.xpose.msra.mxu0 0.0
        %2218 = vmatprep.subr.mxu0 0.0
        %2219 = vmatpush1.xpose.msra.mxu0 0.0
        %2220 = vmatprep.subr.mxu0 0.0
        %2221 = vmatpush1.xpose.msra.mxu0 0.0
        %2222 = vmatprep.subr.mxu0 0.0
        %2223 = vmatpush1.xpose.msra.mxu0 0.0
        %2224 = vmatprep.subr.mxu0 0.0
        %2225 = vmatpush1.xpose.msra.mxu0 0.0
        %2226 = vmatprep.subr.mxu0 0.0
        %2227 = vmatpush1.xpose.msra.mxu0 0.0
        %2228 = vmatprep.subr.mxu0 0.0
        %2229 = vmatpush1.xpose.msra.mxu0 0.0
        %2230 = vmatprep.subr.mxu0 0.0
        %2231 = vmatpush1.xpose.msra.mxu0 0.0
        %2232 = vmatprep.subr.mxu0 0.0
        %2233 = vmatpush1.xpose.msra.mxu0 0.0
        %2234 = vmatprep.subr.mxu0 0.0
        %2235 = vmatpush1.xpose.msra.mxu0 0.0
        %2236 = vmatprep.subr.mxu0 0.0
        %2237 = vmatpush1.xpose.msra.mxu0 0.0
        %2238 = vmatprep.subr.mxu0 0.0
        %2239 = vmatpush1.xpose.msra.mxu0 0.0
        %2240 = vmatprep.subr.mxu0 0.0
        %2241 = vmatpush1.xpose.msra.mxu0 0.0
        %2242 = vmatprep.subr.mxu0 0.0
        %2243 = vmatpush1.xpose.msra.mxu0 0.0
        %2244 = vmatprep.subr.mxu0 0.0
        %2245 = vmatpush1.xpose.msra.mxu0 0.0
        %2246 = vmatprep.subr.mxu0 0.0
        %2247 = vmatpush1.xpose.msra.mxu0 0.0
        %2248 = vmatprep.mubr.f32.mxu0 0.0
        %2249 = vmatmul.mubr.f32.gmra.mrb[0].mxu0 %v2180
        %v2250 = vpop.f32.mrb[0].mxu0
        %v2251 = vadd.f32 0.0, %v2250
        %v2252 = vpop.f32.mrb[0].mxu0
        %2253 = vdwg.mxu0
        %2254 = vmatprep.subr.mxu0 0.0
        %2255 = vmatpush1.msra.mxu0 %v2251
        %2256 = vmatprep.subr.mxu0 0.0
        %2257 = vmatpush1.msra.mxu0 0.0
        %2258 = vmatprep.subr.mxu0 0.0
        %2259 = vmatpush1.msra.mxu0 0.0
        %2260 = vmatprep.subr.mxu0 0.0
        %2261 = vmatpush1.msra.mxu0 0.0
        %2262 = vmatprep.subr.mxu0 0.0
        %2263 = vmatpush1.msra.mxu0 0.0
        %2264 = vmatprep.subr.mxu0 0.0
        %2265 = vmatpush1.msra.mxu0 0.0
        %2266 = vmatprep.subr.mxu0 0.0
        %2267 = vmatpush1.msra.mxu0 0.0
        %2268 = vmatprep.subr.mxu0 0.0
        %2269 = vmatpush1.msra.mxu0 0.0
        %2270 = vmatprep.subr.mxu0 0.0
        %2271 = vmatpush1.msra.mxu0 0.0
        %2272 = vmatprep.subr.mxu0 0.0
        %2273 = vmatpush1.msra.mxu0 0.0
        %2274 = vmatprep.subr.mxu0 0.0
        %2275 = vmatpush1.msra.mxu0 0.0
        %2276 = vmatprep.subr.mxu0 0.0
        %2277 = vmatpush1.msra.mxu0 0.0
        %2278 = vmatprep.subr.mxu0 0.0
        %2279 = vmatpush1.msra.mxu0 0.0
        %2280 = vmatprep.subr.mxu0 0.0
        %2281 = vmatpush1.msra.mxu0 0.0
        %2282 = vmatprep.subr.mxu0 0.0
        %2283 = vmatpush1.msra.mxu0 0.0
        %2284 = vmatprep.subr.mxu0 0.0
        %2285 = vmatpush1.msra.mxu0 0.0
        %2286 = vmatprep.subr.mxu0 0.0
        %2287 = vmatpush1.msra.mxu0 0.0
        %2288 = vmatprep.subr.mxu0 0.0
        %2289 = vmatpush1.msra.mxu0 0.0
        %2290 = vmatprep.subr.mxu0 0.0
        %2291 = vmatpush1.msra.mxu0 0.0
        %2292 = vmatprep.subr.mxu0 0.0
        %2293 = vmatpush1.msra.mxu0 0.0
        %2294 = vmatprep.subr.mxu0 0.0
        %2295 = vmatpush1.msra.mxu0 0.0
        %2296 = vmatprep.subr.mxu0 0.0
        %2297 = vmatpush1.msra.mxu0 0.0
        %2298 = vmatprep.subr.mxu0 0.0
        %2299 = vmatpush1.msra.mxu0 0.0
        %2300 = vmatprep.subr.mxu0 0.0
        %2301 = vmatpush1.msra.mxu0 0.0
        %2302 = vmatprep.subr.mxu0 0.0
        %2303 = vmatpush1.msra.mxu0 0.0
        %2304 = vmatprep.subr.mxu0 0.0
        %2305 = vmatpush1.msra.mxu0 0.0
        %2306 = vmatprep.subr.mxu0 0.0
        %2307 = vmatpush1.msra.mxu0 0.0
        %2308 = vmatprep.subr.mxu0 0.0
        %2309 = vmatpush1.msra.mxu0 0.0
        %2310 = vmatprep.subr.mxu0 0.0
        %2311 = vmatpush1.msra.mxu0 0.0
        %2312 = vmatprep.subr.mxu0 0.0
        %2313 = vmatpush1.msra.mxu0 0.0
        %2314 = vmatprep.subr.mxu0 0.0
        %2315 = vmatpush1.msra.mxu0 0.0
        %2316 = vmatprep.subr.mxu0 0.0
        %2317 = vmatpush1.msra.mxu0 0.0
        %2318 = vmatprep.mubr.f32.mxu0 0.0
        %2319 = vmatmul.mubr.f32.gmra.mrb[0].mxu0 %v878
        %v2320 = vpop.f32.mrb[0].mxu0
        %v2321 = vadd.f32 0.0, %v2320
        %v2322 = vpop.f32.mrb[0].mxu0
        %2323 = vdwg.mxu0
        %v2325 = vcombine.high %v2251, %v2251
        %v2327 = vunpack.c.l.s4 1966171168
        %v2328 = vunpack.c.0.s8 %v2327
        %v2329 = vlaneseq
        %v2330 = vshrl.u32 %v2329, 7
        %v2331 = vsub.s32 %v2328, %v2330
        %v2332 = vrot.slane %v2251, %v2331
        %v2334 = vunpack.c.l.s4 1966171168
        %v2335 = vunpack.c.0.s8 %v2334
        %v2336 = vlaneseq
        %v2337 = vshrl.u32 %v2336, 7
        %v2338 = vsub.s32 %v2335, %v2337
        %v2339 = vrot.slane %v2325, %v2338
        %v2340 = vcombine.high %v2332, %v2332
        %v2341 = vcombine.high %v2339, %v2339
        %v2343 = vunpack.c.l.s4 1966171168
        %v2344 = vunpack.c.0.s8 %v2343
        %v2345 = vlaneseq
        %v2346 = vshrl.u32 %v2345, 7
        %v2347 = vsub.s32 %v2344, %v2346
        %v2348 = vrot.slane %v2332, %v2347
        %v2350 = vunpack.c.l.s4 1966171168
        %v2351 = vunpack.c.0.s8 %v2350
        %v2352 = vlaneseq
        %v2353 = vshrl.u32 %v2352, 7
        %v2354 = vsub.s32 %v2351, %v2353
        %v2355 = vrot.slane %v2339, %v2354
        %v2357 = vunpack.c.l.s4 1966171168
        %v2358 = vunpack.c.0.s8 %v2357
        %v2359 = vlaneseq
        %v2360 = vshrl.u32 %v2359, 7
        %v2361 = vsub.s32 %v2358, %v2360
        %v2362 = vrot.slane %v2340, %v2361
        %v2364 = vunpack.c.l.s4 1966171168
        %v2365 = vunpack.c.0.s8 %v2364
        %v2366 = vlaneseq
        %v2367 = vshrl.u32 %v2366, 7
        %v2368 = vsub.s32 %v2365, %v2367
        %v2369 = vrot.slane %v2341, %v2368
        %v2370 = vcombine.high %v2348, %v2348
        %v2371 = vcombine.high %v2355, %v2355
        %v2372 = vcombine.high %v2362, %v2362
        %v2373 = vcombine.high %v2369, %v2369
        %v2374 = vlaneseq
        %v2375 = vshrl.u32 %v2374, 7
        %v2376 = vsub.s32 0, %v2375
        %v2377 = vrot.slane %v2348, %v2376
        %v2378 = vlaneseq
        %v2379 = vshrl.u32 %v2378, 7
        %v2380 = vsub.s32 0, %v2379
        %v2381 = vrot.slane %v2362, %v2380
        %v2382 = vlaneseq
        %v2383 = vshrl.u32 %v2382, 7
        %v2384 = vsub.s32 0, %v2383
        %v2385 = vrot.slane %v2370, %v2384
        %v2386 = vlaneseq
        %v2387 = vshrl.u32 %v2386, 7
        %v2388 = vsub.s32 0, %v2387
        %v2389 = vrot.slane %v2372, %v2388
        %v2390 = vlaneseq
        %v2391 = vshrl.u32 %v2390, 7
        %v2392 = vsub.s32 0, %v2391
        %v2393 = vrot.slane %v2355, %v2392
        %v2394 = vlaneseq
        %v2395 = vshrl.u32 %v2394, 7
        %v2396 = vsub.s32 0, %v2395
        %v2397 = vrot.slane %v2369, %v2396
        %v2398 = vlaneseq
        %v2399 = vshrl.u32 %v2398, 7
        %v2400 = vsub.s32 0, %v2399
        %v2401 = vrot.slane %v2371, %v2400
        %v2402 = vlaneseq
        %v2403 = vshrl.u32 %v2402, 7
        %v2404 = vsub.s32 0, %v2403
        %v2405 = vrot.slane %v2373, %v2404
        %v2414 = vmul.f32 %v2377, %v776
        %v2415 = vmul.f32 %v2381, %v777
        %v2416 = vmul.f32 %v2385, %v778
        %v2417 = vmul.f32 %v2389, %v779
        %v2418 = vmul.f32 %v2393, %v780
        %v2419 = vmul.f32 %v2397, %v781
        %v2420 = vmul.f32 %v2401, %v782
        %v2421 = vmul.f32 %v2405, %v783
        %v2422 = vsel %vm800, %v2414, 0.0
        %2423 = vadd.xlane.f32.xlu0 %v2422
        %v2424 = vpop.xlane.xlu0 %2423
        %v2425 = vsel %vm800, %v2415, 0.0
        %2426 = vadd.xlane.f32.xlu0 %v2425
        %v2427 = vpop.xlane.xlu0 %2426
        %v2428 = vsel %vm800, %v2416, 0.0
        %2429 = vadd.xlane.f32.xlu0 %v2428
        %v2430 = vpop.xlane.xlu0 %2429
        %v2431 = vsel %vm800, %v2417, 0.0
        %2432 = vadd.xlane.f32.xlu0 %v2431
        %v2433 = vpop.xlane.xlu0 %2432
        %v2434 = vsel %vm800, %v2418, 0.0
        %2435 = vadd.xlane.f32.xlu0 %v2434
        %v2436 = vpop.xlane.xlu0 %2435
        %v2437 = vsel %vm800, %v2419, 0.0
        %2438 = vadd.xlane.f32.xlu0 %v2437
        %v2439 = vpop.xlane.xlu0 %2438
        %v2440 = vsel %vm800, %v2420, 0.0
        %2441 = vadd.xlane.f32.xlu0 %v2440
        %v2442 = vpop.xlane.xlu0 %2441
        %v2443 = vsel %vm800, %v2421, 0.0
        %2444 = vadd.xlane.f32.xlu0 %v2443
        %v2445 = vpop.xlane.xlu0 %2444
        %v2447 = vcombine.high %v2321, %v2321
        %v2449 = vunpack.c.l.s4 1966171168
        %v2450 = vunpack.c.0.s8 %v2449
        %v2451 = vlaneseq
        %v2452 = vshrl.u32 %v2451, 7
        %v2453 = vsub.s32 %v2450, %v2452
        %v2454 = vrot.slane %v2321, %v2453
        %v2456 = vunpack.c.l.s4 1966171168
        %v2457 = vunpack.c.0.s8 %v2456
        %v2458 = vlaneseq
        %v2459 = vshrl.u32 %v2458, 7
        %v2460 = vsub.s32 %v2457, %v2459
        %v2461 = vrot.slane %v2447, %v2460
        %v2462 = vcombine.high %v2454, %v2454
        %v2463 = vcombine.high %v2461, %v2461
        %v2465 = vunpack.c.l.s4 1966171168
        %v2466 = vunpack.c.0.s8 %v2465
        %v2467 = vlaneseq
        %v2468 = vshrl.u32 %v2467, 7
        %v2469 = vsub.s32 %v2466, %v2468
        %v2470 = vrot.slane %v2454, %v2469
        %v2472 = vunpack.c.l.s4 1966171168
        %v2473 = vunpack.c.0.s8 %v2472
        %v2474 = vlaneseq
        %v2475 = vshrl.u32 %v2474, 7
        %v2476 = vsub.s32 %v2473, %v2475
        %v2477 = vrot.slane %v2461, %v2476
        %v2479 = vunpack.c.l.s4 1966171168
        %v2480 = vunpack.c.0.s8 %v2479
        %v2481 = vlaneseq
        %v2482 = vshrl.u32 %v2481, 7
        %v2483 = vsub.s32 %v2480, %v2482
        %v2484 = vrot.slane %v2462, %v2483
        %v2486 = vunpack.c.l.s4 1966171168
        %v2487 = vunpack.c.0.s8 %v2486
        %v2488 = vlaneseq
        %v2489 = vshrl.u32 %v2488, 7
        %v2490 = vsub.s32 %v2487, %v2489
        %v2491 = vrot.slane %v2463, %v2490
        %v2492 = vcombine.high %v2470, %v2470
        %v2493 = vcombine.high %v2477, %v2477
        %v2494 = vcombine.high %v2484, %v2484
        %v2495 = vcombine.high %v2491, %v2491
        %v2496 = vlaneseq
        %v2497 = vshrl.u32 %v2496, 7
        %v2498 = vsub.s32 0, %v2497
        %v2499 = vrot.slane %v2470, %v2498
        %v2500 = vlaneseq
        %v2501 = vshrl.u32 %v2500, 7
        %v2502 = vsub.s32 0, %v2501
        %v2503 = vrot.slane %v2484, %v2502
        %v2504 = vlaneseq
        %v2505 = vshrl.u32 %v2504, 7
        %v2506 = vsub.s32 0, %v2505
        %v2507 = vrot.slane %v2492, %v2506
        %v2508 = vlaneseq
        %v2509 = vshrl.u32 %v2508, 7
        %v2510 = vsub.s32 0, %v2509
        %v2511 = vrot.slane %v2494, %v2510
        %v2512 = vlaneseq
        %v2513 = vshrl.u32 %v2512, 7
        %v2514 = vsub.s32 0, %v2513
        %v2515 = vrot.slane %v2477, %v2514
        %v2516 = vlaneseq
        %v2517 = vshrl.u32 %v2516, 7
        %v2518 = vsub.s32 0, %v2517
        %v2519 = vrot.slane %v2491, %v2518
        %v2520 = vlaneseq
        %v2521 = vshrl.u32 %v2520, 7
        %v2522 = vsub.s32 0, %v2521
        %v2523 = vrot.slane %v2493, %v2522
        %v2524 = vlaneseq
        %v2525 = vshrl.u32 %v2524, 7
        %v2526 = vsub.s32 0, %v2525
        %v2527 = vrot.slane %v2495, %v2526
        %v2536 = vmul.f32 %v2499, %v784
        %v2537 = vmul.f32 %v2503, %v785
        %v2538 = vmul.f32 %v2507, %v786
        %v2539 = vmul.f32 %v2511, %v787
        %v2540 = vmul.f32 %v2515, %v788
        %v2541 = vmul.f32 %v2519, %v789
        %v2542 = vmul.f32 %v2523, %v790
        %v2543 = vmul.f32 %v2527, %v791
        %v2544 = vsel %vm800, %v2536, 0.0
        %2545 = vadd.xlane.f32.xlu0 %v2544
        %v2546 = vpop.xlane.xlu0 %2545
        %v2547 = vsel %vm800, %v2537, 0.0
        %2548 = vadd.xlane.f32.xlu0 %v2547
        %v2549 = vpop.xlane.xlu0 %2548
        %v2550 = vsel %vm800, %v2538, 0.0
        %2551 = vadd.xlane.f32.xlu0 %v2550
        %v2552 = vpop.xlane.xlu0 %2551
        %v2553 = vsel %vm800, %v2539, 0.0
        %2554 = vadd.xlane.f32.xlu0 %v2553
        %v2555 = vpop.xlane.xlu0 %2554
        %v2556 = vsel %vm800, %v2540, 0.0
        %2557 = vadd.xlane.f32.xlu0 %v2556
        %v2558 = vpop.xlane.xlu0 %2557
        %v2559 = vsel %vm800, %v2541, 0.0
        %2560 = vadd.xlane.f32.xlu0 %v2559
        %v2561 = vpop.xlane.xlu0 %2560
        %v2562 = vsel %vm800, %v2542, 0.0
        %2563 = vadd.xlane.f32.xlu0 %v2562
        %v2564 = vpop.xlane.xlu0 %2563
        %v2565 = vsel %vm800, %v2543, 0.0
        %2566 = vadd.xlane.f32.xlu0 %v2565
        %v2567 = vpop.xlane.xlu0 %2566
        %v2568 = vadd.f32 %v2424, %v2546
        %v2569 = vadd.f32 %v2427, %v2549
        %v2570 = vadd.f32 %v2430, %v2552
        %v2571 = vadd.f32 %v2433, %v2555
        %v2572 = vadd.f32 %v2436, %v2558
        %v2573 = vadd.f32 %v2439, %v2561
        %v2574 = vadd.f32 %v2442, %v2564
        %v2575 = vadd.f32 %v2445, %v2567
        %2576 = vrot.lane.b32.xlu0 %v766, 112
        %v2577 = vpop.permute.xlu0 %2576
        %2578 = vrot.lane.b32.xlu0 %v677, 112
        %v2579 = vpop.permute.xlu0 %2578
        %v2588 = vlaneseq
        %v2589 = vshrl.u32 %v2588, 7
        %v2590 = vsub.s32 %v795, %v2589
        %v2591 = vrot.slane %v2568, %v2590
        %v2592 = vlaneseq
        %v2593 = vshrl.u32 %v2592, 7
        %v2594 = vsub.s32 %v795, %v2593
        %v2595 = vrot.slane %v2569, %v2594
        %v2596 = vlaneseq
        %v2597 = vshrl.u32 %v2596, 7
        %v2598 = vsub.s32 %v795, %v2597
        %v2599 = vrot.slane %v2570, %v2598
        %v2600 = vlaneseq
        %v2601 = vshrl.u32 %v2600, 7
        %v2602 = vsub.s32 %v795, %v2601
        %v2603 = vrot.slane %v2571, %v2602
        %v2604 = vlaneseq
        %v2605 = vshrl.u32 %v2604, 7
        %v2606 = vsub.s32 %v795, %v2605
        %v2607 = vrot.slane %v2572, %v2606
        %v2608 = vlaneseq
        %v2609 = vshrl.u32 %v2608, 7
        %v2610 = vsub.s32 %v795, %v2609
        %v2611 = vrot.slane %v2573, %v2610
        %v2612 = vlaneseq
        %v2613 = vshrl.u32 %v2612, 7
        %v2614 = vsub.s32 %v795, %v2613
        %v2615 = vrot.slane %v2574, %v2614
        %v2616 = vlaneseq
        %v2617 = vshrl.u32 %v2616, 7
        %v2618 = vsub.s32 %v795, %v2617
        %v2619 = vrot.slane %v2575, %v2618
        %v2620 = vsel %vm1242, %v2595, %v2591
        %v2621 = vsel %vm1244, %v2599, %v2620
        %v2622 = vsel %vm1246, %v2603, %v2621
        %v2623 = vsel %vm1248, %v2607, %v2622
        %v2624 = vsel %vm1250, %v2611, %v2623
        %v2625 = vsel %vm1252, %v2615, %v2624
        %v2626 = vsel %vm1254, %v2619, %v2625
        %v2628 = vsel %vm800, %v2577, 0
        %v2630 = vsel %vm800, %v2579, 0
        %2632 = vmatprep.subr.mxu0 0.0
        %2633 = vmatpush1.xpose.msra.mxu0 %v2630
        %2634 = vmatprep.subr.mxu0 0.0
        %2635 = vmatpush1.xpose.msra.mxu0 0.0
        %2636 = vmatprep.subr.mxu0 0.0
        %2637 = vmatpush1.xpose.msra.mxu0 0.0
        %2638 = vmatprep.subr.mxu0 0.0
        %2639 = vmatpush1.xpose.msra.mxu0 0.0
        %2640 = vmatprep.subr.mxu0 0.0
        %2641 = vmatpush1.xpose.msra.mxu0 0.0
        %2642 = vmatprep.subr.mxu0 0.0
        %2643 = vmatpush1.xpose.msra.mxu0 0.0
        %2644 = vmatprep.subr.mxu0 0.0
        %2645 = vmatpush1.xpose.msra.mxu0 0.0
        %2646 = vmatprep.subr.mxu0 0.0
        %2647 = vmatpush1.xpose.msra.mxu0 0.0
        %2648 = vmatprep.subr.mxu0 0.0
        %2649 = vmatpush1.xpose.msra.mxu0 0.0
        %2650 = vmatprep.subr.mxu0 0.0
        %2651 = vmatpush1.xpose.msra.mxu0 0.0
        %2652 = vmatprep.subr.mxu0 0.0
        %2653 = vmatpush1.xpose.msra.mxu0 0.0
        %2654 = vmatprep.subr.mxu0 0.0
        %2655 = vmatpush1.xpose.msra.mxu0 0.0
        %2656 = vmatprep.subr.mxu0 0.0
        %2657 = vmatpush1.xpose.msra.mxu0 0.0
        %2658 = vmatprep.subr.mxu0 0.0
        %2659 = vmatpush1.xpose.msra.mxu0 0.0
        %2660 = vmatprep.subr.mxu0 0.0
        %2661 = vmatpush1.xpose.msra.mxu0 0.0
        %2662 = vmatprep.subr.mxu0 0.0
        %2663 = vmatpush1.xpose.msra.mxu0 0.0
        %2664 = vmatprep.subr.mxu0 0.0
        %2665 = vmatpush1.xpose.msra.mxu0 0.0
        %2666 = vmatprep.subr.mxu0 0.0
        %2667 = vmatpush1.xpose.msra.mxu0 0.0
        %2668 = vmatprep.subr.mxu0 0.0
        %2669 = vmatpush1.xpose.msra.mxu0 0.0
        %2670 = vmatprep.subr.mxu0 0.0
        %2671 = vmatpush1.xpose.msra.mxu0 0.0
        %2672 = vmatprep.subr.mxu0 0.0
        %2673 = vmatpush1.xpose.msra.mxu0 0.0
        %2674 = vmatprep.subr.mxu0 0.0
        %2675 = vmatpush1.xpose.msra.mxu0 0.0
        %2676 = vmatprep.subr.mxu0 0.0
        %2677 = vmatpush1.xpose.msra.mxu0 0.0
        %2678 = vmatprep.subr.mxu0 0.0
        %2679 = vmatpush1.xpose.msra.mxu0 0.0
        %2680 = vmatprep.subr.mxu0 0.0
        %2681 = vmatpush1.xpose.msra.mxu0 0.0
        %2682 = vmatprep.subr.mxu0 0.0
        %2683 = vmatpush1.xpose.msra.mxu0 0.0
        %2684 = vmatprep.subr.mxu0 0.0
        %2685 = vmatpush1.xpose.msra.mxu0 0.0
        %2686 = vmatprep.subr.mxu0 0.0
        %2687 = vmatpush1.xpose.msra.mxu0 0.0
        %2688 = vmatprep.subr.mxu0 0.0
        %2689 = vmatpush1.xpose.msra.mxu0 0.0
        %2690 = vmatprep.subr.mxu0 0.0
        %2691 = vmatpush1.xpose.msra.mxu0 0.0
        %2692 = vmatprep.subr.mxu0 0.0
        %2693 = vmatpush1.xpose.msra.mxu0 0.0
        %2694 = vmatprep.subr.mxu0 0.0
        %2695 = vmatpush1.xpose.msra.mxu0 0.0
        %2696 = vmatprep.mubr.f32.mxu0 0.0
        %2697 = vmatmul.mubr.f32.gmra.mrb[0].mxu0 %v2628
        %v2698 = vpop.f32.mrb[0].mxu0
        %v2699 = vadd.f32 %v2626, %v2698
        %v2700 = vpop.f32.mrb[0].mxu0
        %2701 = vdwg.mxu0
        %v2702 = vsel %vm800, %v2699, -inf
        %2703 = vmax.xlane.f32.xlu0 %v2702
        %v2704 = vpop.xlane.xlu0 %2703
        %v2705 = vsub.f32 %v2699, %v2704
        %v2706 = vmul.f32 %v2705, 1.442695
        %v2707 = vpow.pop %v2706
        %v2708 = vsel %vm800, %v2707, 0.0
        %2709 = vadd.xlane.f32.xlu0 %v2708
        %v2710 = vpop.xlane.xlu0 %2709
        %v2711 = vrcp.pop %v2710
        %v2712 = vmul.f32 %v2707, %v2711
        %v2715 = vsel %vm800, %v2712, 0
        %2717 = vmatprep.subr.mxu0 0.0
        %2718 = vmatpush1.msra.mxu0 %v2579
        %2719 = vmatprep.subr.mxu0 0.0
        %2720 = vmatpush1.msra.mxu0 0.0
        %2721 = vmatprep.subr.mxu0 0.0
        %2722 = vmatpush1.msra.mxu0 0.0
        %2723 = vmatprep.subr.mxu0 0.0
        %2724 = vmatpush1.msra.mxu0 0.0
        %2725 = vmatprep.subr.mxu0 0.0
        %2726 = vmatpush1.msra.mxu0 0.0
        %2727 = vmatprep.subr.mxu0 0.0
        %2728 = vmatpush1.msra.mxu0 0.0
        %2729 = vmatprep.subr.mxu0 0.0
        %2730 = vmatpush1.msra.mxu0 0.0
        %2731 = vmatprep.subr.mxu0 0.0
        %2732 = vmatpush1.msra.mxu0 0.0
        %2733 = vmatprep.subr.mxu0 0.0
        %2734 = vmatpush1.msra.mxu0 0.0
        %2735 = vmatprep.subr.mxu0 0.0
        %2736 = vmatpush1.msra.mxu0 0.0
        %2737 = vmatprep.subr.mxu0 0.0
        %2738 = vmatpush1.msra.mxu0 0.0
        %2739 = vmatprep.subr.mxu0 0.0
        %2740 = vmatpush1.msra.mxu0 0.0
        %2741 = vmatprep.subr.mxu0 0.0
        %2742 = vmatpush1.msra.mxu0 0.0
        %2743 = vmatprep.subr.mxu0 0.0
        %2744 = vmatpush1.msra.mxu0 0.0
        %2745 = vmatprep.subr.mxu0 0.0
        %2746 = vmatpush1.msra.mxu0 0.0
        %2747 = vmatprep.subr.mxu0 0.0
        %2748 = vmatpush1.msra.mxu0 0.0
        %2749 = vmatprep.subr.mxu0 0.0
        %2750 = vmatpush1.msra.mxu0 0.0
        %2751 = vmatprep.subr.mxu0 0.0
        %2752 = vmatpush1.msra.mxu0 0.0
        %2753 = vmatprep.subr.mxu0 0.0
        %2754 = vmatpush1.msra.mxu0 0.0
        %2755 = vmatprep.subr.mxu0 0.0
        %2756 = vmatpush1.msra.mxu0 0.0
        %2757 = vmatprep.subr.mxu0 0.0
        %2758 = vmatpush1.msra.mxu0 0.0
        %2759 = vmatprep.subr.mxu0 0.0
        %2760 = vmatpush1.msra.mxu0 0.0
        %2761 = vmatprep.subr.mxu0 0.0
        %2762 = vmatpush1.msra.mxu0 0.0
        %2763 = vmatprep.subr.mxu0 0.0
        %2764 = vmatpush1.msra.mxu0 0.0
        %2765 = vmatprep.subr.mxu0 0.0
        %2766 = vmatpush1.msra.mxu0 0.0
        %2767 = vmatprep.subr.mxu0 0.0
        %2768 = vmatpush1.msra.mxu0 0.0
        %2769 = vmatprep.subr.mxu0 0.0
        %2770 = vmatpush1.msra.mxu0 0.0
        %2771 = vmatprep.subr.mxu0 0.0
        %2772 = vmatpush1.msra.mxu0 0.0
        %2773 = vmatprep.subr.mxu0 0.0
        %2774 = vmatpush1.msra.mxu0 0.0
        %2775 = vmatprep.subr.mxu0 0.0
        %2776 = vmatpush1.msra.mxu0 0.0
        %2777 = vmatprep.subr.mxu0 0.0
        %2778 = vmatpush1.msra.mxu0 0.0
        %2779 = vmatprep.subr.mxu0 0.0
        %2780 = vmatpush1.msra.mxu0 0.0
        %2781 = vmatprep.mubr.f32.mxu0 0.0
        %2782 = vmatmul.mubr.f32.gmra.mrb[0].mxu0 %v2715
        %v2783 = vpop.f32.mrb[0].mxu0
        %v2784 = vadd.f32 0.0, %v2783
        %v2785 = vpop.f32.mrb[0].mxu0
        %2786 = vdwg.mxu0
        %v2787 = vld [vmem:[%s11 + $0x10] sm:$0xff]
        %v2789 = vsel %vm800, %v2784, 0
        %2791 = vmatprep.subr.mxu0 0.0
        %2792 = vmatpush1.msra.mxu0 %v2787
        %2793 = vmatprep.subr.mxu0 0.0
        %2794 = vmatpush1.msra.mxu0 0.0
        %2795 = vmatprep.subr.mxu0 0.0
        %2796 = vmatpush1.msra.mxu0 0.0
        %2797 = vmatprep.subr.mxu0 0.0
        %2798 = vmatpush1.msra.mxu0 0.0
        %2799 = vmatprep.subr.mxu0 0.0
        %2800 = vmatpush1.msra.mxu0 0.0
        %2801 = vmatprep.subr.mxu0 0.0
        %2802 = vmatpush1.msra.mxu0 0.0
        %2803 = vmatprep.subr.mxu0 0.0
        %2804 = vmatpush1.msra.mxu0 0.0
        %2805 = vmatprep.subr.mxu0 0.0
        %2806 = vmatpush1.msra.mxu0 0.0
        %2807 = vmatprep.subr.mxu0 0.0
        %2808 = vmatpush1.msra.mxu0 0.0
        %2809 = vmatprep.subr.mxu0 0.0
        %2810 = vmatpush1.msra.mxu0 0.0
        %2811 = vmatprep.subr.mxu0 0.0
        %2812 = vmatpush1.msra.mxu0 0.0
        %2813 = vmatprep.subr.mxu0 0.0
        %2814 = vmatpush1.msra.mxu0 0.0
        %2815 = vmatprep.subr.mxu0 0.0
        %2816 = vmatpush1.msra.mxu0 0.0
        %2817 = vmatprep.subr.mxu0 0.0
        %2818 = vmatpush1.msra.mxu0 0.0
        %2819 = vmatprep.subr.mxu0 0.0
        %2820 = vmatpush1.msra.mxu0 0.0
        %2821 = vmatprep.subr.mxu0 0.0
        %2822 = vmatpush1.msra.mxu0 0.0
        %2823 = vmatprep.subr.mxu0 0.0
        %2824 = vmatpush1.msra.mxu0 0.0
        %2825 = vmatprep.subr.mxu0 0.0
        %2826 = vmatpush1.msra.mxu0 0.0
        %2827 = vmatprep.subr.mxu0 0.0
        %2828 = vmatpush1.msra.mxu0 0.0
        %2829 = vmatprep.subr.mxu0 0.0
        %2830 = vmatpush1.msra.mxu0 0.0
        %2831 = vmatprep.subr.mxu0 0.0
        %2832 = vmatpush1.msra.mxu0 0.0
        %2833 = vmatprep.subr.mxu0 0.0
        %2834 = vmatpush1.msra.mxu0 0.0
        %2835 = vmatprep.subr.mxu0 0.0
        %2836 = vmatpush1.msra.mxu0 0.0
        %2837 = vmatprep.subr.mxu0 0.0
        %2838 = vmatpush1.msra.mxu0 0.0
        %2839 = vmatprep.subr.mxu0 0.0
        %2840 = vmatpush1.msra.mxu0 0.0
        %2841 = vmatprep.subr.mxu0 0.0
        %2842 = vmatpush1.msra.mxu0 0.0
        %2843 = vmatprep.subr.mxu0 0.0
        %2844 = vmatpush1.msra.mxu0 0.0
        %2845 = vmatprep.subr.mxu0 0.0
        %2846 = vmatpush1.msra.mxu0 0.0
        %2847 = vmatprep.subr.mxu0 0.0
        %2848 = vmatpush1.msra.mxu0 0.0
        %2849 = vmatprep.subr.mxu0 0.0
        %2850 = vmatpush1.msra.mxu0 0.0
        %2851 = vmatprep.subr.mxu0 0.0
        %2852 = vmatpush1.msra.mxu0 0.0
        %2853 = vmatprep.subr.mxu0 0.0
        %2854 = vmatpush1.msra.mxu0 0.0
        %2855 = vmatprep.mubr.f32.mxu0 0.0
        %2856 = vmatmul.mubr.f32.gmra.mrb[0].mxu0 %v2789
        %v2857 = vpop.f32.mrb[0].mxu0
        %v2858 = vadd.f32 0.0, %v2857
        %v2859 = vpop.f32.mrb[0].mxu0
        %2860 = vdwg.mxu0
        %v2861 = vadd.f32 %v2173, %v2858
        %2862 = vrot.lane.b32.xlu0 %v775, 104
        %v2863 = vpop.permute.xlu0 %2862
        %2864 = vrot.lane.b32.xlu0 %v755, 104
        %v2865 = vpop.permute.xlu0 %2864
        %v2866 = vsel %vm800, %v2863, 0
        %v2868 = vsel %vm800, %v2865, 0
        %2870 = vmatprep.subr.mxu0 0.0
        %2871 = vmatpush1.xpose.msra.mxu0 %v2868
        %2872 = vmatprep.subr.mxu0 0.0
        %2873 = vmatpush1.xpose.msra.mxu0 0.0
        %2874 = vmatprep.subr.mxu0 0.0
        %2875 = vmatpush1.xpose.msra.mxu0 0.0
        %2876 = vmatprep.subr.mxu0 0.0
        %2877 = vmatpush1.xpose.msra.mxu0 0.0
        %2878 = vmatprep.subr.mxu0 0.0
        %2879 = vmatpush1.xpose.msra.mxu0 0.0
        %2880 = vmatprep.subr.mxu0 0.0
        %2881 = vmatpush1.xpose.msra.mxu0 0.0
        %2882 = vmatprep.subr.mxu0 0.0
        %2883 = vmatpush1.xpose.msra.mxu0 0.0
        %2884 = vmatprep.subr.mxu0 0.0
        %2885 = vmatpush1.xpose.msra.mxu0 0.0
        %2886 = vmatprep.subr.mxu0 0.0
        %2887 = vmatpush1.xpose.msra.mxu0 0.0
        %2888 = vmatprep.subr.mxu0 0.0
        %2889 = vmatpush1.xpose.msra.mxu0 0.0
        %2890 = vmatprep.subr.mxu0 0.0
        %2891 = vmatpush1.xpose.msra.mxu0 0.0
        %2892 = vmatprep.subr.mxu0 0.0
        %2893 = vmatpush1.xpose.msra.mxu0 0.0
        %2894 = vmatprep.subr.mxu0 0.0
        %2895 = vmatpush1.xpose.msra.mxu0 0.0
        %2896 = vmatprep.subr.mxu0 0.0
        %2897 = vmatpush1.xpose.msra.mxu0 0.0
        %2898 = vmatprep.subr.mxu0 0.0
        %2899 = vmatpush1.xpose.msra.mxu0 0.0
        %2900 = vmatprep.subr.mxu0 0.0
        %2901 = vmatpush1.xpose.msra.mxu0 0.0
        %2902 = vmatprep.subr.mxu0 0.0
        %2903 = vmatpush1.xpose.msra.mxu0 0.0
        %2904 = vmatprep.subr.mxu0 0.0
        %2905 = vmatpush1.xpose.msra.mxu0 0.0
        %2906 = vmatprep.subr.mxu0 0.0
        %2907 = vmatpush1.xpose.msra.mxu0 0.0
        %2908 = vmatprep.subr.mxu0 0.0
        %2909 = vmatpush1.xpose.msra.mxu0 0.0
        %2910 = vmatprep.subr.mxu0 0.0
        %2911 = vmatpush1.xpose.msra.mxu0 0.0
        %2912 = vmatprep.subr.mxu0 0.0
        %2913 = vmatpush1.xpose.msra.mxu0 0.0
        %2914 = vmatprep.subr.mxu0 0.0
        %2915 = vmatpush1.xpose.msra.mxu0 0.0
        %2916 = vmatprep.subr.mxu0 0.0
        %2917 = vmatpush1.xpose.msra.mxu0 0.0
        %2918 = vmatprep.subr.mxu0 0.0
        %2919 = vmatpush1.xpose.msra.mxu0 0.0
        %2920 = vmatprep.subr.mxu0 0.0
        %2921 = vmatpush1.xpose.msra.mxu0 0.0
        %2922 = vmatprep.subr.mxu0 0.0
        %2923 = vmatpush1.xpose.msra.mxu0 0.0
        %2924 = vmatprep.subr.mxu0 0.0
        %2925 = vmatpush1.xpose.msra.mxu0 0.0
        %2926 = vmatprep.subr.mxu0 0.0
        %2927 = vmatpush1.xpose.msra.mxu0 0.0
        %2928 = vmatprep.subr.mxu0 0.0
        %2929 = vmatpush1.xpose.msra.mxu0 0.0
        %2930 = vmatprep.subr.mxu0 0.0
        %2931 = vmatpush1.xpose.msra.mxu0 0.0
        %2932 = vmatprep.subr.mxu0 0.0
        %2933 = vmatpush1.xpose.msra.mxu0 0.0
        %2934 = vmatprep.mubr.f32.mxu0 0.0
        %2935 = vmatmul.mubr.f32.gmra.mrb[0].mxu0 %v2866
        %v2936 = vpop.f32.mrb[0].mxu0
        %v2937 = vadd.f32 0.0, %v2936
        %v2938 = vpop.f32.mrb[0].mxu0
        %2939 = vdwg.mxu0
        %2940 = vmatprep.subr.mxu0 0.0
        %2941 = vmatpush1.msra.mxu0 %v2937
        %2942 = vmatprep.subr.mxu0 0.0
        %2943 = vmatpush1.msra.mxu0 0.0
        %2944 = vmatprep.subr.mxu0 0.0
        %2945 = vmatpush1.msra.mxu0 0.0
        %2946 = vmatprep.subr.mxu0 0.0
        %2947 = vmatpush1.msra.mxu0 0.0
        %2948 = vmatprep.subr.mxu0 0.0
        %2949 = vmatpush1.msra.mxu0 0.0
        %2950 = vmatprep.subr.mxu0 0.0
        %2951 = vmatpush1.msra.mxu0 0.0
        %2952 = vmatprep.subr.mxu0 0.0
        %2953 = vmatpush1.msra.mxu0 0.0
        %2954 = vmatprep.subr.mxu0 0.0
        %2955 = vmatpush1.msra.mxu0 0.0
        %2956 = vmatprep.subr.mxu0 0.0
        %2957 = vmatpush1.msra.mxu0 0.0
        %2958 = vmatprep.subr.mxu0 0.0
        %2959 = vmatpush1.msra.mxu0 0.0
        %2960 = vmatprep.subr.mxu0 0.0
        %2961 = vmatpush1.msra.mxu0 0.0
        %2962 = vmatprep.subr.mxu0 0.0
        %2963 = vmatpush1.msra.mxu0 0.0
        %2964 = vmatprep.subr.mxu0 0.0
        %2965 = vmatpush1.msra.mxu0 0.0
        %2966 = vmatprep.subr.mxu0 0.0
        %2967 = vmatpush1.msra.mxu0 0.0
        %2968 = vmatprep.subr.mxu0 0.0
        %2969 = vmatpush1.msra.mxu0 0.0
        %2970 = vmatprep.subr.mxu0 0.0
        %2971 = vmatpush1.msra.mxu0 0.0
        %2972 = vmatprep.subr.mxu0 0.0
        %2973 = vmatpush1.msra.mxu0 0.0
        %2974 = vmatprep.subr.mxu0 0.0
        %2975 = vmatpush1.msra.mxu0 0.0
        %2976 = vmatprep.subr.mxu0 0.0
        %2977 = vmatpush1.msra.mxu0 0.0
        %2978 = vmatprep.subr.mxu0 0.0
        %2979 = vmatpush1.msra.mxu0 0.0
        %2980 = vmatprep.subr.mxu0 0.0
        %2981 = vmatpush1.msra.mxu0 0.0
        %2982 = vmatprep.subr.mxu0 0.0
        %2983 = vmatpush1.msra.mxu0 0.0
        %2984 = vmatprep.subr.mxu0 0.0
        %2985 = vmatpush1.msra.mxu0 0.0
        %2986 = vmatprep.subr.mxu0 0.0
        %2987 = vmatpush1.msra.mxu0 0.0
        %2988 = vmatprep.subr.mxu0 0.0
        %2989 = vmatpush1.msra.mxu0 0.0
        %2990 = vmatprep.subr.mxu0 0.0
        %2991 = vmatpush1.msra.mxu0 0.0
        %2992 = vmatprep.subr.mxu0 0.0
        %2993 = vmatpush1.msra.mxu0 0.0
        %2994 = vmatprep.subr.mxu0 0.0
        %2995 = vmatpush1.msra.mxu0 0.0
        %2996 = vmatprep.subr.mxu0 0.0
        %2997 = vmatpush1.msra.mxu0 0.0
        %2998 = vmatprep.subr.mxu0 0.0
        %2999 = vmatpush1.msra.mxu0 0.0
        %3000 = vmatprep.subr.mxu0 0.0
        %3001 = vmatpush1.msra.mxu0 0.0
        %3002 = vmatprep.subr.mxu0 0.0
        %3003 = vmatpush1.msra.mxu0 0.0
        %3004 = vmatprep.mubr.f32.mxu0 0.0
        %3005 = vmatmul.mubr.f32.gmra.mrb[0].mxu0 %v878
        %v3006 = vpop.f32.mrb[0].mxu0
        %v3007 = vadd.f32 0.0, %v3006
        %v3008 = vpop.f32.mrb[0].mxu0
        %3009 = vdwg.mxu0
        %v3011 = vcombine.high %v2937, %v2937
        %v3013 = vunpack.c.l.s4 1966171168
        %v3014 = vunpack.c.0.s8 %v3013
        %v3015 = vlaneseq
        %v3016 = vshrl.u32 %v3015, 7
        %v3017 = vsub.s32 %v3014, %v3016
        %v3018 = vrot.slane %v2937, %v3017
        %v3020 = vunpack.c.l.s4 1966171168
        %v3021 = vunpack.c.0.s8 %v3020
        %v3022 = vlaneseq
        %v3023 = vshrl.u32 %v3022, 7
        %v3024 = vsub.s32 %v3021, %v3023
        %v3025 = vrot.slane %v3011, %v3024
        %v3026 = vcombine.high %v3018, %v3018
        %v3027 = vcombine.high %v3025, %v3025
        %v3029 = vunpack.c.l.s4 1966171168
        %v3030 = vunpack.c.0.s8 %v3029
        %v3031 = vlaneseq
        %v3032 = vshrl.u32 %v3031, 7
        %v3033 = vsub.s32 %v3030, %v3032
        %v3034 = vrot.slane %v3018, %v3033
        %v3036 = vunpack.c.l.s4 1966171168
        %v3037 = vunpack.c.0.s8 %v3036
        %v3038 = vlaneseq
        %v3039 = vshrl.u32 %v3038, 7
        %v3040 = vsub.s32 %v3037, %v3039
        %v3041 = vrot.slane %v3025, %v3040
        %v3043 = vunpack.c.l.s4 1966171168
        %v3044 = vunpack.c.0.s8 %v3043
        %v3045 = vlaneseq
        %v3046 = vshrl.u32 %v3045, 7
        %v3047 = vsub.s32 %v3044, %v3046
        %v3048 = vrot.slane %v3026, %v3047
        %v3050 = vunpack.c.l.s4 1966171168
        %v3051 = vunpack.c.0.s8 %v3050
        %v3052 = vlaneseq
        %v3053 = vshrl.u32 %v3052, 7
        %v3054 = vsub.s32 %v3051, %v3053
        %v3055 = vrot.slane %v3027, %v3054
        %v3056 = vcombine.high %v3034, %v3034
        %v3057 = vcombine.high %v3041, %v3041
        %v3058 = vcombine.high %v3048, %v3048
        %v3059 = vcombine.high %v3055, %v3055
        %v3060 = vlaneseq
        %v3061 = vshrl.u32 %v3060, 7
        %v3062 = vsub.s32 0, %v3061
        %v3063 = vrot.slane %v3034, %v3062
        %v3064 = vlaneseq
        %v3065 = vshrl.u32 %v3064, 7
        %v3066 = vsub.s32 0, %v3065
        %v3067 = vrot.slane %v3048, %v3066
        %v3068 = vlaneseq
        %v3069 = vshrl.u32 %v3068, 7
        %v3070 = vsub.s32 0, %v3069
        %v3071 = vrot.slane %v3056, %v3070
        %v3072 = vlaneseq
        %v3073 = vshrl.u32 %v3072, 7
        %v3074 = vsub.s32 0, %v3073
        %v3075 = vrot.slane %v3058, %v3074
        %v3076 = vlaneseq
        %v3077 = vshrl.u32 %v3076, 7
        %v3078 = vsub.s32 0, %v3077
        %v3079 = vrot.slane %v3041, %v3078
        %v3080 = vlaneseq
        %v3081 = vshrl.u32 %v3080, 7
        %v3082 = vsub.s32 0, %v3081
        %v3083 = vrot.slane %v3055, %v3082
        %v3084 = vlaneseq
        %v3085 = vshrl.u32 %v3084, 7
        %v3086 = vsub.s32 0, %v3085
        %v3087 = vrot.slane %v3057, %v3086
        %v3088 = vlaneseq
        %v3089 = vshrl.u32 %v3088, 7
        %v3090 = vsub.s32 0, %v3089
        %v3091 = vrot.slane %v3059, %v3090
        %v3100 = vmul.f32 %v3063, %v776
        %v3101 = vmul.f32 %v3067, %v777
        %v3102 = vmul.f32 %v3071, %v778
        %v3103 = vmul.f32 %v3075, %v779
        %v3104 = vmul.f32 %v3079, %v780
        %v3105 = vmul.f32 %v3083, %v781
        %v3106 = vmul.f32 %v3087, %v782
        %v3107 = vmul.f32 %v3091, %v783
        %v3108 = vsel %vm800, %v3100, 0.0
        %3109 = vadd.xlane.f32.xlu0 %v3108
        %v3110 = vpop.xlane.xlu0 %3109
        %v3111 = vsel %vm800, %v3101, 0.0
        %3112 = vadd.xlane.f32.xlu0 %v3111
        %v3113 = vpop.xlane.xlu0 %3112
        %v3114 = vsel %vm800, %v3102, 0.0
        %3115 = vadd.xlane.f32.xlu0 %v3114
        %v3116 = vpop.xlane.xlu0 %3115
        %v3117 = vsel %vm800, %v3103, 0.0
        %3118 = vadd.xlane.f32.xlu0 %v3117
        %v3119 = vpop.xlane.xlu0 %3118
        %v3120 = vsel %vm800, %v3104, 0.0
        %3121 = vadd.xlane.f32.xlu0 %v3120
        %v3122 = vpop.xlane.xlu0 %3121
        %v3123 = vsel %vm800, %v3105, 0.0
        %3124 = vadd.xlane.f32.xlu0 %v3123
        %v3125 = vpop.xlane.xlu0 %3124
        %v3126 = vsel %vm800, %v3106, 0.0
        %3127 = vadd.xlane.f32.xlu0 %v3126
        %v3128 = vpop.xlane.xlu0 %3127
        %v3129 = vsel %vm800, %v3107, 0.0
        %3130 = vadd.xlane.f32.xlu0 %v3129
        %v3131 = vpop.xlane.xlu0 %3130
        %v3133 = vcombine.high %v3007, %v3007
        %v3135 = vunpack.c.l.s4 1966171168
        %v3136 = vunpack.c.0.s8 %v3135
        %v3137 = vlaneseq
        %v3138 = vshrl.u32 %v3137, 7
        %v3139 = vsub.s32 %v3136, %v3138
        %v3140 = vrot.slane %v3007, %v3139
        %v3142 = vunpack.c.l.s4 1966171168
        %v3143 = vunpack.c.0.s8 %v3142
        %v3144 = vlaneseq
        %v3145 = vshrl.u32 %v3144, 7
        %v3146 = vsub.s32 %v3143, %v3145
        %v3147 = vrot.slane %v3133, %v3146
        %v3148 = vcombine.high %v3140, %v3140
        %v3149 = vcombine.high %v3147, %v3147
        %v3151 = vunpack.c.l.s4 1966171168
        %v3152 = vunpack.c.0.s8 %v3151
        %v3153 = vlaneseq
        %v3154 = vshrl.u32 %v3153, 7
        %v3155 = vsub.s32 %v3152, %v3154
        %v3156 = vrot.slane %v3140, %v3155
        %v3158 = vunpack.c.l.s4 1966171168
        %v3159 = vunpack.c.0.s8 %v3158
        %v3160 = vlaneseq
        %v3161 = vshrl.u32 %v3160, 7
        %v3162 = vsub.s32 %v3159, %v3161
        %v3163 = vrot.slane %v3147, %v3162
        %v3165 = vunpack.c.l.s4 1966171168
        %v3166 = vunpack.c.0.s8 %v3165
        %v3167 = vlaneseq
        %v3168 = vshrl.u32 %v3167, 7
        %v3169 = vsub.s32 %v3166, %v3168
        %v3170 = vrot.slane %v3148, %v3169
        %v3172 = vunpack.c.l.s4 1966171168
        %v3173 = vunpack.c.0.s8 %v3172
        %v3174 = vlaneseq
        %v3175 = vshrl.u32 %v3174, 7
        %v3176 = vsub.s32 %v3173, %v3175
        %v3177 = vrot.slane %v3149, %v3176
        %v3178 = vcombine.high %v3156, %v3156
        %v3179 = vcombine.high %v3163, %v3163
        %v3180 = vcombine.high %v3170, %v3170
        %v3181 = vcombine.high %v3177, %v3177
        %v3182 = vlaneseq
        %v3183 = vshrl.u32 %v3182, 7
        %v3184 = vsub.s32 0, %v3183
        %v3185 = vrot.slane %v3156, %v3184
        %v3186 = vlaneseq
        %v3187 = vshrl.u32 %v3186, 7
        %v3188 = vsub.s32 0, %v3187
        %v3189 = vrot.slane %v3170, %v3188
        %v3190 = vlaneseq
        %v3191 = vshrl.u32 %v3190, 7
        %v3192 = vsub.s32 0, %v3191
        %v3193 = vrot.slane %v3178, %v3192
        %v3194 = vlaneseq
        %v3195 = vshrl.u32 %v3194, 7
        %v3196 = vsub.s32 0, %v3195
        %v3197 = vrot.slane %v3180, %v3196
        %v3198 = vlaneseq
        %v3199 = vshrl.u32 %v3198, 7
        %v3200 = vsub.s32 0, %v3199
        %v3201 = vrot.slane %v3163, %v3200
        %v3202 = vlaneseq
        %v3203 = vshrl.u32 %v3202, 7
        %v3204 = vsub.s32 0, %v3203
        %v3205 = vrot.slane %v3177, %v3204
        %v3206 = vlaneseq
        %v3207 = vshrl.u32 %v3206, 7
        %v3208 = vsub.s32 0, %v3207
        %v3209 = vrot.slane %v3179, %v3208
        %v3210 = vlaneseq
        %v3211 = vshrl.u32 %v3210, 7
        %v3212 = vsub.s32 0, %v3211
        %v3213 = vrot.slane %v3181, %v3212
        %v3222 = vmul.f32 %v3185, %v784
        %v3223 = vmul.f32 %v3189, %v785
        %v3224 = vmul.f32 %v3193, %v786
        %v3225 = vmul.f32 %v3197, %v787
        %v3226 = vmul.f32 %v3201, %v788
        %v3227 = vmul.f32 %v3205, %v789
        %v3228 = vmul.f32 %v3209, %v790
        %v3229 = vmul.f32 %v3213, %v791
        %v3230 = vsel %vm800, %v3222, 0.0
        %3231 = vadd.xlane.f32.xlu0 %v3230
        %v3232 = vpop.xlane.xlu0 %3231
        %v3233 = vsel %vm800, %v3223, 0.0
        %3234 = vadd.xlane.f32.xlu0 %v3233
        %v3235 = vpop.xlane.xlu0 %3234
        %v3236 = vsel %vm800, %v3224, 0.0
        %3237 = vadd.xlane.f32.xlu0 %v3236
        %v3238 = vpop.xlane.xlu0 %3237
        %v3239 = vsel %vm800, %v3225, 0.0
        %3240 = vadd.xlane.f32.xlu0 %v3239
        %v3241 = vpop.xlane.xlu0 %3240
        %v3242 = vsel %vm800, %v3226, 0.0
        %3243 = vadd.xlane.f32.xlu0 %v3242
        %v3244 = vpop.xlane.xlu0 %3243
        %v3245 = vsel %vm800, %v3227, 0.0
        %3246 = vadd.xlane.f32.xlu0 %v3245
        %v3247 = vpop.xlane.xlu0 %3246
        %v3248 = vsel %vm800, %v3228, 0.0
        %3249 = vadd.xlane.f32.xlu0 %v3248
        %v3250 = vpop.xlane.xlu0 %3249
        %v3251 = vsel %vm800, %v3229, 0.0
        %3252 = vadd.xlane.f32.xlu0 %v3251
        %v3253 = vpop.xlane.xlu0 %3252
        %v3254 = vadd.f32 %v3110, %v3232
        %v3255 = vadd.f32 %v3113, %v3235
        %v3256 = vadd.f32 %v3116, %v3238
        %v3257 = vadd.f32 %v3119, %v3241
        %v3258 = vadd.f32 %v3122, %v3244
        %v3259 = vadd.f32 %v3125, %v3247
        %v3260 = vadd.f32 %v3128, %v3250
        %v3261 = vadd.f32 %v3131, %v3253
        %3262 = vrot.lane.b32.xlu0 %v766, 104
        %v3263 = vpop.permute.xlu0 %3262
        %3264 = vrot.lane.b32.xlu0 %v677, 104
        %v3265 = vpop.permute.xlu0 %3264
        %v3274 = vlaneseq
        %v3275 = vshrl.u32 %v3274, 7
        %v3276 = vsub.s32 %v795, %v3275
        %v3277 = vrot.slane %v3254, %v3276
        %v3278 = vlaneseq
        %v3279 = vshrl.u32 %v3278, 7
        %v3280 = vsub.s32 %v795, %v3279
        %v3281 = vrot.slane %v3255, %v3280
        %v3282 = vlaneseq
        %v3283 = vshrl.u32 %v3282, 7
        %v3284 = vsub.s32 %v795, %v3283
        %v3285 = vrot.slane %v3256, %v3284
        %v3286 = vlaneseq
        %v3287 = vshrl.u32 %v3286, 7
        %v3288 = vsub.s32 %v795, %v3287
        %v3289 = vrot.slane %v3257, %v3288
        %v3290 = vlaneseq
        %v3291 = vshrl.u32 %v3290, 7
        %v3292 = vsub.s32 %v795, %v3291
        %v3293 = vrot.slane %v3258, %v3292
        %v3294 = vlaneseq
        %v3295 = vshrl.u32 %v3294, 7
        %v3296 = vsub.s32 %v795, %v3295
        %v3297 = vrot.slane %v3259, %v3296
        %v3298 = vlaneseq
        %v3299 = vshrl.u32 %v3298, 7
        %v3300 = vsub.s32 %v795, %v3299
        %v3301 = vrot.slane %v3260, %v3300
        %v3302 = vlaneseq
        %v3303 = vshrl.u32 %v3302, 7
        %v3304 = vsub.s32 %v795, %v3303
        %v3305 = vrot.slane %v3261, %v3304
        %v3306 = vsel %vm1242, %v3281, %v3277
        %v3307 = vsel %vm1244, %v3285, %v3306
        %v3308 = vsel %vm1246, %v3289, %v3307
        %v3309 = vsel %vm1248, %v3293, %v3308
        %v3310 = vsel %vm1250, %v3297, %v3309
        %v3311 = vsel %vm1252, %v3301, %v3310
        %v3312 = vsel %vm1254, %v3305, %v3311
        %v3314 = vsel %vm800, %v3263, 0
        %v3316 = vsel %vm800, %v3265, 0
        %3318 = vmatprep.subr.mxu0 0.0
        %3319 = vmatpush1.xpose.msra.mxu0 %v3316
        %3320 = vmatprep.subr.mxu0 0.0
        %3321 = vmatpush1.xpose.msra.mxu0 0.0
        %3322 = vmatprep.subr.mxu0 0.0
        %3323 = vmatpush1.xpose.msra.mxu0 0.0
        %3324 = vmatprep.subr.mxu0 0.0
        %3325 = vmatpush1.xpose.msra.mxu0 0.0
        %3326 = vmatprep.subr.mxu0 0.0
        %3327 = vmatpush1.xpose.msra.mxu0 0.0
        %3328 = vmatprep.subr.mxu0 0.0
        %3329 = vmatpush1.xpose.msra.mxu0 0.0
        %3330 = vmatprep.subr.mxu0 0.0
        %3331 = vmatpush1.xpose.msra.mxu0 0.0
        %3332 = vmatprep.subr.mxu0 0.0
        %3333 = vmatpush1.xpose.msra.mxu0 0.0
        %3334 = vmatprep.subr.mxu0 0.0
        %3335 = vmatpush1.xpose.msra.mxu0 0.0
        %3336 = vmatprep.subr.mxu0 0.0
        %3337 = vmatpush1.xpose.msra.mxu0 0.0
        %3338 = vmatprep.subr.mxu0 0.0
        %3339 = vmatpush1.xpose.msra.mxu0 0.0
        %3340 = vmatprep.subr.mxu0 0.0
        %3341 = vmatpush1.xpose.msra.mxu0 0.0
        %3342 = vmatprep.subr.mxu0 0.0
        %3343 = vmatpush1.xpose.msra.mxu0 0.0
        %3344 = vmatprep.subr.mxu0 0.0
        %3345 = vmatpush1.xpose.msra.mxu0 0.0
        %3346 = vmatprep.subr.mxu0 0.0
        %3347 = vmatpush1.xpose.msra.mxu0 0.0
        %3348 = vmatprep.subr.mxu0 0.0
        %3349 = vmatpush1.xpose.msra.mxu0 0.0
        %3350 = vmatprep.subr.mxu0 0.0
        %3351 = vmatpush1.xpose.msra.mxu0 0.0
        %3352 = vmatprep.subr.mxu0 0.0
        %3353 = vmatpush1.xpose.msra.mxu0 0.0
        %3354 = vmatprep.subr.mxu0 0.0
        %3355 = vmatpush1.xpose.msra.mxu0 0.0
        %3356 = vmatprep.subr.mxu0 0.0
        %3357 = vmatpush1.xpose.msra.mxu0 0.0
        %3358 = vmatprep.subr.mxu0 0.0
        %3359 = vmatpush1.xpose.msra.mxu0 0.0
        %3360 = vmatprep.subr.mxu0 0.0
        %3361 = vmatpush1.xpose.msra.mxu0 0.0
        %3362 = vmatprep.subr.mxu0 0.0
        %3363 = vmatpush1.xpose.msra.mxu0 0.0
        %3364 = vmatprep.subr.mxu0 0.0
        %3365 = vmatpush1.xpose.msra.mxu0 0.0
        %3366 = vmatprep.subr.mxu0 0.0
        %3367 = vmatpush1.xpose.msra.mxu0 0.0
        %3368 = vmatprep.subr.mxu0 0.0
        %3369 = vmatpush1.xpose.msra.mxu0 0.0
        %3370 = vmatprep.subr.mxu0 0.0
        %3371 = vmatpush1.xpose.msra.mxu0 0.0
        %3372 = vmatprep.subr.mxu0 0.0
        %3373 = vmatpush1.xpose.msra.mxu0 0.0
        %3374 = vmatprep.subr.mxu0 0.0
        %3375 = vmatpush1.xpose.msra.mxu0 0.0
        %3376 = vmatprep.subr.mxu0 0.0
        %3377 = vmatpush1.xpose.msra.mxu0 0.0
        %3378 = vmatprep.subr.mxu0 0.0
        %3379 = vmatpush1.xpose.msra.mxu0 0.0
        %3380 = vmatprep.subr.mxu0 0.0
        %3381 = vmatpush1.xpose.msra.mxu0 0.0
        %3382 = vmatprep.mubr.f32.mxu0 0.0
        %3383 = vmatmul.mubr.f32.gmra.mrb[0].mxu0 %v3314
        %v3384 = vpop.f32.mrb[0].mxu0
        %v3385 = vadd.f32 %v3312, %v3384
        %v3386 = vpop.f32.mrb[0].mxu0
        %3387 = vdwg.mxu0
        %v3388 = vsel %vm800, %v3385, -inf
        %3389 = vmax.xlane.f32.xlu0 %v3388
        %v3390 = vpop.xlane.xlu0 %3389
        %v3391 = vsub.f32 %v3385, %v3390
        %v3392 = vmul.f32 %v3391, 1.442695
        %v3393 = vpow.pop %v3392
        %v3394 = vsel %vm800, %v3393, 0.0
        %3395 = vadd.xlane.f32.xlu0 %v3394
        %v3396 = vpop.xlane.xlu0 %3395
        %v3397 = vrcp.pop %v3396
        %v3398 = vmul.f32 %v3393, %v3397
        %v3401 = vsel %vm800, %v3398, 0
        %3403 = vmatprep.subr.mxu0 0.0
        %3404 = vmatpush1.msra.mxu0 %v3265
        %3405 = vmatprep.subr.mxu0 0.0
        %3406 = vmatpush1.msra.mxu0 0.0
        %3407 = vmatprep.subr.mxu0 0.0
        %3408 = vmatpush1.msra.mxu0 0.0
        %3409 = vmatprep.subr.mxu0 0.0
        %3410 = vmatpush1.msra.mxu0 0.0
        %3411 = vmatprep.subr.mxu0 0.0
        %3412 = vmatpush1.msra.mxu0 0.0
        %3413 = vmatprep.subr.mxu0 0.0
        %3414 = vmatpush1.msra.mxu0 0.0
        %3415 = vmatprep.subr.mxu0 0.0
        %3416 = vmatpush1.msra.mxu0 0.0
        %3417 = vmatprep.subr.mxu0 0.0
        %3418 = vmatpush1.msra.mxu0 0.0
        %3419 = vmatprep.subr.mxu0 0.0
        %3420 = vmatpush1.msra.mxu0 0.0
        %3421 = vmatprep.subr.mxu0 0.0
        %3422 = vmatpush1.msra.mxu0 0.0
        %3423 = vmatprep.subr.mxu0 0.0
        %3424 = vmatpush1.msra.mxu0 0.0
        %3425 = vmatprep.subr.mxu0 0.0
        %3426 = vmatpush1.msra.mxu0 0.0
        %3427 = vmatprep.subr.mxu0 0.0
        %3428 = vmatpush1.msra.mxu0 0.0
        %3429 = vmatprep.subr.mxu0 0.0
        %3430 = vmatpush1.msra.mxu0 0.0
        %3431 = vmatprep.subr.mxu0 0.0
        %3432 = vmatpush1.msra.mxu0 0.0
        %3433 = vmatprep.subr.mxu0 0.0
        %3434 = vmatpush1.msra.mxu0 0.0
        %3435 = vmatprep.subr.mxu0 0.0
        %3436 = vmatpush1.msra.mxu0 0.0
        %3437 = vmatprep.subr.mxu0 0.0
        %3438 = vmatpush1.msra.mxu0 0.0
        %3439 = vmatprep.subr.mxu0 0.0
        %3440 = vmatpush1.msra.mxu0 0.0
        %3441 = vmatprep.subr.mxu0 0.0
        %3442 = vmatpush1.msra.mxu0 0.0
        %3443 = vmatprep.subr.mxu0 0.0
        %3444 = vmatpush1.msra.mxu0 0.0
        %3445 = vmatprep.subr.mxu0 0.0
        %3446 = vmatpush1.msra.mxu0 0.0
        %3447 = vmatprep.subr.mxu0 0.0
        %3448 = vmatpush1.msra.mxu0 0.0
        %3449 = vmatprep.subr.mxu0 0.0
        %3450 = vmatpush1.msra.mxu0 0.0
        %3451 = vmatprep.subr.mxu0 0.0
        %3452 = vmatpush1.msra.mxu0 0.0
        %3453 = vmatprep.subr.mxu0 0.0
        %3454 = vmatpush1.msra.mxu0 0.0
        %3455 = vmatprep.subr.mxu0 0.0
        %3456 = vmatpush1.msra.mxu0 0.0
        %3457 = vmatprep.subr.mxu0 0.0
        %3458 = vmatpush1.msra.mxu0 0.0
        %3459 = vmatprep.subr.mxu0 0.0
        %3460 = vmatpush1.msra.mxu0 0.0
        %3461 = vmatprep.subr.mxu0 0.0
        %3462 = vmatpush1.msra.mxu0 0.0
        %3463 = vmatprep.subr.mxu0 0.0
        %3464 = vmatpush1.msra.mxu0 0.0
        %3465 = vmatprep.subr.mxu0 0.0
        %3466 = vmatpush1.msra.mxu0 0.0
        %3467 = vmatprep.mubr.f32.mxu0 0.0
        %3468 = vmatmul.mubr.f32.gmra.mrb[0].mxu0 %v3401
        %v3469 = vpop.f32.mrb[0].mxu0
        %v3470 = vadd.f32 0.0, %v3469
        %v3471 = vpop.f32.mrb[0].mxu0
        %3472 = vdwg.mxu0
        %v3473 = vld [vmem:[%s11 + $0x18] sm:$0xff]
        %v3475 = vsel %vm800, %v3470, 0
        %3477 = vmatprep.subr.mxu0 0.0
        %3478 = vmatpush1.msra.mxu0 %v3473
        %3479 = vmatprep.subr.mxu0 0.0
        %3480 = vmatpush1.msra.mxu0 0.0
        %3481 = vmatprep.subr.mxu0 0.0
        %3482 = vmatpush1.msra.mxu0 0.0
        %3483 = vmatprep.subr.mxu0 0.0
        %3484 = vmatpush1.msra.mxu0 0.0
        %3485 = vmatprep.subr.mxu0 0.0
        %3486 = vmatpush1.msra.mxu0 0.0
        %3487 = vmatprep.subr.mxu0 0.0
        %3488 = vmatpush1.msra.mxu0 0.0
        %3489 = vmatprep.subr.mxu0 0.0
        %3490 = vmatpush1.msra.mxu0 0.0
        %3491 = vmatprep.subr.mxu0 0.0
        %3492 = vmatpush1.msra.mxu0 0.0
        %3493 = vmatprep.subr.mxu0 0.0
        %3494 = vmatpush1.msra.mxu0 0.0
        %3495 = vmatprep.subr.mxu0 0.0
        %3496 = vmatpush1.msra.mxu0 0.0
        %3497 = vmatprep.subr.mxu0 0.0
        %3498 = vmatpush1.msra.mxu0 0.0
        %3499 = vmatprep.subr.mxu0 0.0
        %3500 = vmatpush1.msra.mxu0 0.0
        %3501 = vmatprep.subr.mxu0 0.0
        %3502 = vmatpush1.msra.mxu0 0.0
        %3503 = vmatprep.subr.mxu0 0.0
        %3504 = vmatpush1.msra.mxu0 0.0
        %3505 = vmatprep.subr.mxu0 0.0
        %3506 = vmatpush1.msra.mxu0 0.0
        %3507 = vmatprep.subr.mxu0 0.0
        %3508 = vmatpush1.msra.mxu0 0.0
        %3509 = vmatprep.subr.mxu0 0.0
        %3510 = vmatpush1.msra.mxu0 0.0
        %3511 = vmatprep.subr.mxu0 0.0
        %3512 = vmatpush1.msra.mxu0 0.0
        %3513 = vmatprep.subr.mxu0 0.0
        %3514 = vmatpush1.msra.mxu0 0.0
        %3515 = vmatprep.subr.mxu0 0.0
        %3516 = vmatpush1.msra.mxu0 0.0
        %3517 = vmatprep.subr.mxu0 0.0
        %3518 = vmatpush1.msra.mxu0 0.0
        %3519 = vmatprep.subr.mxu0 0.0
        %3520 = vmatpush1.msra.mxu0 0.0
        %3521 = vmatprep.subr.mxu0 0.0
        %3522 = vmatpush1.msra.mxu0 0.0
        %3523 = vmatprep.subr.mxu0 0.0
        %3524 = vmatpush1.msra.mxu0 0.0
        %3525 = vmatprep.subr.mxu0 0.0
        %3526 = vmatpush1.msra.mxu0 0.0
        %3527 = vmatprep.subr.mxu0 0.0
        %3528 = vmatpush1.msra.mxu0 0.0
        %3529 = vmatprep.subr.mxu0 0.0
        %3530 = vmatpush1.msra.mxu0 0.0
        %3531 = vmatprep.subr.mxu0 0.0
        %3532 = vmatpush1.msra.mxu0 0.0
        %3533 = vmatprep.subr.mxu0 0.0
        %3534 = vmatpush1.msra.mxu0 0.0
        %3535 = vmatprep.subr.mxu0 0.0
        %3536 = vmatpush1.msra.mxu0 0.0
        %3537 = vmatprep.subr.mxu0 0.0
        %3538 = vmatpush1.msra.mxu0 0.0
        %3539 = vmatprep.subr.mxu0 0.0
        %3540 = vmatpush1.msra.mxu0 0.0
        %3541 = vmatprep.mubr.f32.mxu0 0.0
        %3542 = vmatmul.mubr.f32.gmra.mrb[0].mxu0 %v3475
        %v3543 = vpop.f32.mrb[0].mxu0
        %v3544 = vadd.f32 0.0, %v3543
        %v3545 = vpop.f32.mrb[0].mxu0
        %3546 = vdwg.mxu0
        %v3547 = vadd.f32 %v2861, %v3544
        %v3548 = vld [vmem:[%s12] sm:$0x1]
        %v3550 = vlaneseq
        %v3551 = vshrl.u32 %v3550, 7
        %v3552 = vsub.s32 0, %v3551
        %v3553 = vrot.slane %v3548, %v3552
        %v3555 = vadd.f32 %v3547, %v3553
        %3556 = vst.msk [vmem:[%s563] sm:$0xff] %vm565, %v3555
        %s3557 = sand.u32 %s320, 1
        %s3558 = scalar_lea.sflag [#allocation4], %s3557
        %s3559 = sand.u32 %s320, 1
        %s3560 = smul.addr %s3559, 8
        %s3561 = scalar_lea.vmem [#allocation17], %s3560
        // Predicated region
        $region109: #{tpu_custom_call.1} parent=71 // pred_check
          %p3562 = pneg %p330
        $region110: #{tpu_custom_call.1} parent=71 // pred_check_branch
          %3564 = sbr.rel (%p3562) target = $region112
        $region111: #{tpu_custom_call.1} parent=71 // pred_region
          %s3566 = ssub.s32 128, 128
          %3567 = vsyncadd %s3558, %s3566
          %s3568 = smul.addr %s34, 128
          %s3569 = scalar_lea.hbm %s13, %s3568
          %s3571 = sshll.u32 %s3561, 4
          %s3572 = int_to_ptr.vmem [resolvable:$true] %s3571
          %3574 = dma.vmem_to_hbm [thread:$0]  %s3572, 128, %s3569, %s3558
        $region112: #{tpu_custom_call.1} parent=71 // pred_fallthru
          _
      $region72: #{tpu_custom_call.1} parent=5 // pred_fallthru
        _
      %p3575 = scmp.le.s32.totalorder 2, %s29
      // Predicated region
      $region113: #{tpu_custom_call.1} parent=5 // pred_check
        %p3576 = pneg %p3575
      $region114: #{tpu_custom_call.1} parent=5 // pred_check_branch
        %3578 = sbr.rel (%p3576) target = $region116
      $region115: #{tpu_custom_call.1} parent=5 // pred_region
        %s3579 = ssub.s32 %s29, 2
        // Predicated region
        $region117: #{tpu_custom_call.1} parent=115 // pred_check
          %p3580 = pneg %p336
        $region118: #{tpu_custom_call.1} parent=115 // pred_check_branch
          %3582 = sbr.rel (%p3580) target = $region120
        $region119: #{tpu_custom_call.1} parent=115 // pred_region
          %s3583 = sand.u32 %s321, 1
          %s3584 = scalar_lea.sflag [#allocation4], %s3583
          %s3585 = sand.u32 %s321, 1
          %s3586 = smul.addr %s3585, 8
          %s3587 = scalar_lea.vmem [#allocation17], %s3586
          %3588 = dma.done %s3584, 128
        $region120: #{tpu_custom_call.1} parent=115 // pred_fallthru
          _
      $region116: #{tpu_custom_call.1} parent=5 // pred_fallthru
        _
    $region6: #{tpu_custom_call.1} parent=1 // loop_footer
      %s33 = sadd.s32 1, %s29
    $region7: #{tpu_custom_call.1} parent=1 // loop_footer_branch
      %28 = sbr.rel target = $region3
    $region8: #{tpu_custom_call.1} parent=1 // loop_exit
      _
    %3589 = vsyncpa [#allocation3], 1
    %s3590 = scalar_lea.sflag [#allocation3], 1
    %3591 = vsyncpa %s3590, 1
    %3592 = vsyncpa [#allocation6], 1
    %3593 = vsyncpa [#allocation9], 1
    %3594 = vsyncpa [#allocation12], 1
    %3595 = vsyncpa [#allocation15], 1
    %3596 = vsyncpa [#allocation4], 1
    %s3597 = scalar_lea.sflag [#allocation4], 1
    %3598 = vsyncpa %s3597, 1

</llo_original>
